<compile_context>
chip_gen: v6e
topology: v6e:2x2x1
jax: 0.10.0
libtpu: 0.0.40
codegen_flags: <defaults>
</compile_context>

<pallas_src>
import jax
import jax.numpy as jnp
import numpy as np
from jax.experimental import pallas as pl
from jax.experimental.pallas import tpu as pltpu


# ----------------------------- fused kernel --------------------------------

def _lenet_fused_kernel(x_ref, w1b_ref, b1_ref, sh1_ref, sw1_ref,
                        w2b_ref, b2_ref, sh2_ref, sw2_ref, pf_ref,
                        fc1w_ref, fc1b_ref, fc2w_ref, fc2b_ref,
                        fc3w_ref, fc3b_ref, feat_ref, y_ref):
    f32 = jnp.float32
    bf16 = jnp.bfloat16

    x = x_ref[0, 0]                                    # (28, 28) f32

    # ---- conv1 + ReLU: 5 banded MXU matmuls -> (24, 144) = [row, (ch, col)] ----
    acc1 = jnp.zeros((24, 144), f32)
    for dh in range(5):
        acc1 = acc1 + jnp.dot(x[dh:dh + 24, :].astype(bf16), w1b_ref[dh],
                              preferred_element_type=f32)
    a1 = jnp.maximum(acc1 + b1_ref[...], 0.0)          # (24, 144) f32

    # ---- maxpool1 (2x2/2): selection matmuls + elementwise max ----
    a1b = a1.astype(bf16)
    ph1 = jnp.maximum(jnp.dot(sh1_ref[0], a1b, preferred_element_type=f32),
                      jnp.dot(sh1_ref[1], a1b, preferred_element_type=f32))
    ph1b = ph1.astype(bf16)                            # (12, 144)
    p1 = jnp.maximum(jnp.dot(ph1b, sw1_ref[0], preferred_element_type=f32),
                     jnp.dot(ph1b, sw1_ref[1], preferred_element_type=f32))
    # p1: (12, 72) f32 = [row, (ch, col)]

    # ---- conv2 + ReLU: 5 banded MXU matmuls -> (8, 128) = [row, (ch, col)] ----
    acc2 = jnp.zeros((8, 128), f32)
    for dh in range(5):
        acc2 = acc2 + jnp.dot(p1[dh:dh + 8, :].astype(bf16), w2b_ref[dh],
                              preferred_element_type=f32)
    a2 = jnp.maximum(acc2 + b2_ref[...], 0.0)          # (8, 128) f32

    # ---- maxpool2 ----
    a2b = a2.astype(bf16)
    ph2 = jnp.maximum(jnp.dot(sh2_ref[0], a2b, preferred_element_type=f32),
                      jnp.dot(sh2_ref[1], a2b, preferred_element_type=f32))
    ph2b = ph2.astype(bf16)                            # (4, 128)
    p2 = jnp.maximum(jnp.dot(ph2b, sw2_ref[0], preferred_element_type=f32),
                     jnp.dot(ph2b, sw2_ref[1], preferred_element_type=f32))
    # p2: (4, 64) f32 = [row, (ch, col)]

    # ---- features: permute to torch (C, H, W) flatten order, lane-dense (1,256) ----
    feat = jnp.zeros((1, 256), f32)
    for i in range(4):
        feat = feat + jnp.dot(p2[i:i + 1, :].astype(bf16), pf_ref[i],
                              preferred_element_type=f32)
    feat_ref[0] = feat

    # ---- fc1 -> fc2 -> fc3 (ReLU after each, exactly as in the module) ----
    h = jnp.maximum(jnp.dot(feat.astype(bf16), fc1w_ref[...],
                            preferred_element_type=f32) + fc1b_ref[...], 0.0)
    h = jnp.maximum(jnp.dot(h.astype(bf16), fc2w_ref[...],
                            preferred_element_type=f32) + fc2b_ref[...], 0.0)
    y = jnp.maximum(jnp.dot(h.astype(bf16), fc3w_ref[...],
                            preferred_element_type=f32) + fc3b_ref[...], 0.0)
    y_ref[0] = y                                       # (1, 128), cols >= 10 are zero


# ------------------ one-time host-side weight preparation --------------------

def prepare_params(params):
    """Pack PyTorch-layout weights into MXU-friendly bf16 operands (run once,
    outside jit): banded conv matrices, pooling/permutation selection matrices,
    transposed FC weights, lane-padded fc3."""
    f32 = np.float32
    bf16 = jnp.bfloat16

    w1 = np.asarray(params["conv1_w"], f32)            # (6, 1, 5, 5)
    b1 = np.asarray(params["conv1_b"], f32)            # (6,)
    w2 = np.asarray(params["conv2_w"], f32)            # (16, 6, 5, 5)
    b2 = np.asarray(params["conv2_b"], f32)            # (16,)

    K = 5
    C1, C2 = 6, 16
    H1, W1o = 28, 24                                   # conv1 in rows / out cols
    P1 = 12                                            # pooled1 spatial
    W2o = 8                                            # conv2 out cols
    P2 = 4                                             # pooled2 spatial

    # conv1 banded weights: a1[i, c*24+j] = sum_dh x[i+dh, :] @ w1b[dh]
    w1b = np.zeros((K, H1, C1 * W1o), f32)
    for co in range(C1):
        for dh in range(K):
            for dw in range(K):
                for j in range(W1o):
                    w1b[dh, j + dw, co * W1o + j] = w1[co, 0, dh, dw]
    b1r = np.repeat(b1, W1o)[None, :]                  # (1, 144)

    # pool1 selection matrices (rows: left-multiply, cols: right-multiply)
    sh1 = np.zeros((2, P1, W1o), f32)                  # (2, 12, 24)
    for r in range(P1):
        sh1[0, r, 2 * r] = 1.0
        sh1[1, r, 2 * r + 1] = 1.0
    sw1 = np.zeros((2, C1 * W1o, C1 * P1), f32)        # (2, 144, 72)
    for c in range(C1):
        for s in range(P1):
            sw1[0, c * W1o + 2 * s, c * P1 + s] = 1.0
            sw1[1, c * W1o + 2 * s + 1, c * P1 + s] = 1.0

    # conv2 banded weights: a2[i, o*8+j] = sum_dh p1[i+dh, :] @ w2b[dh]
    w2b = np.zeros((K, C1 * P1, C2 * W2o), f32)        # (5, 72, 128)
    for o in range(C2):
        for c in range(C1):
            for dh in range(K):
                for dw in range(K):
                    for j in range(W2o):
                        w2b[dh, c * P1 + j + dw, o * W2o + j] = w2[o, c, dh, dw]
    b2r = np.repeat(b2, W2o)[None, :]                  # (1, 128)

    # pool2 selection matrices
    sh2 = np.zeros((2, P2, W2o), f32)                  # (2, 4, 8)
    for r in range(P2):
        sh2[0, r, 2 * r] = 1.0
        sh2[1, r, 2 * r + 1] = 1.0
    sw2 = np.zeros((2, C2 * W2o, C2 * P2), f32)        # (2, 128, 64)
    for o in range(C2):
        for s in range(P2):
            sw2[0, o * W2o + 2 * s, o * P2 + s] = 1.0
            sw2[1, o * W2o + 2 * s + 1, o * P2 + s] = 1.0

    # feature permutation: pooled2[i, o*4+j] -> features[o*16 + i*4 + j]
    pf = np.zeros((P2, C2 * P2, C2 * P2 * P2), f32)    # (4, 64, 256)
    for i in range(P2):
        for o in range(C2):
            for j in range(P2):
                pf[i, o * P2 + j, o * P2 * P2 + i * P2 + j] = 1.0

    fc1_w = np.asarray(params["fc1_w"], f32)           # (120, 256)
    fc1_b = np.asarray(params["fc1_b"], f32)
    fc2_w = np.asarray(params["fc2_w"], f32)           # (84, 120)
    fc2_b = np.asarray(params["fc2_b"], f32)
    fc3_w = np.asarray(params["fc3_w"], f32)           # (10, 84)
    fc3_b = np.asarray(params["fc3_b"], f32)

    fc3_w_pad = np.zeros((84, 128), f32)               # lane-dense final store
    fc3_w_pad[:, :10] = fc3_w.T
    fc3_b_pad = np.zeros((1, 128), f32)
    fc3_b_pad[0, :10] = fc3_b

    return {
        "w1b": jnp.asarray(w1b, bf16), "b1": jnp.asarray(b1r, jnp.float32),
        "sh1": jnp.asarray(sh1, bf16), "sw1": jnp.asarray(sw1, bf16),
        "w2b": jnp.asarray(w2b, bf16), "b2": jnp.asarray(b2r, jnp.float32),
        "sh2": jnp.asarray(sh2, bf16), "sw2": jnp.asarray(sw2, bf16),
        "pf": jnp.asarray(pf, bf16),
        "fc1w": jnp.asarray(fc1_w.T, bf16),
        "fc1b": jnp.asarray(fc1_b[None, :], jnp.float32),
        "fc2w": jnp.asarray(fc2_w.T, bf16),
        "fc2b": jnp.asarray(fc2_b[None, :], jnp.float32),
        "fc3w": jnp.asarray(fc3_w_pad, bf16),
        "fc3b": jnp.asarray(fc3_b_pad, jnp.float32),
    }


# ------------------------------- forward ------------------------------------

def lenet_forward(prep, x):
    """x: (B, 1, 28, 28) f32.  Returns (y, features) like the torch module."""
    B = x.shape[0]
    assert x.shape[1:] == (1, 28, 28)

    def full(a):
        nd = a.ndim
        return pl.BlockSpec(a.shape, lambda b, _nd=nd: (0,) * _nd)

    args = (x, prep["w1b"], prep["b1"], prep["sh1"], prep["sw1"],
            prep["w2b"], prep["b2"], prep["sh2"], prep["sw2"], prep["pf"],
            prep["fc1w"], prep["fc1b"], prep["fc2w"], prep["fc2b"],
            prep["fc3w"], prep["fc3b"])

    in_specs = [pl.BlockSpec((1, 1, 28, 28), lambda b: (b, 0, 0, 0))]
    in_specs += [full(a) for a in args[1:]]

    feat3, y3 = pl.pallas_call(
        _lenet_fused_kernel,
        out_shape=(jax.ShapeDtypeStruct((B, 1, 256), jnp.float32),
                   jax.ShapeDtypeStruct((B, 1, 128), jnp.float32)),
        grid=(B,),
        in_specs=in_specs,
        out_specs=(pl.BlockSpec((1, 1, 256), lambda b: (b, 0, 0)),
                   pl.BlockSpec((1, 1, 128), lambda b: (b, 0, 0))),
        compiler_params=pltpu.CompilerParams(
            dimension_semantics=("parallel",)),
    )(*args)

    features = feat3.reshape(B, 256)       # free: drops the unit dim
    y = y3.reshape(B, 128)[:, :10]         # strip lane padding of the logits
    return y, features


# ------------------------------- params -------------------------------------

def init_params(key):
    def dense(k, shape, scale=0.1):
        return scale * jax.random.normal(k, shape, dtype=jnp.float32)
    ks = jax.random.split(key, 10)
    return {
        "conv1_w": dense(ks[0], (6, 1, 5, 5)),
        "conv1_b": dense(ks[1], (6,)),
        "conv2_w": dense(ks[2], (16, 6, 5, 5)),
        "conv2_b": dense(ks[3], (16,)),
        "fc1_w": dense(ks[4], (120, 256)),   # PyTorch Linear: (out, in)
        "fc1_b": dense(ks[5], (120,)),
        "fc2_w": dense(ks[6], (84, 120)),
        "fc2_b": dense(ks[7], (84,)),
        "fc3_w": dense(ks[8], (10, 84)),
        "fc3_b": dense(ks[9], (10,)),
    }


if __name__ == "__main__":
    key = jax.random.PRNGKey(0)
    pkey, xkey = jax.random.split(key)
    params = init_params(pkey)
    prep = prepare_params(params)            # one-time host-side weight packing

    # fc1 expects 256 flattened features => input must be (B, 1, 28, 28).
    x = jax.random.normal(xkey, (2, 1, 28, 28), dtype=jnp.float32)

    fwd = jax.jit(lenet_forward)
    y, feats = fwd(prep, x)
    jax.block_until_ready((y, feats))

    assert y.shape == (2, 10) and feats.shape == (2, 256)
    assert bool(jnp.isfinite(y).all()) and bool(jnp.isfinite(feats).all())
    print("KERNEL_OK")
</pallas_src>

<mosaic_0001>
module attributes {stable_mosaic.version = 11 : i64} {
  func.func @_lenet_fused_kernel(%arg0: i32, %arg1: memref<1x1x28x28xf32, #tpu.memory_space<vmem>>, %arg2: memref<5x28x144xbf16, #tpu.memory_space<vmem>>, %arg3: memref<1x144xf32, #tpu.memory_space<vmem>>, %arg4: memref<2x12x24xbf16, #tpu.memory_space<vmem>>, %arg5: memref<2x144x72xbf16, #tpu.memory_space<vmem>>, %arg6: memref<5x72x128xbf16, #tpu.memory_space<vmem>>, %arg7: memref<1x128xf32, #tpu.memory_space<vmem>>, %arg8: memref<2x4x8xbf16, #tpu.memory_space<vmem>>, %arg9: memref<2x128x64xbf16, #tpu.memory_space<vmem>>, %arg10: memref<4x64x256xbf16, #tpu.memory_space<vmem>>, %arg11: memref<256x120xbf16, #tpu.memory_space<vmem>>, %arg12: memref<1x120xf32, #tpu.memory_space<vmem>>, %arg13: memref<120x84xbf16, #tpu.memory_space<vmem>>, %arg14: memref<1x84xf32, #tpu.memory_space<vmem>>, %arg15: memref<84x128xbf16, #tpu.memory_space<vmem>>, %arg16: memref<1x128xf32, #tpu.memory_space<vmem>>, %arg17: memref<1x1x256xf32, #tpu.memory_space<vmem>>, %arg18: memref<1x1x128xf32, #tpu.memory_space<vmem>>) attributes {dimension_semantics = [#tpu.dimension_semantics<parallel>], iteration_bounds = array<i64: 2>, scalar_prefetch = 0 : i64, scratch_operands = 0 : i64, tpu.core_type = #tpu.core_type<tc>, window_params = [{transform_indices = @transform_0, window_bounds = array<i64: 1, 1, 28, 28>}, {pipeline_mode = #tpu.pipeline_mode<synchronous>, transform_indices = @transform_1, window_bounds = array<i64: 5, 28, 144>}, {pipeline_mode = #tpu.pipeline_mode<synchronous>, transform_indices = @transform_2, window_bounds = array<i64: 1, 144>}, {pipeline_mode = #tpu.pipeline_mode<synchronous>, transform_indices = @transform_3, window_bounds = array<i64: 2, 12, 24>}, {pipeline_mode = #tpu.pipeline_mode<synchronous>, transform_indices = @transform_4, window_bounds = array<i64: 2, 144, 72>}, {pipeline_mode = #tpu.pipeline_mode<synchronous>, transform_indices = @transform_5, window_bounds = array<i64: 5, 72, 128>}, {pipeline_mode = #tpu.pipeline_mode<synchronous>, transform_indices = @transform_6, window_bounds = array<i64: 1, 128>}, {pipeline_mode = #tpu.pipeline_mode<synchronous>, transform_indices = @transform_7, window_bounds = array<i64: 2, 4, 8>}, {pipeline_mode = #tpu.pipeline_mode<synchronous>, transform_indices = @transform_8, window_bounds = array<i64: 2, 128, 64>}, {pipeline_mode = #tpu.pipeline_mode<synchronous>, transform_indices = @transform_9, window_bounds = array<i64: 4, 64, 256>}, {pipeline_mode = #tpu.pipeline_mode<synchronous>, transform_indices = @transform_10, window_bounds = array<i64: 256, 120>}, {pipeline_mode = #tpu.pipeline_mode<synchronous>, transform_indices = @transform_11, window_bounds = array<i64: 1, 120>}, {pipeline_mode = #tpu.pipeline_mode<synchronous>, transform_indices = @transform_12, window_bounds = array<i64: 120, 84>}, {pipeline_mode = #tpu.pipeline_mode<synchronous>, transform_indices = @transform_13, window_bounds = array<i64: 1, 84>}, {pipeline_mode = #tpu.pipeline_mode<synchronous>, transform_indices = @transform_14, window_bounds = array<i64: 84, 128>}, {pipeline_mode = #tpu.pipeline_mode<synchronous>, transform_indices = @transform_15, window_bounds = array<i64: 1, 128>}, {transform_indices = @transform_16, window_bounds = array<i64: 1, 1, 256>}, {transform_indices = @transform_17, window_bounds = array<i64: 1, 1, 128>}]} {
    %c0 = arith.constant 0 : index
    %c0_0 = arith.constant 0 : index
    %c0_1 = arith.constant 0 : index
    %c0_2 = arith.constant 0 : index
    %0 = vector.load %arg1[%c0, %c0_0, %c0_1, %c0_2] : memref<1x1x28x28xf32, #tpu.memory_space<vmem>>, vector<1x1x28x28xf32>
    %1 = vector.shape_cast %0 : vector<1x1x28x28xf32> to vector<28x28xf32>
    %cst = arith.constant 0.000000e+00 : f32
    %2 = vector.broadcast %cst : f32 to vector<24x144xf32>
    %3 = vector.extract_strided_slice %1 {offsets = [0, 0], sizes = [24, 28], strides = [1, 1]} : vector<28x28xf32> to vector<24x28xf32>
    %4 = arith.truncf %3 : vector<24x28xf32> to vector<24x28xbf16>
    %c0_3 = arith.constant 0 : index
    %c0_4 = arith.constant 0 : index
    %c0_5 = arith.constant 0 : index
    %5 = vector.load %arg2[%c0_3, %c0_4, %c0_5] : memref<5x28x144xbf16, #tpu.memory_space<vmem>>, vector<1x28x144xbf16>
    %6 = vector.shape_cast %5 : vector<1x28x144xbf16> to vector<28x144xbf16>
    %cst_6 = arith.constant dense<0.000000e+00> : vector<24x144xf32>
    %7 = tpu.matmul %4, %6, %cst_6 {dimension_numbers = #tpu.dot_dimension_numbers<[1], [0], [0], [1], [0, 0, 1, 1], [], []>} : vector<24x28xbf16>, vector<28x144xbf16>, vector<24x144xf32> -> vector<24x144xf32>
    %8 = arith.addf %2, %7 : vector<24x144xf32>
    %9 = vector.extract_strided_slice %1 {offsets = [1, 0], sizes = [24, 28], strides = [1, 1]} : vector<28x28xf32> to vector<24x28xf32>
    %10 = arith.truncf %9 : vector<24x28xf32> to vector<24x28xbf16>
    %c1 = arith.constant 1 : index
    %c0_7 = arith.constant 0 : index
    %c0_8 = arith.constant 0 : index
    %11 = vector.load %arg2[%c1, %c0_7, %c0_8] : memref<5x28x144xbf16, #tpu.memory_space<vmem>>, vector<1x28x144xbf16>
    %12 = vector.shape_cast %11 : vector<1x28x144xbf16> to vector<28x144xbf16>
    %cst_9 = arith.constant dense<0.000000e+00> : vector<24x144xf32>
    %13 = tpu.matmul %10, %12, %cst_9 {dimension_numbers = #tpu.dot_dimension_numbers<[1], [0], [0], [1], [0, 0, 1, 1], [], []>} : vector<24x28xbf16>, vector<28x144xbf16>, vector<24x144xf32> -> vector<24x144xf32>
    %14 = arith.addf %8, %13 : vector<24x144xf32>
    %15 = vector.extract_strided_slice %1 {offsets = [2, 0], sizes = [24, 28], strides = [1, 1]} : vector<28x28xf32> to vector<24x28xf32>
    %16 = arith.truncf %15 : vector<24x28xf32> to vector<24x28xbf16>
    %c2 = arith.constant 2 : index
    %c0_10 = arith.constant 0 : index
    %c0_11 = arith.constant 0 : index
    %17 = vector.load %arg2[%c2, %c0_10, %c0_11] : memref<5x28x144xbf16, #tpu.memory_space<vmem>>, vector<1x28x144xbf16>
    %18 = vector.shape_cast %17 : vector<1x28x144xbf16> to vector<28x144xbf16>
    %cst_12 = arith.constant dense<0.000000e+00> : vector<24x144xf32>
    %19 = tpu.matmul %16, %18, %cst_12 {dimension_numbers = #tpu.dot_dimension_numbers<[1], [0], [0], [1], [0, 0, 1, 1], [], []>} : vector<24x28xbf16>, vector<28x144xbf16>, vector<24x144xf32> -> vector<24x144xf32>
    %20 = arith.addf %14, %19 : vector<24x144xf32>
    %21 = vector.extract_strided_slice %1 {offsets = [3, 0], sizes = [24, 28], strides = [1, 1]} : vector<28x28xf32> to vector<24x28xf32>
    %22 = arith.truncf %21 : vector<24x28xf32> to vector<24x28xbf16>
    %c3 = arith.constant 3 : index
    %c0_13 = arith.constant 0 : index
    %c0_14 = arith.constant 0 : index
    %23 = vector.load %arg2[%c3, %c0_13, %c0_14] : memref<5x28x144xbf16, #tpu.memory_space<vmem>>, vector<1x28x144xbf16>
    %24 = vector.shape_cast %23 : vector<1x28x144xbf16> to vector<28x144xbf16>
    %cst_15 = arith.constant dense<0.000000e+00> : vector<24x144xf32>
    %25 = tpu.matmul %22, %24, %cst_15 {dimension_numbers = #tpu.dot_dimension_numbers<[1], [0], [0], [1], [0, 0, 1, 1], [], []>} : vector<24x28xbf16>, vector<28x144xbf16>, vector<24x144xf32> -> vector<24x144xf32>
    %26 = arith.addf %20, %25 : vector<24x144xf32>
    %27 = vector.extract_strided_slice %1 {offsets = [4, 0], sizes = [24, 28], strides = [1, 1]} : vector<28x28xf32> to vector<24x28xf32>
    %28 = arith.truncf %27 : vector<24x28xf32> to vector<24x28xbf16>
    %c4 = arith.constant 4 : index
    %c0_16 = arith.constant 0 : index
    %c0_17 = arith.constant 0 : index
    %29 = vector.load %arg2[%c4, %c0_16, %c0_17] : memref<5x28x144xbf16, #tpu.memory_space<vmem>>, vector<1x28x144xbf16>
    %30 = vector.shape_cast %29 : vector<1x28x144xbf16> to vector<28x144xbf16>
    %cst_18 = arith.constant dense<0.000000e+00> : vector<24x144xf32>
    %31 = tpu.matmul %28, %30, %cst_18 {dimension_numbers = #tpu.dot_dimension_numbers<[1], [0], [0], [1], [0, 0, 1, 1], [], []>} : vector<24x28xbf16>, vector<28x144xbf16>, vector<24x144xf32> -> vector<24x144xf32>
    %32 = arith.addf %26, %31 : vector<24x144xf32>
    %c0_19 = arith.constant 0 : index
    %c0_20 = arith.constant 0 : index
    %33 = vector.load %arg3[%c0_19, %c0_20] : memref<1x144xf32, #tpu.memory_space<vmem>>, vector<1x144xf32>
    %34 = vector.broadcast %33 : vector<1x144xf32> to vector<24x144xf32>
    %35 = arith.addf %32, %34 : vector<24x144xf32>
    %cst_21 = arith.constant 0.000000e+00 : f32
    %36 = vector.broadcast %cst_21 : f32 to vector<24x144xf32>
    %37 = arith.maximumf %35, %36 : vector<24x144xf32>
    %38 = arith.truncf %37 : vector<24x144xf32> to vector<24x144xbf16>
    %c0_22 = arith.constant 0 : index
    %c0_23 = arith.constant 0 : index
    %c0_24 = arith.constant 0 : index
    %39 = vector.load %arg4[%c0_22, %c0_23, %c0_24] : memref<2x12x24xbf16, #tpu.memory_space<vmem>>, vector<1x12x24xbf16>
    %40 = vector.shape_cast %39 : vector<1x12x24xbf16> to vector<12x24xbf16>
    %cst_25 = arith.constant dense<0.000000e+00> : vector<12x144xf32>
    %41 = tpu.matmul %40, %38, %cst_25 {dimension_numbers = #tpu.dot_dimension_numbers<[1], [0], [0], [1], [0, 0, 1, 1], [], []>} : vector<12x24xbf16>, vector<24x144xbf16>, vector<12x144xf32> -> vector<12x144xf32>
    %c1_26 = arith.constant 1 : index
    %c0_27 = arith.constant 0 : index
    %c0_28 = arith.constant 0 : index
    %42 = vector.load %arg4[%c1_26, %c0_27, %c0_28] : memref<2x12x24xbf16, #tpu.memory_space<vmem>>, vector<1x12x24xbf16>
    %43 = vector.shape_cast %42 : vector<1x12x24xbf16> to vector<12x24xbf16>
    %cst_29 = arith.constant dense<0.000000e+00> : vector<12x144xf32>
    %44 = tpu.matmul %43, %38, %cst_29 {dimension_numbers = #tpu.dot_dimension_numbers<[1], [0], [0], [1], [0, 0, 1, 1], [], []>} : vector<12x24xbf16>, vector<24x144xbf16>, vector<12x144xf32> -> vector<12x144xf32>
    %45 = arith.maximumf %41, %44 : vector<12x144xf32>
    %46 = arith.truncf %45 : vector<12x144xf32> to vector<12x144xbf16>
    %c0_30 = arith.constant 0 : index
    %c0_31 = arith.constant 0 : index
    %c0_32 = arith.constant 0 : index
    %47 = vector.load %arg5[%c0_30, %c0_31, %c0_32] : memref<2x144x72xbf16, #tpu.memory_space<vmem>>, vector<1x144x72xbf16>
    %48 = vector.shape_cast %47 : vector<1x144x72xbf16> to vector<144x72xbf16>
    %cst_33 = arith.constant dense<0.000000e+00> : vector<12x72xf32>
    %49 = tpu.matmul %46, %48, %cst_33 {dimension_numbers = #tpu.dot_dimension_numbers<[1], [0], [0], [1], [0, 0, 1, 1], [], []>} : vector<12x144xbf16>, vector<144x72xbf16>, vector<12x72xf32> -> vector<12x72xf32>
    %c1_34 = arith.constant 1 : index
    %c0_35 = arith.constant 0 : index
    %c0_36 = arith.constant 0 : index
    %50 = vector.load %arg5[%c1_34, %c0_35, %c0_36] : memref<2x144x72xbf16, #tpu.memory_space<vmem>>, vector<1x144x72xbf16>
    %51 = vector.shape_cast %50 : vector<1x144x72xbf16> to vector<144x72xbf16>
    %cst_37 = arith.constant dense<0.000000e+00> : vector<12x72xf32>
    %52 = tpu.matmul %46, %51, %cst_37 {dimension_numbers = #tpu.dot_dimension_numbers<[1], [0], [0], [1], [0, 0, 1, 1], [], []>} : vector<12x144xbf16>, vector<144x72xbf16>, vector<12x72xf32> -> vector<12x72xf32>
    %53 = arith.maximumf %49, %52 : vector<12x72xf32>
    %cst_38 = arith.constant 0.000000e+00 : f32
    %54 = vector.broadcast %cst_38 : f32 to vector<8x128xf32>
    %55 = vector.extract_strided_slice %53 {offsets = [0, 0], sizes = [8, 72], strides = [1, 1]} : vector<12x72xf32> to vector<8x72xf32>
    %56 = arith.truncf %55 : vector<8x72xf32> to vector<8x72xbf16>
    %c0_39 = arith.constant 0 : index
    %c0_40 = arith.constant 0 : index
    %c0_41 = arith.constant 0 : index
    %57 = vector.load %arg6[%c0_39, %c0_40, %c0_41] : memref<5x72x128xbf16, #tpu.memory_space<vmem>>, vector<1x72x128xbf16>
    %58 = vector.shape_cast %57 : vector<1x72x128xbf16> to vector<72x128xbf16>
    %cst_42 = arith.constant dense<0.000000e+00> : vector<8x128xf32>
    %59 = tpu.matmul %56, %58, %cst_42 {dimension_numbers = #tpu.dot_dimension_numbers<[1], [0], [0], [1], [0, 0, 1, 1], [], []>} : vector<8x72xbf16>, vector<72x128xbf16>, vector<8x128xf32> -> vector<8x128xf32>
    %60 = arith.addf %54, %59 : vector<8x128xf32>
    %61 = vector.extract_strided_slice %53 {offsets = [1, 0], sizes = [8, 72], strides = [1, 1]} : vector<12x72xf32> to vector<8x72xf32>
    %62 = arith.truncf %61 : vector<8x72xf32> to vector<8x72xbf16>
    %c1_43 = arith.constant 1 : index
    %c0_44 = arith.constant 0 : index
    %c0_45 = arith.constant 0 : index
    %63 = vector.load %arg6[%c1_43, %c0_44, %c0_45] : memref<5x72x128xbf16, #tpu.memory_space<vmem>>, vector<1x72x128xbf16>
    %64 = vector.shape_cast %63 : vector<1x72x128xbf16> to vector<72x128xbf16>
    %cst_46 = arith.constant dense<0.000000e+00> : vector<8x128xf32>
    %65 = tpu.matmul %62, %64, %cst_46 {dimension_numbers = #tpu.dot_dimension_numbers<[1], [0], [0], [1], [0, 0, 1, 1], [], []>} : vector<8x72xbf16>, vector<72x128xbf16>, vector<8x128xf32> -> vector<8x128xf32>
    %66 = arith.addf %60, %65 : vector<8x128xf32>
    %67 = vector.extract_strided_slice %53 {offsets = [2, 0], sizes = [8, 72], strides = [1, 1]} : vector<12x72xf32> to vector<8x72xf32>
    %68 = arith.truncf %67 : vector<8x72xf32> to vector<8x72xbf16>
    %c2_47 = arith.constant 2 : index
    %c0_48 = arith.constant 0 : index
    %c0_49 = arith.constant 0 : index
    %69 = vector.load %arg6[%c2_47, %c0_48, %c0_49] : memref<5x72x128xbf16, #tpu.memory_space<vmem>>, vector<1x72x128xbf16>
    %70 = vector.shape_cast %69 : vector<1x72x128xbf16> to vector<72x128xbf16>
    %cst_50 = arith.constant dense<0.000000e+00> : vector<8x128xf32>
    %71 = tpu.matmul %68, %70, %cst_50 {dimension_numbers = #tpu.dot_dimension_numbers<[1], [0], [0], [1], [0, 0, 1, 1], [], []>} : vector<8x72xbf16>, vector<72x128xbf16>, vector<8x128xf32> -> vector<8x128xf32>
    %72 = arith.addf %66, %71 : vector<8x128xf32>
    %73 = vector.extract_strided_slice %53 {offsets = [3, 0], sizes = [8, 72], strides = [1, 1]} : vector<12x72xf32> to vector<8x72xf32>
    %74 = arith.truncf %73 : vector<8x72xf32> to vector<8x72xbf16>
    %c3_51 = arith.constant 3 : index
    %c0_52 = arith.constant 0 : index
    %c0_53 = arith.constant 0 : index
    %75 = vector.load %arg6[%c3_51, %c0_52, %c0_53] : memref<5x72x128xbf16, #tpu.memory_space<vmem>>, vector<1x72x128xbf16>
    %76 = vector.shape_cast %75 : vector<1x72x128xbf16> to vector<72x128xbf16>
    %cst_54 = arith.constant dense<0.000000e+00> : vector<8x128xf32>
    %77 = tpu.matmul %74, %76, %cst_54 {dimension_numbers = #tpu.dot_dimension_numbers<[1], [0], [0], [1], [0, 0, 1, 1], [], []>} : vector<8x72xbf16>, vector<72x128xbf16>, vector<8x128xf32> -> vector<8x128xf32>
    %78 = arith.addf %72, %77 : vector<8x128xf32>
    %79 = vector.extract_strided_slice %53 {offsets = [4, 0], sizes = [8, 72], strides = [1, 1]} : vector<12x72xf32> to vector<8x72xf32>
    %80 = arith.truncf %79 : vector<8x72xf32> to vector<8x72xbf16>
    %c4_55 = arith.constant 4 : index
    %c0_56 = arith.constant 0 : index
    %c0_57 = arith.constant 0 : index
    %81 = vector.load %arg6[%c4_55, %c0_56, %c0_57] : memref<5x72x128xbf16, #tpu.memory_space<vmem>>, vector<1x72x128xbf16>
    %82 = vector.shape_cast %81 : vector<1x72x128xbf16> to vector<72x128xbf16>
    %cst_58 = arith.constant dense<0.000000e+00> : vector<8x128xf32>
    %83 = tpu.matmul %80, %82, %cst_58 {dimension_numbers = #tpu.dot_dimension_numbers<[1], [0], [0], [1], [0, 0, 1, 1], [], []>} : vector<8x72xbf16>, vector<72x128xbf16>, vector<8x128xf32> -> vector<8x128xf32>
    %84 = arith.addf %78, %83 : vector<8x128xf32>
    %c0_59 = arith.constant 0 : index
    %c0_60 = arith.constant 0 : index
    %85 = vector.load %arg7[%c0_59, %c0_60] : memref<1x128xf32, #tpu.memory_space<vmem>>, vector<1x128xf32>
    %86 = vector.broadcast %85 : vector<1x128xf32> to vector<8x128xf32>
    %87 = arith.addf %84, %86 : vector<8x128xf32>
    %cst_61 = arith.constant 0.000000e+00 : f32
    %88 = vector.broadcast %cst_61 : f32 to vector<8x128xf32>
    %89 = arith.maximumf %87, %88 : vector<8x128xf32>
    %90 = arith.truncf %89 : vector<8x128xf32> to vector<8x128xbf16>
    %c0_62 = arith.constant 0 : index
    %c0_63 = arith.constant 0 : index
    %c0_64 = arith.constant 0 : index
    %91 = vector.load %arg8[%c0_62, %c0_63, %c0_64] : memref<2x4x8xbf16, #tpu.memory_space<vmem>>, vector<1x4x8xbf16>
    %92 = vector.shape_cast %91 : vector<1x4x8xbf16> to vector<4x8xbf16>
    %cst_65 = arith.constant dense<0.000000e+00> : vector<4x128xf32>
    %93 = tpu.matmul %92, %90, %cst_65 {dimension_numbers = #tpu.dot_dimension_numbers<[1], [0], [0], [1], [0, 0, 1, 1], [], []>} : vector<4x8xbf16>, vector<8x128xbf16>, vector<4x128xf32> -> vector<4x128xf32>
    %c1_66 = arith.constant 1 : index
    %c0_67 = arith.constant 0 : index
    %c0_68 = arith.constant 0 : index
    %94 = vector.load %arg8[%c1_66, %c0_67, %c0_68] : memref<2x4x8xbf16, #tpu.memory_space<vmem>>, vector<1x4x8xbf16>
    %95 = vector.shape_cast %94 : vector<1x4x8xbf16> to vector<4x8xbf16>
    %cst_69 = arith.constant dense<0.000000e+00> : vector<4x128xf32>
    %96 = tpu.matmul %95, %90, %cst_69 {dimension_numbers = #tpu.dot_dimension_numbers<[1], [0], [0], [1], [0, 0, 1, 1], [], []>} : vector<4x8xbf16>, vector<8x128xbf16>, vector<4x128xf32> -> vector<4x128xf32>
    %97 = arith.maximumf %93, %96 : vector<4x128xf32>
    %98 = arith.truncf %97 : vector<4x128xf32> to vector<4x128xbf16>
    %c0_70 = arith.constant 0 : index
    %c0_71 = arith.constant 0 : index
    %c0_72 = arith.constant 0 : index
    %99 = vector.load %arg9[%c0_70, %c0_71, %c0_72] : memref<2x128x64xbf16, #tpu.memory_space<vmem>>, vector<1x128x64xbf16>
    %100 = vector.shape_cast %99 : vector<1x128x64xbf16> to vector<128x64xbf16>
    %cst_73 = arith.constant dense<0.000000e+00> : vector<4x64xf32>
    %101 = tpu.matmul %98, %100, %cst_73 {dimension_numbers = #tpu.dot_dimension_numbers<[1], [0], [0], [1], [0, 0, 1, 1], [], []>} : vector<4x128xbf16>, vector<128x64xbf16>, vector<4x64xf32> -> vector<4x64xf32>
    %c1_74 = arith.constant 1 : index
    %c0_75 = arith.constant 0 : index
    %c0_76 = arith.constant 0 : index
    %102 = vector.load %arg9[%c1_74, %c0_75, %c0_76] : memref<2x128x64xbf16, #tpu.memory_space<vmem>>, vector<1x128x64xbf16>
    %103 = vector.shape_cast %102 : vector<1x128x64xbf16> to vector<128x64xbf16>
    %cst_77 = arith.constant dense<0.000000e+00> : vector<4x64xf32>
    %104 = tpu.matmul %98, %103, %cst_77 {dimension_numbers = #tpu.dot_dimension_numbers<[1], [0], [0], [1], [0, 0, 1, 1], [], []>} : vector<4x128xbf16>, vector<128x64xbf16>, vector<4x64xf32> -> vector<4x64xf32>
    %105 = arith.maximumf %101, %104 : vector<4x64xf32>
    %cst_78 = arith.constant 0.000000e+00 : f32
    %106 = vector.broadcast %cst_78 : f32 to vector<1x256xf32>
    %107 = vector.extract_strided_slice %105 {offsets = [0, 0], sizes = [1, 64], strides = [1, 1]} : vector<4x64xf32> to vector<1x64xf32>
    %108 = arith.truncf %107 : vector<1x64xf32> to vector<1x64xbf16>
    %c0_79 = arith.constant 0 : index
    %c0_80 = arith.constant 0 : index
    %c0_81 = arith.constant 0 : index
    %109 = vector.load %arg10[%c0_79, %c0_80, %c0_81] : memref<4x64x256xbf16, #tpu.memory_space<vmem>>, vector<1x64x256xbf16>
    %110 = vector.shape_cast %109 : vector<1x64x256xbf16> to vector<64x256xbf16>
    %cst_82 = arith.constant dense<0.000000e+00> : vector<1x256xf32>
    %111 = tpu.matmul %108, %110, %cst_82 {dimension_numbers = #tpu.dot_dimension_numbers<[1], [0], [0], [1], [0, 0, 1, 1], [], []>} : vector<1x64xbf16>, vector<64x256xbf16>, vector<1x256xf32> -> vector<1x256xf32>
    %112 = arith.addf %106, %111 : vector<1x256xf32>
    %113 = vector.extract_strided_slice %105 {offsets = [1, 0], sizes = [1, 64], strides = [1, 1]} : vector<4x64xf32> to vector<1x64xf32>
    %114 = arith.truncf %113 : vector<1x64xf32> to vector<1x64xbf16>
    %c1_83 = arith.constant 1 : index
    %c0_84 = arith.constant 0 : index
    %c0_85 = arith.constant 0 : index
    %115 = vector.load %arg10[%c1_83, %c0_84, %c0_85] : memref<4x64x256xbf16, #tpu.memory_space<vmem>>, vector<1x64x256xbf16>
    %116 = vector.shape_cast %115 : vector<1x64x256xbf16> to vector<64x256xbf16>
    %cst_86 = arith.constant dense<0.000000e+00> : vector<1x256xf32>
    %117 = tpu.matmul %114, %116, %cst_86 {dimension_numbers = #tpu.dot_dimension_numbers<[1], [0], [0], [1], [0, 0, 1, 1], [], []>} : vector<1x64xbf16>, vector<64x256xbf16>, vector<1x256xf32> -> vector<1x256xf32>
    %118 = arith.addf %112, %117 : vector<1x256xf32>
    %119 = vector.extract_strided_slice %105 {offsets = [2, 0], sizes = [1, 64], strides = [1, 1]} : vector<4x64xf32> to vector<1x64xf32>
    %120 = arith.truncf %119 : vector<1x64xf32> to vector<1x64xbf16>
    %c2_87 = arith.constant 2 : index
    %c0_88 = arith.constant 0 : index
    %c0_89 = arith.constant 0 : index
    %121 = vector.load %arg10[%c2_87, %c0_88, %c0_89] : memref<4x64x256xbf16, #tpu.memory_space<vmem>>, vector<1x64x256xbf16>
    %122 = vector.shape_cast %121 : vector<1x64x256xbf16> to vector<64x256xbf16>
    %cst_90 = arith.constant dense<0.000000e+00> : vector<1x256xf32>
    %123 = tpu.matmul %120, %122, %cst_90 {dimension_numbers = #tpu.dot_dimension_numbers<[1], [0], [0], [1], [0, 0, 1, 1], [], []>} : vector<1x64xbf16>, vector<64x256xbf16>, vector<1x256xf32> -> vector<1x256xf32>
    %124 = arith.addf %118, %123 : vector<1x256xf32>
    %125 = vector.extract_strided_slice %105 {offsets = [3, 0], sizes = [1, 64], strides = [1, 1]} : vector<4x64xf32> to vector<1x64xf32>
    %126 = arith.truncf %125 : vector<1x64xf32> to vector<1x64xbf16>
    %c3_91 = arith.constant 3 : index
    %c0_92 = arith.constant 0 : index
    %c0_93 = arith.constant 0 : index
    %127 = vector.load %arg10[%c3_91, %c0_92, %c0_93] : memref<4x64x256xbf16, #tpu.memory_space<vmem>>, vector<1x64x256xbf16>
    %128 = vector.shape_cast %127 : vector<1x64x256xbf16> to vector<64x256xbf16>
    %cst_94 = arith.constant dense<0.000000e+00> : vector<1x256xf32>
    %129 = tpu.matmul %126, %128, %cst_94 {dimension_numbers = #tpu.dot_dimension_numbers<[1], [0], [0], [1], [0, 0, 1, 1], [], []>} : vector<1x64xbf16>, vector<64x256xbf16>, vector<1x256xf32> -> vector<1x256xf32>
    %130 = arith.addf %124, %129 : vector<1x256xf32>
    %c0_95 = arith.constant 0 : index
    %c0_96 = arith.constant 0 : index
    %c0_97 = arith.constant 0 : index
    %131 = vector.load %arg17[%c0_95, %c0_96, %c0_97] : memref<1x1x256xf32, #tpu.memory_space<vmem>>, vector<1x1x256xf32>
    %132 = vector.shape_cast %131 : vector<1x1x256xf32> to vector<1x256xf32>
    %133 = vector.shape_cast %130 : vector<1x256xf32> to vector<1x1x256xf32>
    tpu.vector_store %arg17[%c0_95, %c0_96, %c0_97], %133 {strides = array<i32>} : memref<1x1x256xf32, #tpu.memory_space<vmem>>, vector<1x1x256xf32>,
    %134 = arith.truncf %130 : vector<1x256xf32> to vector<1x256xbf16>
    %c0_98 = arith.constant 0 : index
    %c0_99 = arith.constant 0 : index
    %135 = vector.load %arg11[%c0_98, %c0_99] : memref<256x120xbf16, #tpu.memory_space<vmem>>, vector<256x120xbf16>
    %cst_100 = arith.constant dense<0.000000e+00> : vector<1x120xf32>
    %136 = tpu.matmul %134, %135, %cst_100 {dimension_numbers = #tpu.dot_dimension_numbers<[1], [0], [0], [1], [0, 0, 1, 1], [], []>} : vector<1x256xbf16>, vector<256x120xbf16>, vector<1x120xf32> -> vector<1x120xf32>
    %c0_101 = arith.constant 0 : index
    %c0_102 = arith.constant 0 : index
    %137 = vector.load %arg12[%c0_101, %c0_102] : memref<1x120xf32, #tpu.memory_space<vmem>>, vector<1x120xf32>
    %138 = arith.addf %136, %137 : vector<1x120xf32>
    %cst_103 = arith.constant 0.000000e+00 : f32
    %139 = vector.broadcast %cst_103 : f32 to vector<1x120xf32>
    %140 = arith.maximumf %138, %139 : vector<1x120xf32>
    %141 = arith.truncf %140 : vector<1x120xf32> to vector<1x120xbf16>
    %c0_104 = arith.constant 0 : index
    %c0_105 = arith.constant 0 : index
    %142 = vector.load %arg13[%c0_104, %c0_105] : memref<120x84xbf16, #tpu.memory_space<vmem>>, vector<120x84xbf16>
    %cst_106 = arith.constant dense<0.000000e+00> : vector<1x84xf32>
    %143 = tpu.matmul %141, %142, %cst_106 {dimension_numbers = #tpu.dot_dimension_numbers<[1], [0], [0], [1], [0, 0, 1, 1], [], []>} : vector<1x120xbf16>, vector<120x84xbf16>, vector<1x84xf32> -> vector<1x84xf32>
    %c0_107 = arith.constant 0 : index
    %c0_108 = arith.constant 0 : index
    %144 = vector.load %arg14[%c0_107, %c0_108] : memref<1x84xf32, #tpu.memory_space<vmem>>, vector<1x84xf32>
    %145 = arith.addf %143, %144 : vector<1x84xf32>
    %cst_109 = arith.constant 0.000000e+00 : f32
    %146 = vector.broadcast %cst_109 : f32 to vector<1x84xf32>
    %147 = arith.maximumf %145, %146 : vector<1x84xf32>
    %148 = arith.truncf %147 : vector<1x84xf32> to vector<1x84xbf16>
    %c0_110 = arith.constant 0 : index
    %c0_111 = arith.constant 0 : index
    %149 = vector.load %arg15[%c0_110, %c0_111] : memref<84x128xbf16, #tpu.memory_space<vmem>>, vector<84x128xbf16>
    %cst_112 = arith.constant dense<0.000000e+00> : vector<1x128xf32>
    %150 = tpu.matmul %148, %149, %cst_112 {dimension_numbers = #tpu.dot_dimension_numbers<[1], [0], [0], [1], [0, 0, 1, 1], [], []>} : vector<1x84xbf16>, vector<84x128xbf16>, vector<1x128xf32> -> vector<1x128xf32>
    %c0_113 = arith.constant 0 : index
    %c0_114 = arith.constant 0 : index
    %151 = vector.load %arg16[%c0_113, %c0_114] : memref<1x128xf32, #tpu.memory_space<vmem>>, vector<1x128xf32>
    %152 = arith.addf %150, %151 : vector<1x128xf32>
    %cst_115 = arith.constant 0.000000e+00 : f32
    %153 = vector.broadcast %cst_115 : f32 to vector<1x128xf32>
    %154 = arith.maximumf %152, %153 : vector<1x128xf32>
    %c0_116 = arith.constant 0 : index
    %c0_117 = arith.constant 0 : index
    %c0_118 = arith.constant 0 : index
    %155 = vector.load %arg18[%c0_116, %c0_117, %c0_118] : memref<1x1x128xf32, #tpu.memory_space<vmem>>, vector<1x1x128xf32>
    %156 = vector.shape_cast %155 : vector<1x1x128xf32> to vector<1x128xf32>
    %157 = vector.shape_cast %154 : vector<1x128xf32> to vector<1x1x128xf32>
    tpu.vector_store %arg18[%c0_116, %c0_117, %c0_118], %157 {strides = array<i32>} : memref<1x1x128xf32, #tpu.memory_space<vmem>>, vector<1x1x128xf32>,
    return
  }
  func.func @transform_0(%arg0: i32) -> (i32, i32, i32, i32) {
    %c0_i32 = arith.constant 0 : i32
    %c0_i32_0 = arith.constant 0 : i32
    %c0_i32_1 = arith.constant 0 : i32
    %c0_i32_2 = arith.constant 0 : i32
    return %arg0, %c0_i32, %c0_i32_0, %c0_i32_1 : i32, i32, i32, i32
  }
  func.func @transform_1(%arg0: i32) -> (i32, i32, i32) {
    %c0_i32 = arith.constant 0 : i32
    %c0_i32_0 = arith.constant 0 : i32
    %c0_i32_1 = arith.constant 0 : i32
    %c0_i32_2 = arith.constant 0 : i32
    return %c0_i32, %c0_i32_0, %c0_i32_1 : i32, i32, i32
  }
  func.func @transform_2(%arg0: i32) -> (i32, i32) {
    %c0_i32 = arith.constant 0 : i32
    %c0_i32_0 = arith.constant 0 : i32
    %c0_i32_1 = arith.constant 0 : i32
    return %c0_i32, %c0_i32_0 : i32, i32
  }
  func.func @transform_3(%arg0: i32) -> (i32, i32, i32) {
    %c0_i32 = arith.constant 0 : i32
    %c0_i32_0 = arith.constant 0 : i32
    %c0_i32_1 = arith.constant 0 : i32
    %c0_i32_2 = arith.constant 0 : i32
    return %c0_i32, %c0_i32_0, %c0_i32_1 : i32, i32, i32
  }
  func.func @transform_4(%arg0: i32) -> (i32, i32, i32) {
    %c0_i32 = arith.constant 0 : i32
    %c0_i32_0 = arith.constant 0 : i32
    %c0_i32_1 = arith.constant 0 : i32
    %c0_i32_2 = arith.constant 0 : i32
    return %c0_i32, %c0_i32_0, %c0_i32_1 : i32, i32, i32
  }
  func.func @transform_5(%arg0: i32) -> (i32, i32, i32) {
    %c0_i32 = arith.constant 0 : i32
    %c0_i32_0 = arith.constant 0 : i32
    %c0_i32_1 = arith.constant 0 : i32
    %c0_i32_2 = arith.constant 0 : i32
    return %c0_i32, %c0_i32_0, %c0_i32_1 : i32, i32, i32
  }
  func.func @transform_6(%arg0: i32) -> (i32, i32) {
    %c0_i32 = arith.constant 0 : i32
    %c0_i32_0 = arith.constant 0 : i32
    %c0_i32_1 = arith.constant 0 : i32
    return %c0_i32, %c0_i32_0 : i32, i32
  }
  func.func @transform_7(%arg0: i32) -> (i32, i32, i32) {
    %c0_i32 = arith.constant 0 : i32
    %c0_i32_0 = arith.constant 0 : i32
    %c0_i32_1 = arith.constant 0 : i32
    %c0_i32_2 = arith.constant 0 : i32
    return %c0_i32, %c0_i32_0, %c0_i32_1 : i32, i32, i32
  }
  func.func @transform_8(%arg0: i32) -> (i32, i32, i32) {
    %c0_i32 = arith.constant 0 : i32
    %c0_i32_0 = arith.constant 0 : i32
    %c0_i32_1 = arith.constant 0 : i32
    %c0_i32_2 = arith.constant 0 : i32
    return %c0_i32, %c0_i32_0, %c0_i32_1 : i32, i32, i32
  }
  func.func @transform_9(%arg0: i32) -> (i32, i32, i32) {
    %c0_i32 = arith.constant 0 : i32
    %c0_i32_0 = arith.constant 0 : i32
    %c0_i32_1 = arith.constant 0 : i32
    %c0_i32_2 = arith.constant 0 : i32
    return %c0_i32, %c0_i32_0, %c0_i32_1 : i32, i32, i32
  }
  func.func @transform_10(%arg0: i32) -> (i32, i32) {
    %c0_i32 = arith.constant 0 : i32
    %c0_i32_0 = arith.constant 0 : i32
    %c0_i32_1 = arith.constant 0 : i32
    return %c0_i32, %c0_i32_0 : i32, i32
  }
  func.func @transform_11(%arg0: i32) -> (i32, i32) {
    %c0_i32 = arith.constant 0 : i32
    %c0_i32_0 = arith.constant 0 : i32
    %c0_i32_1 = arith.constant 0 : i32
    return %c0_i32, %c0_i32_0 : i32, i32
  }
  func.func @transform_12(%arg0: i32) -> (i32, i32) {
    %c0_i32 = arith.constant 0 : i32
    %c0_i32_0 = arith.constant 0 : i32
    %c0_i32_1 = arith.constant 0 : i32
    return %c0_i32, %c0_i32_0 : i32, i32
  }
  func.func @transform_13(%arg0: i32) -> (i32, i32) {
    %c0_i32 = arith.constant 0 : i32
    %c0_i32_0 = arith.constant 0 : i32
    %c0_i32_1 = arith.constant 0 : i32
    return %c0_i32, %c0_i32_0 : i32, i32
  }
  func.func @transform_14(%arg0: i32) -> (i32, i32) {
    %c0_i32 = arith.constant 0 : i32
    %c0_i32_0 = arith.constant 0 : i32
    %c0_i32_1 = arith.constant 0 : i32
    return %c0_i32, %c0_i32_0 : i32, i32
  }
  func.func @transform_15(%arg0: i32) -> (i32, i32) {
    %c0_i32 = arith.constant 0 : i32
    %c0_i32_0 = arith.constant 0 : i32
    %c0_i32_1 = arith.constant 0 : i32
    return %c0_i32, %c0_i32_0 : i32, i32
  }
  func.func @transform_16(%arg0: i32) -> (i32, i32, i32) {
    %c0_i32 = arith.constant 0 : i32
    %c0_i32_0 = arith.constant 0 : i32
    %c0_i32_1 = arith.constant 0 : i32
    return %arg0, %c0_i32, %c0_i32_0 : i32, i32, i32
  }
  func.func @transform_17(%arg0: i32) -> (i32, i32, i32) {
    %c0_i32 = arith.constant 0 : i32
    %c0_i32_0 = arith.constant 0 : i32
    %c0_i32_1 = arith.constant 0 : i32
    return %arg0, %c0_i32, %c0_i32_0 : i32, i32, i32
  }
}

</mosaic_0001>

<llo_original>
// kernel: lenet_forward.1
$region0: #{lenet_forward.1}
  #allocation0 [shape = 'u32[]', space=smem, size = 0x4, offset = 0x4, fixed_abs, tag = 'smem constant byte address 0x4 - core index']
  #allocation1 [shape = 'u32[144,128]{1,0:T(1,128)}', space=vmem, size = 0x12000, scoped, tag = 'internal scratch']
  %s0 = inlined_call_operand.vmem [shape: f32[2,1,28,28], index: 0, kind: input, shape index: {}]
  %s1 = inlined_call_operand.vmem [shape: bf16[5,28,144], index: 1, kind: input, shape index: {}]
  %s2 = inlined_call_operand.hbm [shape: f32[1,144], index: 2, kind: input, shape index: {}]
  %s3 = inlined_call_operand.vmem [shape: bf16[2,12,24], index: 3, kind: input, shape index: {}]
  %s4 = inlined_call_operand.hbm [shape: bf16[2,144,72], index: 4, kind: input, shape index: {}]
  %s5 = inlined_call_operand.vmem [shape: bf16[5,72,128], index: 5, kind: input, shape index: {}]
  %s6 = inlined_call_operand.vmem [shape: f32[1,128], index: 6, kind: input, shape index: {}]
  %s7 = inlined_call_operand.hbm [shape: bf16[2,4,8], index: 7, kind: input, shape index: {}]
  %s8 = inlined_call_operand.vmem [shape: bf16[2,128,64], index: 8, kind: input, shape index: {}]
  %s9 = inlined_call_operand.vmem [shape: bf16[4,64,256], index: 9, kind: input, shape index: {}]
  %s10 = inlined_call_operand.vmem [shape: bf16[256,120], index: 10, kind: input, shape index: {}]
  %s11 = inlined_call_operand.hbm [shape: f32[1,120], index: 11, kind: input, shape index: {}]
  %s12 = inlined_call_operand.vmem [shape: bf16[120,84], index: 12, kind: input, shape index: {}]
  %s13 = inlined_call_operand.hbm [shape: f32[1,84], index: 13, kind: input, shape index: {}]
  %s14 = inlined_call_operand.hbm [shape: bf16[84,128], index: 14, kind: input, shape index: {}]
  %s15 = inlined_call_operand.hbm [shape: f32[1,128], index: 15, kind: input, shape index: {}]
  %s16 = inlined_call_operand.vmem [shape: f32[2,1,256], index: 16, kind: output, shape index: {0}]
  %s17 = inlined_call_operand.hbm [shape: f32[2,1,128], index: 17, kind: output, shape index: {1}]
  %18 = xla_tuple %s16, %s17
  %s19 = sld [smem:[#allocation0]]
  $region133: #{lenet_forward.1} parent=0
    _
  %s21 = ssub.s32 1, %s19
  %s22 = scalar_select 0, %s21, %s19
  $region1: #{lenet_forward.1} parent=0
    #allocation2 [shape = 'u8[1024]{0}', space=vmem, size = 0x400, scoped, tag = 'input window, operand 2, single buffered']
    #allocation3 [shape = 's32[2]{0}', space=sflag, size = 0x8, scoped, tag = 'scoped memory for lenet_forward.1']
    #allocation4 [shape = 's32[2]{0}', space=sflag, size = 0x8, scoped, tag = 'scoped memory for lenet_forward.1']
    #allocation5 [shape = 'u8[73728]{0}', space=vmem, size = 0x12000, scoped, tag = 'input window, operand 4, single buffered']
    #allocation6 [shape = 's32[1]{0}', space=sflag, size = 0x4, scoped, tag = 'scoped memory for lenet_forward.1']
    #allocation7 [shape = 'u8[2048]{0}', space=vmem, size = 0x800, scoped, tag = 'input window, operand 7, single buffered']
    #allocation8 [shape = 'u8[512]{0}', space=vmem, size = 0x400, scoped, tag = 'input window, operand 11, single buffered']
    #allocation9 [shape = 's32[1]{0}', space=sflag, size = 0x4, scoped, tag = 'scoped memory for lenet_forward.1']
    #allocation10 [shape = 'u8[512]{0}', space=vmem, size = 0x400, scoped, tag = 'input window, operand 13, single buffered']
    #allocation11 [shape = 'u8[22528]{0}', space=vmem, size = 0x5800, scoped, tag = 'input window, operand 14, single buffered']
    #allocation12 [shape = 's32[1]{0}', space=sflag, size = 0x4, scoped, tag = 'scoped memory for lenet_forward.1']
    #allocation13 [shape = 'u8[512]{0}', space=vmem, size = 0x400, scoped, tag = 'input window, operand 15, single buffered']
    #allocation14 [shape = 'u8[1024]{0}', space=vmem, size = 0x400, scoped, tag = 'output window, operand 1']
    %23 = vsyncpa [#allocation3], 0
    %24 = vsyncpa [#allocation6], 0
    %25 = vsyncpa [#allocation9], 0
    %26 = vsyncpa [#allocation12], 0
    %27 = vsyncpa [#allocation4], 0
    %s28 = scalar_lea.sflag [#allocation4], 1
    %29 = vsyncpa %s28, 0
    loop: start=0, step=1, limit=4
    $region2: #{lenet_forward.1} parent=1 // loop_pre_header
      _
    $region3: #{lenet_forward.1} parent=1 // loop_header
      %s31 = sphi 0, %s35
      %p32 = scmp.ge.s32.totalorder %s31, 4
      %s41 = sphi 0, %s43
      %s44 = sphi 0, %s41
      %s45 = sphi 0, %s44
      %s61 = sphi 0, %s45
      %s65 = sphi 0, %s65
      %s67 = sphi 0, %s65
      %s68 = sphi 0, %s67
      %s82 = sphi 0, %s68
      %s86 = sphi 0, %s86
      %s88 = sphi 0, %s86
      %s89 = sphi 0, %s88
      %s103 = sphi 0, %s89
      %s107 = sphi 0, %s107
      %s109 = sphi 0, %s107
      %s110 = sphi 0, %s109
      %s124 = sphi 0, %s110
      %s128 = sphi 0, %s128
      %s130 = sphi 0, %s128
      %s131 = sphi 0, %s130
      %s145 = sphi 0, %s131
      %s149 = sphi 0, %s149
      %s151 = sphi 0, %s149
      %s152 = sphi 0, %s151
      %s166 = sphi 0, %s152
      %s170 = sphi 0, %s170
      %s172 = sphi 0, %s170
      %s173 = sphi 0, %s172
      %s187 = sphi 0, %s173
      %s191 = sphi 0, %s191
      %s193 = sphi 0, %s191
      %s194 = sphi 0, %s193
      %s208 = sphi 0, %s194
      %s212 = sphi 0, %s212
      %s214 = sphi 0, %s212
      %s215 = sphi 0, %s214
      %s229 = sphi 0, %s215
      %s233 = sphi 0, %s233
      %s235 = sphi 0, %s233
      %s236 = sphi 0, %s235
      %s250 = sphi 0, %s236
      %s254 = sphi 0, %s254
      %s256 = sphi 0, %s254
      %s257 = sphi 0, %s256
      %s271 = sphi 0, %s257
      %s275 = sphi 0, %s275
      %s277 = sphi 0, %s275
      %s278 = sphi 0, %s277
      %s292 = sphi 0, %s278
      %s296 = sphi 0, %s296
      %s298 = sphi 0, %s296
      %s299 = sphi 0, %s298
      %s313 = sphi 0, %s299
      %s317 = sphi 0, %s317
      %s319 = sphi 0, %s317
      %s320 = sphi 0, %s319
      %s334 = sphi 0, %s320
      %s338 = sphi 0, %s338
      %s340 = sphi 0, %s338
      %s341 = sphi 0, %s340
      %s355 = sphi 0, %s341
      %s359 = sphi 0, %s359
      %s361 = sphi 0, %s359
      %s362 = sphi 0, %s361
      %s376 = sphi 0, %s362
      %s382 = sphi 0, %s384
      %s385 = sphi 0, %s382
      %s386 = sphi 0, %s385
      %s402 = sphi 0, %s386
      %s408 = sphi 0, %s410
      %s411 = sphi 0, %s408
      %s412 = sphi 0, %s411
      %s428 = sphi 0, %s412
    $region4: #{lenet_forward.1} parent=1 // loop_header_branch
      %34 = sbr.rel (%p32) target = $region8
    $region5: #{lenet_forward.1} parent=1 // loop_body
      %s36 = ssub.s32 %s31, 1
      %s37 = ssub.s32 %s31, 2
      %s38 = sadd.s32 %s31, 1
      %s39 = ssub.s32 %s31, %s38
      %p40 = scmp.eq.s32.totalorder %s39, 0
      %s42 = sadd.s32 %s41, 1
      %s43 = scalar_select %p40, %s41, %s42
      %p46 = pneg %p40
      %p47 = scmp.eq.s32.totalorder %s31, 1
      %p48 = por %p46, %p47
      %p49 = scmp.ne.s32.totalorder %s41, %s44
      %p50 = scmp.eq.s32.totalorder %s31, 0
      %p51 = por %p49, %p50
      %p52 = scmp.ne.s32.totalorder %s41, %s44
      %p53 = scmp.eq.s32.totalorder %s36, 1
      %p54 = por %p52, %p53
      %p55 = scmp.ne.s32.totalorder %s44, %s45
      %p56 = scmp.eq.s32.totalorder %s36, 0
      %p57 = por %p55, %p56
      %p58 = scmp.ne.s32.totalorder %s44, %s45
      %p59 = scmp.eq.s32.totalorder %s37, 1
      %p60 = por %p58, %p59
      %p62 = scmp.ne.s32.totalorder %s45, %s61
      %p63 = scmp.eq.s32.totalorder %s37, 0
      %p64 = por %p62, %p63
      %s66 = sadd.s32 %s65, 1
      %p69 = scmp.eq.s32.totalorder %s31, 1
      %p70 = scmp.ne.s32.totalorder %s65, %s67
      %p71 = scmp.eq.s32.totalorder %s31, 0
      %p72 = por %p70, %p71
      %p73 = scmp.ne.s32.totalorder %s65, %s67
      %p74 = scmp.eq.s32.totalorder %s36, 1
      %p75 = por %p73, %p74
      %p76 = scmp.ne.s32.totalorder %s67, %s68
      %p77 = scmp.eq.s32.totalorder %s36, 0
      %p78 = por %p76, %p77
      %p79 = scmp.ne.s32.totalorder %s67, %s68
      %p80 = scmp.eq.s32.totalorder %s37, 1
      %p81 = por %p79, %p80
      %p83 = scmp.ne.s32.totalorder %s68, %s82
      %p84 = scmp.eq.s32.totalorder %s37, 0
      %p85 = por %p83, %p84
      %s87 = sadd.s32 %s86, 1
      %p90 = scmp.eq.s32.totalorder %s31, 1
      %p91 = scmp.ne.s32.totalorder %s86, %s88
      %p92 = scmp.eq.s32.totalorder %s31, 0
      %p93 = por %p91, %p92
      %p94 = scmp.ne.s32.totalorder %s86, %s88
      %p95 = scmp.eq.s32.totalorder %s36, 1
      %p96 = por %p94, %p95
      %p97 = scmp.ne.s32.totalorder %s88, %s89
      %p98 = scmp.eq.s32.totalorder %s36, 0
      %p99 = por %p97, %p98
      %p100 = scmp.ne.s32.totalorder %s88, %s89
      %p101 = scmp.eq.s32.totalorder %s37, 1
      %p102 = por %p100, %p101
      %p104 = scmp.ne.s32.totalorder %s89, %s103
      %p105 = scmp.eq.s32.totalorder %s37, 0
      %p106 = por %p104, %p105
      %s108 = sadd.s32 %s107, 1
      %p111 = scmp.eq.s32.totalorder %s31, 1
      %p112 = scmp.ne.s32.totalorder %s107, %s109
      %p113 = scmp.eq.s32.totalorder %s31, 0
      %p114 = por %p112, %p113
      %p115 = scmp.ne.s32.totalorder %s107, %s109
      %p116 = scmp.eq.s32.totalorder %s36, 1
      %p117 = por %p115, %p116
      %p118 = scmp.ne.s32.totalorder %s109, %s110
      %p119 = scmp.eq.s32.totalorder %s36, 0
      %p120 = por %p118, %p119
      %p121 = scmp.ne.s32.totalorder %s109, %s110
      %p122 = scmp.eq.s32.totalorder %s37, 1
      %p123 = por %p121, %p122
      %p125 = scmp.ne.s32.totalorder %s110, %s124
      %p126 = scmp.eq.s32.totalorder %s37, 0
      %p127 = por %p125, %p126
      %s129 = sadd.s32 %s128, 1
      %p132 = scmp.eq.s32.totalorder %s31, 1
      %p133 = scmp.ne.s32.totalorder %s128, %s130
      %p134 = scmp.eq.s32.totalorder %s31, 0
      %p135 = por %p133, %p134
      %p136 = scmp.ne.s32.totalorder %s128, %s130
      %p137 = scmp.eq.s32.totalorder %s36, 1
      %p138 = por %p136, %p137
      %p139 = scmp.ne.s32.totalorder %s130, %s131
      %p140 = scmp.eq.s32.totalorder %s36, 0
      %p141 = por %p139, %p140
      %p142 = scmp.ne.s32.totalorder %s130, %s131
      %p143 = scmp.eq.s32.totalorder %s37, 1
      %p144 = por %p142, %p143
      %p146 = scmp.ne.s32.totalorder %s131, %s145
      %p147 = scmp.eq.s32.totalorder %s37, 0
      %p148 = por %p146, %p147
      %s150 = sadd.s32 %s149, 1
      %p153 = scmp.eq.s32.totalorder %s31, 1
      %p154 = scmp.ne.s32.totalorder %s149, %s151
      %p155 = scmp.eq.s32.totalorder %s31, 0
      %p156 = por %p154, %p155
      %p157 = scmp.ne.s32.totalorder %s149, %s151
      %p158 = scmp.eq.s32.totalorder %s36, 1
      %p159 = por %p157, %p158
      %p160 = scmp.ne.s32.totalorder %s151, %s152
      %p161 = scmp.eq.s32.totalorder %s36, 0
      %p162 = por %p160, %p161
      %p163 = scmp.ne.s32.totalorder %s151, %s152
      %p164 = scmp.eq.s32.totalorder %s37, 1
      %p165 = por %p163, %p164
      %p167 = scmp.ne.s32.totalorder %s152, %s166
      %p168 = scmp.eq.s32.totalorder %s37, 0
      %p169 = por %p167, %p168
      %s171 = sadd.s32 %s170, 1
      %p174 = scmp.eq.s32.totalorder %s31, 1
      %p175 = scmp.ne.s32.totalorder %s170, %s172
      %p176 = scmp.eq.s32.totalorder %s31, 0
      %p177 = por %p175, %p176
      %p178 = scmp.ne.s32.totalorder %s170, %s172
      %p179 = scmp.eq.s32.totalorder %s36, 1
      %p180 = por %p178, %p179
      %p181 = scmp.ne.s32.totalorder %s172, %s173
      %p182 = scmp.eq.s32.totalorder %s36, 0
      %p183 = por %p181, %p182
      %p184 = scmp.ne.s32.totalorder %s172, %s173
      %p185 = scmp.eq.s32.totalorder %s37, 1
      %p186 = por %p184, %p185
      %p188 = scmp.ne.s32.totalorder %s173, %s187
      %p189 = scmp.eq.s32.totalorder %s37, 0
      %p190 = por %p188, %p189
      %s192 = sadd.s32 %s191, 1
      %p195 = scmp.eq.s32.totalorder %s31, 1
      %p196 = scmp.ne.s32.totalorder %s191, %s193
      %p197 = scmp.eq.s32.totalorder %s31, 0
      %p198 = por %p196, %p197
      %p199 = scmp.ne.s32.totalorder %s191, %s193
      %p200 = scmp.eq.s32.totalorder %s36, 1
      %p201 = por %p199, %p200
      %p202 = scmp.ne.s32.totalorder %s193, %s194
      %p203 = scmp.eq.s32.totalorder %s36, 0
      %p204 = por %p202, %p203
      %p205 = scmp.ne.s32.totalorder %s193, %s194
      %p206 = scmp.eq.s32.totalorder %s37, 1
      %p207 = por %p205, %p206
      %p209 = scmp.ne.s32.totalorder %s194, %s208
      %p210 = scmp.eq.s32.totalorder %s37, 0
      %p211 = por %p209, %p210
      %s213 = sadd.s32 %s212, 1
      %p216 = scmp.eq.s32.totalorder %s31, 1
      %p217 = scmp.ne.s32.totalorder %s212, %s214
      %p218 = scmp.eq.s32.totalorder %s31, 0
      %p219 = por %p217, %p218
      %p220 = scmp.ne.s32.totalorder %s212, %s214
      %p221 = scmp.eq.s32.totalorder %s36, 1
      %p222 = por %p220, %p221
      %p223 = scmp.ne.s32.totalorder %s214, %s215
      %p224 = scmp.eq.s32.totalorder %s36, 0
      %p225 = por %p223, %p224
      %p226 = scmp.ne.s32.totalorder %s214, %s215
      %p227 = scmp.eq.s32.totalorder %s37, 1
      %p228 = por %p226, %p227
      %p230 = scmp.ne.s32.totalorder %s215, %s229
      %p231 = scmp.eq.s32.totalorder %s37, 0
      %p232 = por %p230, %p231
      %s234 = sadd.s32 %s233, 1
      %p237 = scmp.eq.s32.totalorder %s31, 1
      %p238 = scmp.ne.s32.totalorder %s233, %s235
      %p239 = scmp.eq.s32.totalorder %s31, 0
      %p240 = por %p238, %p239
      %p241 = scmp.ne.s32.totalorder %s233, %s235
      %p242 = scmp.eq.s32.totalorder %s36, 1
      %p243 = por %p241, %p242
      %p244 = scmp.ne.s32.totalorder %s235, %s236
      %p245 = scmp.eq.s32.totalorder %s36, 0
      %p246 = por %p244, %p245
      %p247 = scmp.ne.s32.totalorder %s235, %s236
      %p248 = scmp.eq.s32.totalorder %s37, 1
      %p249 = por %p247, %p248
      %p251 = scmp.ne.s32.totalorder %s236, %s250
      %p252 = scmp.eq.s32.totalorder %s37, 0
      %p253 = por %p251, %p252
      %s255 = sadd.s32 %s254, 1
      %p258 = scmp.eq.s32.totalorder %s31, 1
      %p259 = scmp.ne.s32.totalorder %s254, %s256
      %p260 = scmp.eq.s32.totalorder %s31, 0
      %p261 = por %p259, %p260
      %p262 = scmp.ne.s32.totalorder %s254, %s256
      %p263 = scmp.eq.s32.totalorder %s36, 1
      %p264 = por %p262, %p263
      %p265 = scmp.ne.s32.totalorder %s256, %s257
      %p266 = scmp.eq.s32.totalorder %s36, 0
      %p267 = por %p265, %p266
      %p268 = scmp.ne.s32.totalorder %s256, %s257
      %p269 = scmp.eq.s32.totalorder %s37, 1
      %p270 = por %p268, %p269
      %p272 = scmp.ne.s32.totalorder %s257, %s271
      %p273 = scmp.eq.s32.totalorder %s37, 0
      %p274 = por %p272, %p273
      %s276 = sadd.s32 %s275, 1
      %p279 = scmp.eq.s32.totalorder %s31, 1
      %p280 = scmp.ne.s32.totalorder %s275, %s277
      %p281 = scmp.eq.s32.totalorder %s31, 0
      %p282 = por %p280, %p281
      %p283 = scmp.ne.s32.totalorder %s275, %s277
      %p284 = scmp.eq.s32.totalorder %s36, 1
      %p285 = por %p283, %p284
      %p286 = scmp.ne.s32.totalorder %s277, %s278
      %p287 = scmp.eq.s32.totalorder %s36, 0
      %p288 = por %p286, %p287
      %p289 = scmp.ne.s32.totalorder %s277, %s278
      %p290 = scmp.eq.s32.totalorder %s37, 1
      %p291 = por %p289, %p290
      %p293 = scmp.ne.s32.totalorder %s278, %s292
      %p294 = scmp.eq.s32.totalorder %s37, 0
      %p295 = por %p293, %p294
      %s297 = sadd.s32 %s296, 1
      %p300 = scmp.eq.s32.totalorder %s31, 1
      %p301 = scmp.ne.s32.totalorder %s296, %s298
      %p302 = scmp.eq.s32.totalorder %s31, 0
      %p303 = por %p301, %p302
      %p304 = scmp.ne.s32.totalorder %s296, %s298
      %p305 = scmp.eq.s32.totalorder %s36, 1
      %p306 = por %p304, %p305
      %p307 = scmp.ne.s32.totalorder %s298, %s299
      %p308 = scmp.eq.s32.totalorder %s36, 0
      %p309 = por %p307, %p308
      %p310 = scmp.ne.s32.totalorder %s298, %s299
      %p311 = scmp.eq.s32.totalorder %s37, 1
      %p312 = por %p310, %p311
      %p314 = scmp.ne.s32.totalorder %s299, %s313
      %p315 = scmp.eq.s32.totalorder %s37, 0
      %p316 = por %p314, %p315
      %s318 = sadd.s32 %s317, 1
      %p321 = scmp.eq.s32.totalorder %s31, 1
      %p322 = scmp.ne.s32.totalorder %s317, %s319
      %p323 = scmp.eq.s32.totalorder %s31, 0
      %p324 = por %p322, %p323
      %p325 = scmp.ne.s32.totalorder %s317, %s319
      %p326 = scmp.eq.s32.totalorder %s36, 1
      %p327 = por %p325, %p326
      %p328 = scmp.ne.s32.totalorder %s319, %s320
      %p329 = scmp.eq.s32.totalorder %s36, 0
      %p330 = por %p328, %p329
      %p331 = scmp.ne.s32.totalorder %s319, %s320
      %p332 = scmp.eq.s32.totalorder %s37, 1
      %p333 = por %p331, %p332
      %p335 = scmp.ne.s32.totalorder %s320, %s334
      %p336 = scmp.eq.s32.totalorder %s37, 0
      %p337 = por %p335, %p336
      %s339 = sadd.s32 %s338, 1
      %p342 = scmp.eq.s32.totalorder %s31, 1
      %p343 = scmp.ne.s32.totalorder %s338, %s340
      %p344 = scmp.eq.s32.totalorder %s31, 0
      %p345 = por %p343, %p344
      %p346 = scmp.ne.s32.totalorder %s338, %s340
      %p347 = scmp.eq.s32.totalorder %s36, 1
      %p348 = por %p346, %p347
      %p349 = scmp.ne.s32.totalorder %s340, %s341
      %p350 = scmp.eq.s32.totalorder %s36, 0
      %p351 = por %p349, %p350
      %p352 = scmp.ne.s32.totalorder %s340, %s341
      %p353 = scmp.eq.s32.totalorder %s37, 1
      %p354 = por %p352, %p353
      %p356 = scmp.ne.s32.totalorder %s341, %s355
      %p357 = scmp.eq.s32.totalorder %s37, 0
      %p358 = por %p356, %p357
      %s360 = sadd.s32 %s359, 1
      %p363 = scmp.eq.s32.totalorder %s31, 1
      %p364 = scmp.ne.s32.totalorder %s359, %s361
      %p365 = scmp.eq.s32.totalorder %s31, 0
      %p366 = por %p364, %p365
      %p367 = scmp.ne.s32.totalorder %s359, %s361
      %p368 = scmp.eq.s32.totalorder %s36, 1
      %p369 = por %p367, %p368
      %p370 = scmp.ne.s32.totalorder %s361, %s362
      %p371 = scmp.eq.s32.totalorder %s36, 0
      %p372 = por %p370, %p371
      %p373 = scmp.ne.s32.totalorder %s361, %s362
      %p374 = scmp.eq.s32.totalorder %s37, 1
      %p375 = por %p373, %p374
      %p377 = scmp.ne.s32.totalorder %s362, %s376
      %p378 = scmp.eq.s32.totalorder %s37, 0
      %p379 = por %p377, %p378
      %s380 = ssub.s32 %s31, %s38
      %p381 = scmp.eq.s32.totalorder %s380, 0
      %s383 = sadd.s32 %s382, 1
      %s384 = scalar_select %p381, %s382, %s383
      %p387 = pneg %p381
      %p388 = scmp.eq.s32.totalorder %s31, 1
      %p389 = por %p387, %p388
      %p390 = scmp.ne.s32.totalorder %s382, %s385
      %p391 = scmp.eq.s32.totalorder %s31, 0
      %p392 = por %p390, %p391
      %p393 = scmp.ne.s32.totalorder %s382, %s385
      %p394 = scmp.eq.s32.totalorder %s36, 1
      %p395 = por %p393, %p394
      %p396 = scmp.ne.s32.totalorder %s385, %s386
      %p397 = scmp.eq.s32.totalorder %s36, 0
      %p398 = por %p396, %p397
      %p399 = scmp.ne.s32.totalorder %s385, %s386
      %p400 = scmp.eq.s32.totalorder %s37, 1
      %p401 = por %p399, %p400
      %p403 = scmp.ne.s32.totalorder %s386, %s402
      %p404 = scmp.eq.s32.totalorder %s37, 0
      %p405 = por %p403, %p404
      %s406 = ssub.s32 %s31, %s38
      %p407 = scmp.eq.s32.totalorder %s406, 0
      %s409 = sadd.s32 %s408, 1
      %s410 = scalar_select %p407, %s408, %s409
      %p413 = pneg %p407
      %p414 = scmp.eq.s32.totalorder %s31, 1
      %p415 = por %p413, %p414
      %p416 = scmp.ne.s32.totalorder %s408, %s411
      %p417 = scmp.eq.s32.totalorder %s31, 0
      %p418 = por %p416, %p417
      %p419 = scmp.ne.s32.totalorder %s408, %s411
      %p420 = scmp.eq.s32.totalorder %s36, 1
      %p421 = por %p419, %p420
      %p422 = scmp.ne.s32.totalorder %s411, %s412
      %p423 = scmp.eq.s32.totalorder %s36, 0
      %p424 = por %p422, %p423
      %p425 = scmp.ne.s32.totalorder %s411, %s412
      %p426 = scmp.eq.s32.totalorder %s37, 1
      %p427 = por %p425, %p426
      %p429 = scmp.ne.s32.totalorder %s412, %s428
      %p430 = scmp.eq.s32.totalorder %s37, 0
      %p431 = por %p429, %p430
      %p432 = scmp.le.s32.totalorder 1, %s31
      %p433 = scmp.lt.s32.totalorder %s31, 3
      %p434 = pnand %p432, %p433
      %p435 = pneg %p434
      // Predicated region
      $region9: #{lenet_forward.1} parent=5 // pred_check
        _
      $region10: #{lenet_forward.1} parent=5 // pred_check_branch
        %437 = sbr.rel (%p434) target = $region12
      $region11: #{lenet_forward.1} parent=5 // pred_region
        %s438 = ssub.s32 %s31, 1
        // Predicated region
        $region13: #{lenet_forward.1} parent=11 // pred_check
          %p439 = pneg %p78
        $region14: #{lenet_forward.1} parent=11 // pred_check_branch
          %441 = sbr.rel (%p439) target = $region16
        $region15: #{lenet_forward.1} parent=11 // pred_region
          _
        $region16: #{lenet_forward.1} parent=11 // pred_fallthru
          _
        // Predicated region
        $region17: #{lenet_forward.1} parent=11 // pred_check
          %p442 = pneg %p99
        $region18: #{lenet_forward.1} parent=11 // pred_check_branch
          %444 = sbr.rel (%p442) target = $region20
        $region19: #{lenet_forward.1} parent=11 // pred_region
          %s446 = ssub.s32 32, 32
          %447 = vsyncadd [#allocation3], %s446
          %s449 = sshll.u32 [#allocation2], 4
          %s450 = int_to_ptr.vmem [resolvable:$true] %s449
          %452 = dma.hbm_to_vmem [thread:$0]  %s2, 32, %s450, [#allocation3]
        $region20: #{lenet_forward.1} parent=11 // pred_fallthru
          _
        // Predicated region
        $region21: #{lenet_forward.1} parent=11 // pred_check
          %p453 = pneg %p120
        $region22: #{lenet_forward.1} parent=11 // pred_check_branch
          %455 = sbr.rel (%p453) target = $region24
        $region23: #{lenet_forward.1} parent=11 // pred_region
          _
        $region24: #{lenet_forward.1} parent=11 // pred_fallthru
          _
        // Predicated region
        $region25: #{lenet_forward.1} parent=11 // pred_check
          %p456 = pneg %p141
        $region26: #{lenet_forward.1} parent=11 // pred_check_branch
          %458 = sbr.rel (%p456) target = $region28
        $region27: #{lenet_forward.1} parent=11 // pred_region
          %s460 = ssub.s32 2304, 2304
          %461 = vsyncadd [#allocation6], %s460
          %s462 = sshll.u32 [#allocation5], 4
          %s463 = int_to_ptr.vmem [resolvable:$true] %s462
          %468 = dma.hbm_to_vmem [thread:$0]  %s4, 2304, %s463, [#allocation6], 64, 64, 4
        $region28: #{lenet_forward.1} parent=11 // pred_fallthru
          _
        // Predicated region
        $region29: #{lenet_forward.1} parent=11 // pred_check
          %p469 = pneg %p162
        $region30: #{lenet_forward.1} parent=11 // pred_check_branch
          %471 = sbr.rel (%p469) target = $region32
        $region31: #{lenet_forward.1} parent=11 // pred_region
          _
        $region32: #{lenet_forward.1} parent=11 // pred_fallthru
          _
        // Predicated region
        $region33: #{lenet_forward.1} parent=11 // pred_check
          %p472 = pneg %p183
        $region34: #{lenet_forward.1} parent=11 // pred_check_branch
          %474 = sbr.rel (%p472) target = $region36
        $region35: #{lenet_forward.1} parent=11 // pred_region
          _
        $region36: #{lenet_forward.1} parent=11 // pred_fallthru
          _
        // Predicated region
        $region37: #{lenet_forward.1} parent=11 // pred_check
          %p475 = pneg %p204
        $region38: #{lenet_forward.1} parent=11 // pred_check_branch
          %477 = sbr.rel (%p475) target = $region40
        $region39: #{lenet_forward.1} parent=11 // pred_region
          %s479 = ssub.s32 64, 64
          %480 = vsyncadd [#allocation6], %s479
          %s481 = sshll.u32 [#allocation7], 4
          %s482 = int_to_ptr.vmem [resolvable:$true] %s481
          %487 = dma.hbm_to_vmem [thread:$0]  %s7, 64, %s482, [#allocation6], 32, 32, 2
        $region40: #{lenet_forward.1} parent=11 // pred_fallthru
          _
        // Predicated region
        $region41: #{lenet_forward.1} parent=11 // pred_check
          %p488 = pneg %p225
        $region42: #{lenet_forward.1} parent=11 // pred_check_branch
          %490 = sbr.rel (%p488) target = $region44
        $region43: #{lenet_forward.1} parent=11 // pred_region
          _
        $region44: #{lenet_forward.1} parent=11 // pred_fallthru
          _
        // Predicated region
        $region45: #{lenet_forward.1} parent=11 // pred_check
          %p491 = pneg %p246
        $region46: #{lenet_forward.1} parent=11 // pred_check_branch
          %493 = sbr.rel (%p491) target = $region48
        $region47: #{lenet_forward.1} parent=11 // pred_region
          _
        $region48: #{lenet_forward.1} parent=11 // pred_fallthru
          _
        // Predicated region
        $region49: #{lenet_forward.1} parent=11 // pred_check
          %p494 = pneg %p267
        $region50: #{lenet_forward.1} parent=11 // pred_check_branch
          %496 = sbr.rel (%p494) target = $region52
        $region51: #{lenet_forward.1} parent=11 // pred_region
          _
        $region52: #{lenet_forward.1} parent=11 // pred_fallthru
          _
        // Predicated region
        $region53: #{lenet_forward.1} parent=11 // pred_check
          %p497 = pneg %p288
        $region54: #{lenet_forward.1} parent=11 // pred_check_branch
          %499 = sbr.rel (%p497) target = $region56
        $region55: #{lenet_forward.1} parent=11 // pred_region
          %s501 = ssub.s32 16, 16
          %502 = vsyncadd [#allocation9], %s501
          %s504 = sshll.u32 [#allocation8], 4
          %s505 = int_to_ptr.vmem [resolvable:$true] %s504
          %507 = dma.hbm_to_vmem [thread:$0]  %s11, 16, %s505, [#allocation9]
        $region56: #{lenet_forward.1} parent=11 // pred_fallthru
          _
        // Predicated region
        $region57: #{lenet_forward.1} parent=11 // pred_check
          %p508 = pneg %p309
        $region58: #{lenet_forward.1} parent=11 // pred_check_branch
          %510 = sbr.rel (%p508) target = $region60
        $region59: #{lenet_forward.1} parent=11 // pred_region
          _
        $region60: #{lenet_forward.1} parent=11 // pred_fallthru
          _
        // Predicated region
        $region61: #{lenet_forward.1} parent=11 // pred_check
          %p511 = pneg %p330
        $region62: #{lenet_forward.1} parent=11 // pred_check_branch
          %513 = sbr.rel (%p511) target = $region64
        $region63: #{lenet_forward.1} parent=11 // pred_region
          %s515 = ssub.s32 16, 16
          %516 = vsyncadd [#allocation9], %s515
          %s518 = sshll.u32 [#allocation10], 4
          %s519 = int_to_ptr.vmem [resolvable:$true] %s518
          %521 = dma.hbm_to_vmem [thread:$0]  %s13, 16, %s519, [#allocation9]
        $region64: #{lenet_forward.1} parent=11 // pred_fallthru
          _
        // Predicated region
        $region65: #{lenet_forward.1} parent=11 // pred_check
          %p522 = pneg %p351
        $region66: #{lenet_forward.1} parent=11 // pred_check_branch
          %524 = sbr.rel (%p522) target = $region68
        $region67: #{lenet_forward.1} parent=11 // pred_region
          %s526 = ssub.s32 704, 704
          %527 = vsyncadd [#allocation12], %s526
          %s528 = sshll.u32 [#allocation11], 4
          %s529 = int_to_ptr.vmem [resolvable:$true] %s528
          %534 = dma.hbm_to_vmem [thread:$0]  %s14, 704, %s529, [#allocation12], 64, 64, 4
        $region68: #{lenet_forward.1} parent=11 // pred_fallthru
          _
        // Predicated region
        $region69: #{lenet_forward.1} parent=11 // pred_check
          %p535 = pneg %p372
        $region70: #{lenet_forward.1} parent=11 // pred_check_branch
          %537 = sbr.rel (%p535) target = $region72
        $region71: #{lenet_forward.1} parent=11 // pred_region
          %s539 = ssub.s32 16, 16
          %540 = vsyncadd [#allocation12], %s539
          %s542 = sshll.u32 [#allocation13], 4
          %s543 = int_to_ptr.vmem [resolvable:$true] %s542
          %545 = dma.hbm_to_vmem [thread:$0]  %s15, 16, %s543, [#allocation12]
        $region72: #{lenet_forward.1} parent=11 // pred_fallthru
          _
      $region12: #{lenet_forward.1} parent=5 // pred_fallthru
        _
      %p546 = scmp.lt.s32.totalorder %s31, 2
      // Predicated region
      $region73: #{lenet_forward.1} parent=5 // pred_check
        %p547 = pneg %p546
      $region74: #{lenet_forward.1} parent=5 // pred_check_branch
        %549 = sbr.rel (%p547) target = $region76
      $region75: #{lenet_forward.1} parent=5 // pred_region
        // Predicated region
        $region77: #{lenet_forward.1} parent=75 // pred_check
          %p550 = pneg %p51
        $region78: #{lenet_forward.1} parent=75 // pred_check_branch
          %552 = sbr.rel (%p550) target = $region80
        $region79: #{lenet_forward.1} parent=75 // pred_region
          %p553 = scmp.lt.s32.totalorder %s31, 1
          %s554 = scalar_select %p553, %s31, 1
          %s555 = smul.addr %s554, 4
          %s556 = smul.addr %s555, 8
          %s557 = scalar_lea.vmem %s0, %s556
        $region80: #{lenet_forward.1} parent=75 // pred_fallthru
          _
      $region76: #{lenet_forward.1} parent=5 // pred_fallthru
        _
      %p558 = scmp.le.s32.totalorder 1, %s31
      %p559 = scmp.lt.s32.totalorder %s31, 3
      %p560 = pnand %p558, %p559
      %p561 = pneg %p560
      // Predicated region
      $region81: #{lenet_forward.1} parent=5 // pred_check
        _
      $region82: #{lenet_forward.1} parent=5 // pred_check_branch
        %563 = sbr.rel (%p560) target = $region84
      $region83: #{lenet_forward.1} parent=5 // pred_region
        %s564 = ssub.s32 %s31, 1
        // Predicated region
        $region85: #{lenet_forward.1} parent=83 // pred_check
          %p565 = pneg %p99
        $region86: #{lenet_forward.1} parent=83 // pred_check_branch
          %567 = sbr.rel (%p565) target = $region88
        $region87: #{lenet_forward.1} parent=83 // pred_region
          %568 = dma.done [#allocation3], 32
        $region88: #{lenet_forward.1} parent=83 // pred_fallthru
          _
        // Predicated region
        $region89: #{lenet_forward.1} parent=83 // pred_check
          %p569 = pneg %p141
        $region90: #{lenet_forward.1} parent=83 // pred_check_branch
          %571 = sbr.rel (%p569) target = $region92
        $region91: #{lenet_forward.1} parent=83 // pred_region
          %572 = dma.done [#allocation6], 2304
        $region92: #{lenet_forward.1} parent=83 // pred_fallthru
          _
        // Predicated region
        $region93: #{lenet_forward.1} parent=83 // pred_check
          %p573 = pneg %p204
        $region94: #{lenet_forward.1} parent=83 // pred_check_branch
          %575 = sbr.rel (%p573) target = $region96
        $region95: #{lenet_forward.1} parent=83 // pred_region
          %576 = dma.done [#allocation6], 64
        $region96: #{lenet_forward.1} parent=83 // pred_fallthru
          _
        // Predicated region
        $region97: #{lenet_forward.1} parent=83 // pred_check
          %p577 = pneg %p288
        $region98: #{lenet_forward.1} parent=83 // pred_check_branch
          %579 = sbr.rel (%p577) target = $region100
        $region99: #{lenet_forward.1} parent=83 // pred_region
          %580 = dma.done [#allocation9], 16
        $region100: #{lenet_forward.1} parent=83 // pred_fallthru
          _
        // Predicated region
        $region101: #{lenet_forward.1} parent=83 // pred_check
          %p581 = pneg %p330
        $region102: #{lenet_forward.1} parent=83 // pred_check_branch
          %583 = sbr.rel (%p581) target = $region104
        $region103: #{lenet_forward.1} parent=83 // pred_region
          %584 = dma.done [#allocation9], 16
        $region104: #{lenet_forward.1} parent=83 // pred_fallthru
          _
        // Predicated region
        $region105: #{lenet_forward.1} parent=83 // pred_check
          %p585 = pneg %p351
        $region106: #{lenet_forward.1} parent=83 // pred_check_branch
          %587 = sbr.rel (%p585) target = $region108
        $region107: #{lenet_forward.1} parent=83 // pred_region
          %588 = dma.done [#allocation12], 704
        $region108: #{lenet_forward.1} parent=83 // pred_fallthru
          _
        // Predicated region
        $region109: #{lenet_forward.1} parent=83 // pred_check
          %p589 = pneg %p372
        $region110: #{lenet_forward.1} parent=83 // pred_check_branch
          %591 = sbr.rel (%p589) target = $region112
        $region111: #{lenet_forward.1} parent=83 // pred_region
          %592 = dma.done [#allocation12], 16
        $region112: #{lenet_forward.1} parent=83 // pred_fallthru
          _
        %p593 = scmp.lt.s32.totalorder %s36, 1
        %s594 = scalar_select %p593, %s36, 1
        %s595 = smul.addr %s594, 4
        %s596 = smul.addr %s595, 8
        %s597 = scalar_lea.vmem %s0, %s596
        %p598 = pneg %p57
        %p599 = pneg %p54
        %p600 = pneg %p78
        %p601 = pneg %p75
        %p602 = pneg %p99
        %p603 = pneg %p96
        %p604 = pneg %p120
        %p605 = pneg %p117
        %p606 = pneg %p141
        %p607 = pneg %p138
        %p608 = pneg %p162
        %p609 = pneg %p159
        %p610 = pneg %p183
        %p611 = pneg %p180
        %p612 = pneg %p204
        %p613 = pneg %p201
        %p614 = pneg %p225
        %p615 = pneg %p222
        %p616 = pneg %p246
        %p617 = pneg %p243
        %p618 = pneg %p267
        %p619 = pneg %p264
        %p620 = pneg %p288
        %p621 = pneg %p285
        %p622 = pneg %p309
        %p623 = pneg %p306
        %p624 = pneg %p330
        %p625 = pneg %p327
        %p626 = pneg %p351
        %p627 = pneg %p348
        %p628 = pneg %p372
        %p629 = pneg %p369
        %p630 = pneg %p398
        %p631 = pneg %p395
        %p632 = scmp.lt.s32.totalorder %s36, 1
        %s633 = scalar_select %p632, %s36, 1
        %s634 = smul.addr %s633, 2
        %s635 = scalar_lea.vmem %s16, %s634
        %p636 = pneg %p424
        %p637 = pneg %p421
        %s638 = sand.u32 %s411, 1
        %s639 = scalar_lea.sflag [#allocation4], %s638
        %s640 = sand.u32 %s411, 1
        %s641 = scalar_lea.vmem [#allocation14], %s640
        %p642 = scmp.lt.s32.totalorder %s36, 1
        %s643 = scalar_select %p642, %s36, 1
        %s644 = smul.addr %s643, 4
        %s645 = smul.addr %s644, 8
        %s646 = scalar_lea.vmem %s0, %s645
        %p647 = scmp.lt.s32.totalorder %s36, 1
        %s648 = scalar_select %p647, %s36, 1
        %s649 = smul.addr %s648, 2
        %s650 = scalar_lea.vmem %s16, %s649
        %v652 = vld [vmem:[%s646] sm:$0xff]
        %v653 = vld [vmem:[%s646 + $0x8] sm:$0xff]
        %v654 = vld [vmem:[%s646 + $0x10] sm:$0xff]
        %v655 = vld [vmem:[%s646 + $0x18] sm:$0xf]
        %v656 = vpack.c.bf16 %v653, %v652
        %v657 = vpack.c.bf16 %v654, %v654
        %v658 = vld [vmem:[%s1] sm:$0xff]
        %v659 = vld [vmem:[%s1 + $0x8] sm:$0xff]
        %v660 = vld [vmem:[%s1 + $0x10] sm:$0xff]
        %v661 = vld [vmem:[%s1 + $0x18] sm:$0x33]
        %v662 = vpack.c.bf16 %v655, %v654
        %s663 = scalar_lea.vmem %s1, 32
        %v664 = vld [vmem:[%s663] sm:$0xff]
        %v665 = vld [vmem:[%s663 + $0x8] sm:$0xff]
        %v666 = vld [vmem:[%s663 + $0x10] sm:$0xff]
        %v667 = vld [vmem:[%s663 + $0x18] sm:$0x33]
        %vm668 = vsmask.f32 7424
        %v670 = vshrl.u32 %v656, 16
        %v672 = vshll.u32 %v656, 16
        %v674 = vrot.slane %v672, 1
        %v675 = vor.u32 %v670, %v674
        %v677 = vshll.u32 %v662, 16
        %v679 = vrot.slane %v677, 1
        %v680 = vsel %vm668, %v675, %v679
        %v681 = vshrl.u32 %v662, 16
        %v683 = vor.u32 %v681, %v679
        %v688 = vunpack.c.l.b16 %v664
        %v689 = vunpack.c.h.b16 %v664
        %v690 = vunpack.c.l.b16 %v665
        %v691 = vunpack.c.h.b16 %v665
        %v692 = vunpack.c.l.b16 %v666
        %v693 = vunpack.c.h.b16 %v666
        %v694 = vunpack.c.l.b16 %v667
        %v695 = vunpack.c.h.b16 %v667
        %v696 = vpack.c.b16 %v690, %v688
        %v697 = vpack.c.b16 %v691, %v689
        %v698 = vpack.c.b16 %v694, %v692
        %v699 = vpack.c.b16 %v695, %v693
        %vm702 = vcmask 228352
        %v704 = vsel %vm702, %v680, 0
        %v707 = vsel %vm702, %v683, 0
        %vm709 = vcmask 1045504
        %v711 = vsel %vm709, %v698, 0
        %v714 = vsel %vm709, %v699, 0
        %716 = vmatprep.subr.bf16.mxu0 0
        %717 = vmatpush1.bf16.msra.mxu0 0
        %718 = vmatprep.subr.bf16.mxu0 0
        %719 = vmatpush1.bf16.msra.mxu0 0
        %720 = vmatprep.subr.bf16.mxu0 0
        %721 = vmatpush1.bf16.msra.mxu0 0
        %722 = vmatprep.subr.bf16.mxu0 0
        %723 = vmatpush1.bf16.msra.mxu0 0
        %724 = vmatprep.subr.bf16.mxu0 0
        %725 = vmatpush1.bf16.msra.mxu0 0
        %726 = vmatprep.subr.bf16.mxu0 0
        %727 = vmatpush1.bf16.msra.mxu0 0
        %728 = vmatprep.subr.bf16.mxu0 %v714
        %729 = vmatpush1.bf16.msra.mxu0 %v711
        %730 = vmatprep.subr.bf16.mxu0 %v697
        %731 = vmatpush1.bf16.msra.mxu0 %v696
        %732 = vmatprep.subr.bf16.mxu0 0
        %733 = vmatpush2.bf16.msra.mxu0 0
        %734 = vmatprep.subr.bf16.mxu0 0
        %735 = vmatpush2.bf16.msra.mxu0 0
        %736 = vmatprep.subr.bf16.mxu0 0
        %737 = vmatpush2.bf16.msra.mxu0 0
        %738 = vmatprep.subr.bf16.mxu0 0
        %739 = vmatpush2.bf16.msra.mxu0 0
        %740 = vmatprep.subr.bf16.mxu0 0
        %741 = vmatpush2.bf16.msra.mxu0 0
        %742 = vmatprep.subr.bf16.mxu0 0
        %743 = vmatpush2.bf16.msra.mxu0 0
        %744 = vmatprep.subr.bf16.mxu0 0
        %745 = vmatpush2.bf16.msra.mxu0 0
        %746 = vmatprep.subr.bf16.mxu0 0
        %747 = vmatpush2.bf16.msra.mxu0 0
        %748 = vmatprep.mubr.bf16.mxu0 0
        %749 = vmatmul.mubr.bf16.gmra.mxu0 %v704
        %v750 = vpop.f32.mrf.mxu0
        %v751 = vadd.f32 0.0, %v750
        %v752 = vpop.f32.mrf.mxu0
        %v753 = vadd.f32 0.0, %v752
        %v754 = vpop.f32.mrf.mxu0
        %v755 = vadd.f32 0.0, %v754
        %v756 = vpop.f32.mrf.mxu0
        %v757 = vadd.f32 0.0, %v756
        %758 = vmatprep.mubr.bf16.mxu0 0
        %759 = vmatmul.mubr.bf16.gmra.mxu0 %v707
        %v760 = vpop.f32.mrf.mxu0
        %v761 = vadd.f32 0.0, %v760
        %v762 = vpop.f32.mrf.mxu0
        %v763 = vadd.f32 0.0, %v762
        %v764 = vpop.f32.mrf.mxu0
        %v765 = vpop.f32.mrf.mxu0
        %766 = vdwg.mxu0
        %v771 = vunpack.c.l.b16 %v658
        %v772 = vunpack.c.h.b16 %v658
        %v773 = vunpack.c.l.b16 %v659
        %v774 = vunpack.c.h.b16 %v659
        %v775 = vunpack.c.l.b16 %v660
        %v776 = vunpack.c.h.b16 %v660
        %v777 = vunpack.c.l.b16 %v661
        %v778 = vunpack.c.h.b16 %v661
        %v779 = vpack.c.b16 %v773, %v771
        %v780 = vpack.c.b16 %v774, %v772
        %v781 = vpack.c.b16 %v777, %v775
        %v782 = vpack.c.b16 %v778, %v776
        %v785 = vsel %vm702, %v656, 0
        %v788 = vsel %vm702, %v657, 0
        %v791 = vsel %vm709, %v781, 0
        %v794 = vsel %vm709, %v782, 0
        %796 = vmatprep.subr.bf16.mxu0 0
        %797 = vmatpush1.bf16.msra.mxu0 0
        %798 = vmatprep.subr.bf16.mxu0 0
        %799 = vmatpush1.bf16.msra.mxu0 0
        %800 = vmatprep.subr.bf16.mxu0 0
        %801 = vmatpush1.bf16.msra.mxu0 0
        %802 = vmatprep.subr.bf16.mxu0 0
        %803 = vmatpush1.bf16.msra.mxu0 0
        %804 = vmatprep.subr.bf16.mxu0 0
        %805 = vmatpush1.bf16.msra.mxu0 0
        %806 = vmatprep.subr.bf16.mxu0 0
        %807 = vmatpush1.bf16.msra.mxu0 0
        %808 = vmatprep.subr.bf16.mxu0 %v794
        %809 = vmatpush1.bf16.msra.mxu0 %v791
        %810 = vmatprep.subr.bf16.mxu0 %v780
        %811 = vmatpush1.bf16.msra.mxu0 %v779
        %812 = vmatprep.subr.bf16.mxu0 0
        %813 = vmatpush2.bf16.msra.mxu0 0
        %814 = vmatprep.subr.bf16.mxu0 0
        %815 = vmatpush2.bf16.msra.mxu0 0
        %816 = vmatprep.subr.bf16.mxu0 0
        %817 = vmatpush2.bf16.msra.mxu0 0
        %818 = vmatprep.subr.bf16.mxu0 0
        %819 = vmatpush2.bf16.msra.mxu0 0
        %820 = vmatprep.subr.bf16.mxu0 0
        %821 = vmatpush2.bf16.msra.mxu0 0
        %822 = vmatprep.subr.bf16.mxu0 0
        %823 = vmatpush2.bf16.msra.mxu0 0
        %824 = vmatprep.subr.bf16.mxu0 0
        %825 = vmatpush2.bf16.msra.mxu0 0
        %826 = vmatprep.subr.bf16.mxu0 0
        %827 = vmatpush2.bf16.msra.mxu0 0
        %828 = vmatprep.mubr.bf16.mxu0 0
        %829 = vmatmul.mubr.bf16.gmra.mxu0 %v785
        %v830 = vpop.f32.mrf.mxu0
        %v831 = vadd.f32 %v751, %v830
        %v832 = vpop.f32.mrf.mxu0
        %v833 = vadd.f32 %v753, %v832
        %v834 = vpop.f32.mrf.mxu0
        %v835 = vadd.f32 %v755, %v834
        %v836 = vpop.f32.mrf.mxu0
        %v837 = vadd.f32 %v757, %v836
        %838 = vmatprep.mubr.bf16.mxu0 0
        %839 = vmatmul.mubr.bf16.gmra.mxu0 %v788
        %v840 = vpop.f32.mrf.mxu0
        %v841 = vadd.f32 %v761, %v840
        %v842 = vpop.f32.mrf.mxu0
        %v843 = vadd.f32 %v763, %v842
        %v844 = vpop.f32.mrf.mxu0
        %v845 = vpop.f32.mrf.mxu0
        %846 = vdwg.mxu0
        %s847 = scalar_lea.vmem %s1, 64
        %v848 = vld [vmem:[%s847] sm:$0xff]
        %v849 = vld [vmem:[%s847 + $0x8] sm:$0xff]
        %v850 = vld [vmem:[%s847 + $0x10] sm:$0xff]
        %v851 = vld [vmem:[%s847 + $0x18] sm:$0x33]
        %vm854 = vcmask 1046528
        %v855 = vrot.slane %v656, 1
        %v856 = vrot.slane %v662, 1
        %v857 = vsel %vm854, %v855, %v856
        %v862 = vunpack.c.l.b16 %v848
        %v863 = vunpack.c.h.b16 %v848
        %v864 = vunpack.c.l.b16 %v849
        %v865 = vunpack.c.h.b16 %v849
        %v866 = vunpack.c.l.b16 %v850
        %v867 = vunpack.c.h.b16 %v850
        %v868 = vunpack.c.l.b16 %v851
        %v869 = vunpack.c.h.b16 %v851
        %v870 = vpack.c.b16 %v864, %v862
        %v871 = vpack.c.b16 %v865, %v863
        %v872 = vpack.c.b16 %v868, %v866
        %v873 = vpack.c.b16 %v869, %v867
        %v877 = vsel %vm702, %v857, 0
        %v880 = vsel %vm702, %v856, 0
        %v883 = vsel %vm709, %v872, 0
        %v886 = vsel %vm709, %v873, 0
        %888 = vmatprep.subr.bf16.mxu0 0
        %889 = vmatpush1.bf16.msra.mxu0 0
        %890 = vmatprep.subr.bf16.mxu0 0
        %891 = vmatpush1.bf16.msra.mxu0 0
        %892 = vmatprep.subr.bf16.mxu0 0
        %893 = vmatpush1.bf16.msra.mxu0 0
        %894 = vmatprep.subr.bf16.mxu0 0
        %895 = vmatpush1.bf16.msra.mxu0 0
        %896 = vmatprep.subr.bf16.mxu0 0
        %897 = vmatpush1.bf16.msra.mxu0 0
        %898 = vmatprep.subr.bf16.mxu0 0
        %899 = vmatpush1.bf16.msra.mxu0 0
        %900 = vmatprep.subr.bf16.mxu0 %v886
        %901 = vmatpush1.bf16.msra.mxu0 %v883
        %902 = vmatprep.subr.bf16.mxu0 %v871
        %903 = vmatpush1.bf16.msra.mxu0 %v870
        %904 = vmatprep.subr.bf16.mxu0 0
        %905 = vmatpush2.bf16.msra.mxu0 0
        %906 = vmatprep.subr.bf16.mxu0 0
        %907 = vmatpush2.bf16.msra.mxu0 0
        %908 = vmatprep.subr.bf16.mxu0 0
        %909 = vmatpush2.bf16.msra.mxu0 0
        %910 = vmatprep.subr.bf16.mxu0 0
        %911 = vmatpush2.bf16.msra.mxu0 0
        %912 = vmatprep.subr.bf16.mxu0 0
        %913 = vmatpush2.bf16.msra.mxu0 0
        %914 = vmatprep.subr.bf16.mxu0 0
        %915 = vmatpush2.bf16.msra.mxu0 0
        %916 = vmatprep.subr.bf16.mxu0 0
        %917 = vmatpush2.bf16.msra.mxu0 0
        %918 = vmatprep.subr.bf16.mxu0 0
        %919 = vmatpush2.bf16.msra.mxu0 0
        %920 = vmatprep.mubr.bf16.mxu0 0
        %921 = vmatmul.mubr.bf16.gmra.mxu0 %v877
        %v922 = vpop.f32.mrf.mxu0
        %v923 = vadd.f32 0.0, %v922
        %v924 = vpop.f32.mrf.mxu0
        %v925 = vadd.f32 0.0, %v924
        %v926 = vpop.f32.mrf.mxu0
        %v927 = vadd.f32 0.0, %v926
        %v928 = vpop.f32.mrf.mxu0
        %v929 = vadd.f32 0.0, %v928
        %930 = vmatprep.mubr.bf16.mxu0 0
        %931 = vmatmul.mubr.bf16.gmra.mxu0 %v880
        %v932 = vpop.f32.mrf.mxu0
        %v933 = vadd.f32 0.0, %v932
        %v934 = vpop.f32.mrf.mxu0
        %v935 = vadd.f32 0.0, %v934
        %v936 = vpop.f32.mrf.mxu0
        %v937 = vpop.f32.mrf.mxu0
        %938 = vdwg.mxu0
        %v939 = vadd.f32 %v831, %v923
        %v940 = vadd.f32 %v833, %v925
        %v941 = vadd.f32 %v835, %v927
        %v942 = vadd.f32 %v837, %v929
        %v943 = vadd.f32 %v841, %v933
        %v944 = vadd.f32 %v843, %v935
        %s945 = scalar_lea.vmem %s1, 96
        %v946 = vld [vmem:[%s945] sm:$0xff]
        %v947 = vld [vmem:[%s945 + $0x8] sm:$0xff]
        %v948 = vld [vmem:[%s945 + $0x10] sm:$0xff]
        %v949 = vld [vmem:[%s945 + $0x18] sm:$0x33]
        %vm950 = vsmask.f32 6400
        %v951 = vrot.slane %v670, 1
        %v952 = vrot.slane %v672, 2
        %v953 = vor.u32 %v951, %v952
        %v954 = vrot.slane %v681, 1
        %v955 = vrot.slane %v677, 2
        %v956 = vor.u32 %v954, %v955
        %v957 = vsel %vm950, %v953, %v956
        %v962 = vunpack.c.l.b16 %v946
        %v963 = vunpack.c.h.b16 %v946
        %v964 = vunpack.c.l.b16 %v947
        %v965 = vunpack.c.h.b16 %v947
        %v966 = vunpack.c.l.b16 %v948
        %v967 = vunpack.c.h.b16 %v948
        %v968 = vunpack.c.l.b16 %v949
        %v969 = vunpack.c.h.b16 %v949
        %v970 = vpack.c.b16 %v964, %v962
        %v971 = vpack.c.b16 %v965, %v963
        %v972 = vpack.c.b16 %v968, %v966
        %v973 = vpack.c.b16 %v969, %v967
        %v977 = vsel %vm702, %v957, 0
        %v980 = vsel %vm702, %v956, 0
        %v983 = vsel %vm709, %v972, 0
        %v986 = vsel %vm709, %v973, 0
        %988 = vmatprep.subr.bf16.mxu0 0
        %989 = vmatpush1.bf16.msra.mxu0 0
        %990 = vmatprep.subr.bf16.mxu0 0
        %991 = vmatpush1.bf16.msra.mxu0 0
        %992 = vmatprep.subr.bf16.mxu0 0
        %993 = vmatpush1.bf16.msra.mxu0 0
        %994 = vmatprep.subr.bf16.mxu0 0
        %995 = vmatpush1.bf16.msra.mxu0 0
        %996 = vmatprep.subr.bf16.mxu0 0
        %997 = vmatpush1.bf16.msra.mxu0 0
        %998 = vmatprep.subr.bf16.mxu0 0
        %999 = vmatpush1.bf16.msra.mxu0 0
        %1000 = vmatprep.subr.bf16.mxu0 %v986
        %1001 = vmatpush1.bf16.msra.mxu0 %v983
        %1002 = vmatprep.subr.bf16.mxu0 %v971
        %1003 = vmatpush1.bf16.msra.mxu0 %v970
        %1004 = vmatprep.subr.bf16.mxu0 0
        %1005 = vmatpush2.bf16.msra.mxu0 0
        %1006 = vmatprep.subr.bf16.mxu0 0
        %1007 = vmatpush2.bf16.msra.mxu0 0
        %1008 = vmatprep.subr.bf16.mxu0 0
        %1009 = vmatpush2.bf16.msra.mxu0 0
        %1010 = vmatprep.subr.bf16.mxu0 0
        %1011 = vmatpush2.bf16.msra.mxu0 0
        %1012 = vmatprep.subr.bf16.mxu0 0
        %1013 = vmatpush2.bf16.msra.mxu0 0
        %1014 = vmatprep.subr.bf16.mxu0 0
        %1015 = vmatpush2.bf16.msra.mxu0 0
        %1016 = vmatprep.subr.bf16.mxu0 0
        %1017 = vmatpush2.bf16.msra.mxu0 0
        %1018 = vmatprep.subr.bf16.mxu0 0
        %1019 = vmatpush2.bf16.msra.mxu0 0
        %1020 = vmatprep.mubr.bf16.mxu0 0
        %1021 = vmatmul.mubr.bf16.gmra.mxu0 %v977
        %v1022 = vpop.f32.mrf.mxu0
        %v1023 = vadd.f32 0.0, %v1022
        %v1024 = vpop.f32.mrf.mxu0
        %v1025 = vadd.f32 0.0, %v1024
        %v1026 = vpop.f32.mrf.mxu0
        %v1027 = vadd.f32 0.0, %v1026
        %v1028 = vpop.f32.mrf.mxu0
        %v1029 = vadd.f32 0.0, %v1028
        %1030 = vmatprep.mubr.bf16.mxu0 0
        %1031 = vmatmul.mubr.bf16.gmra.mxu0 %v980
        %v1032 = vpop.f32.mrf.mxu0
        %v1033 = vadd.f32 0.0, %v1032
        %v1034 = vpop.f32.mrf.mxu0
        %v1035 = vadd.f32 0.0, %v1034
        %v1036 = vpop.f32.mrf.mxu0
        %v1037 = vpop.f32.mrf.mxu0
        %1038 = vdwg.mxu0
        %v1039 = vadd.f32 %v939, %v1023
        %v1040 = vadd.f32 %v940, %v1025
        %v1041 = vadd.f32 %v941, %v1027
        %v1042 = vadd.f32 %v942, %v1029
        %v1043 = vadd.f32 %v943, %v1033
        %v1044 = vadd.f32 %v944, %v1035
        %s1045 = scalar_lea.vmem %s1, 128
        %v1046 = vld [vmem:[%s1045] sm:$0xff]
        %v1047 = vld [vmem:[%s1045 + $0x8] sm:$0xff]
        %v1048 = vld [vmem:[%s1045 + $0x10] sm:$0xff]
        %v1049 = vld [vmem:[%s1045 + $0x18] sm:$0x33]
        %vm1050 = vcmask 1045504
        %v1051 = vrot.slane %v656, 2
        %v1052 = vrot.slane %v662, 2
        %v1053 = vsel %vm1050, %v1051, %v1052
        %v1058 = vunpack.c.l.b16 %v1046
        %v1059 = vunpack.c.h.b16 %v1046
        %v1060 = vunpack.c.l.b16 %v1047
        %v1061 = vunpack.c.h.b16 %v1047
        %v1062 = vunpack.c.l.b16 %v1048
        %v1063 = vunpack.c.h.b16 %v1048
        %v1064 = vunpack.c.l.b16 %v1049
        %v1065 = vunpack.c.h.b16 %v1049
        %v1066 = vpack.c.b16 %v1060, %v1058
        %v1067 = vpack.c.b16 %v1061, %v1059
        %v1068 = vpack.c.b16 %v1064, %v1062
        %v1069 = vpack.c.b16 %v1065, %v1063
        %v1073 = vsel %vm702, %v1053, 0
        %v1076 = vsel %vm702, %v1052, 0
        %v1079 = vsel %vm709, %v1068, 0
        %v1082 = vsel %vm709, %v1069, 0
        %1084 = vmatprep.subr.bf16.mxu0 0
        %1085 = vmatpush1.bf16.msra.mxu0 0
        %1086 = vmatprep.subr.bf16.mxu0 0
        %1087 = vmatpush1.bf16.msra.mxu0 0
        %1088 = vmatprep.subr.bf16.mxu0 0
        %1089 = vmatpush1.bf16.msra.mxu0 0
        %1090 = vmatprep.subr.bf16.mxu0 0
        %1091 = vmatpush1.bf16.msra.mxu0 0
        %1092 = vmatprep.subr.bf16.mxu0 0
        %1093 = vmatpush1.bf16.msra.mxu0 0
        %1094 = vmatprep.subr.bf16.mxu0 0
        %1095 = vmatpush1.bf16.msra.mxu0 0
        %1096 = vmatprep.subr.bf16.mxu0 %v1082
        %1097 = vmatpush1.bf16.msra.mxu0 %v1079
        %1098 = vmatprep.subr.bf16.mxu0 %v1067
        %1099 = vmatpush1.bf16.msra.mxu0 %v1066
        %1100 = vmatprep.subr.bf16.mxu0 0
        %1101 = vmatpush2.bf16.msra.mxu0 0
        %1102 = vmatprep.subr.bf16.mxu0 0
        %1103 = vmatpush2.bf16.msra.mxu0 0
        %1104 = vmatprep.subr.bf16.mxu0 0
        %1105 = vmatpush2.bf16.msra.mxu0 0
        %1106 = vmatprep.subr.bf16.mxu0 0
        %1107 = vmatpush2.bf16.msra.mxu0 0
        %1108 = vmatprep.subr.bf16.mxu0 0
        %1109 = vmatpush2.bf16.msra.mxu0 0
        %1110 = vmatprep.subr.bf16.mxu0 0
        %1111 = vmatpush2.bf16.msra.mxu0 0
        %1112 = vmatprep.subr.bf16.mxu0 0
        %1113 = vmatpush2.bf16.msra.mxu0 0
        %1114 = vmatprep.subr.bf16.mxu0 0
        %1115 = vmatpush2.bf16.msra.mxu0 0
        %1116 = vmatprep.mubr.bf16.mxu0 0
        %1117 = vmatmul.mubr.bf16.gmra.mxu0 %v1073
        %v1118 = vpop.f32.mrf.mxu0
        %v1119 = vadd.f32 0.0, %v1118
        %v1120 = vpop.f32.mrf.mxu0
        %v1121 = vadd.f32 0.0, %v1120
        %v1122 = vpop.f32.mrf.mxu0
        %v1123 = vadd.f32 0.0, %v1122
        %v1124 = vpop.f32.mrf.mxu0
        %v1125 = vadd.f32 0.0, %v1124
        %1126 = vmatprep.mubr.bf16.mxu0 0
        %1127 = vmatmul.mubr.bf16.gmra.mxu0 %v1076
        %v1128 = vpop.f32.mrf.mxu0
        %v1129 = vadd.f32 0.0, %v1128
        %v1130 = vpop.f32.mrf.mxu0
        %v1131 = vadd.f32 0.0, %v1130
        %v1132 = vpop.f32.mrf.mxu0
        %v1133 = vpop.f32.mrf.mxu0
        %1134 = vdwg.mxu0
        %v1135 = vadd.f32 %v1039, %v1119
        %v1136 = vadd.f32 %v1040, %v1121
        %v1137 = vadd.f32 %v1041, %v1123
        %v1138 = vadd.f32 %v1042, %v1125
        %v1139 = vadd.f32 %v1043, %v1129
        %v1140 = vadd.f32 %v1044, %v1131
        %v1141 = vld [vmem:[#allocation2] sm:$0x3]
        %v1143 = vlaneseq
        %v1144 = vshrl.u32 %v1143, 7
        %v1145 = vsub.s32 0, %v1144
        %v1146 = vrot.slane %v1141, %v1145
        %v1147 = vlaneseq
        %v1148 = vshrl.u32 %v1147, 7
        %v1149 = vsub.s32 1, %v1148
        %v1150 = vrot.slane %v1141, %v1149
        %v1153 = vadd.f32 %v1135, %v1146
        %v1154 = vadd.f32 %v1136, %v1150
        %v1155 = vadd.f32 %v1137, %v1146
        %v1156 = vadd.f32 %v1138, %v1150
        %v1157 = vadd.f32 %v1139, %v1146
        %v1158 = vadd.f32 %v1140, %v1150
        %v1159 = vmax.f32 %v1153, 0.0
        %v1160 = vmax.f32 %v1154, 0.0
        %v1161 = vmax.f32 %v1155, 0.0
        %v1162 = vmax.f32 %v1156, 0.0
        %v1163 = vmax.f32 %v1157, 0.0
        %v1164 = vmax.f32 %v1158, 0.0
        %v1165 = vpack.c.bf16 %v1161, %v1159
        %v1166 = vpack.c.bf16 %v1162, %v1160
        %v1167 = vpack.c.bf16 %v1163, %v1163
        %v1168 = vpack.c.bf16 %v1164, %v1164
        %v1169 = vld [vmem:[%s3] sm:$0xf]
        %v1170 = vld [vmem:[%s3 + $0x4] sm:$0x3]
        %v1173 = vunpack.c.l.b16 %v1169
        %v1174 = vunpack.c.l.b16 %v1170
        %v1175 = vpack.c.b16 %v1174, %v1173
        %vm1176 = vcmask 195584
        %v1178 = vsel %vm1176, %v1175, 0
        %vm1180 = vcmask 1043456
        %v1182 = vsel %vm1180, %v1167, 0
        %v1185 = vsel %vm1180, %v1168, 0
        %1187 = vmatprep.subr.bf16.mxu0 0
        %1188 = vmatpush1.bf16.msra.mxu0 0
        %1189 = vmatprep.subr.bf16.mxu0 0
        %1190 = vmatpush1.bf16.msra.mxu0 0
        %1191 = vmatprep.subr.bf16.mxu0 0
        %1192 = vmatpush1.bf16.msra.mxu0 0
        %1193 = vmatprep.subr.bf16.mxu0 0
        %1194 = vmatpush1.bf16.msra.mxu0 0
        %1195 = vmatprep.subr.bf16.mxu0 0
        %1196 = vmatpush1.bf16.msra.mxu0 0
        %1197 = vmatprep.subr.bf16.mxu0 0
        %1198 = vmatpush1.bf16.msra.mxu0 0
        %1199 = vmatprep.subr.bf16.mxu0 %v1185
        %1200 = vmatpush1.bf16.msra.mxu0 %v1182
        %1201 = vmatprep.subr.bf16.mxu0 %v1166
        %1202 = vmatpush1.bf16.msra.mxu0 %v1165
        %1203 = vmatprep.subr.bf16.mxu0 0
        %1204 = vmatpush2.bf16.msra.mxu0 0
        %1205 = vmatprep.subr.bf16.mxu0 0
        %1206 = vmatpush2.bf16.msra.mxu0 0
        %1207 = vmatprep.subr.bf16.mxu0 0
        %1208 = vmatpush2.bf16.msra.mxu0 0
        %1209 = vmatprep.subr.bf16.mxu0 0
        %1210 = vmatpush2.bf16.msra.mxu0 0
        %1211 = vmatprep.subr.bf16.mxu0 0
        %1212 = vmatpush2.bf16.msra.mxu0 0
        %1213 = vmatprep.subr.bf16.mxu0 0
        %1214 = vmatpush2.bf16.msra.mxu0 0
        %1215 = vmatprep.subr.bf16.mxu0 0
        %1216 = vmatpush2.bf16.msra.mxu0 0
        %1217 = vmatprep.subr.bf16.mxu0 0
        %1218 = vmatpush2.bf16.msra.mxu0 0
        %1219 = vmatprep.mubr.bf16.mxu0 0
        %1220 = vmatmul.mubr.bf16.gmra.mxu0 %v1178
        %v1221 = vpop.f32.mrf.mxu0
        %v1222 = vadd.f32 0.0, %v1221
        %v1223 = vpop.f32.mrf.mxu0
        %v1224 = vadd.f32 0.0, %v1223
        %v1225 = vpop.f32.mrf.mxu0
        %v1226 = vadd.f32 0.0, %v1225
        %v1227 = vpop.f32.mrf.mxu0
        %v1228 = vadd.f32 0.0, %v1227
        %1229 = vdwg.mxu0
        %s1230 = scalar_lea.vmem %s3, 8
        %v1231 = vld [vmem:[%s1230] sm:$0xf]
        %v1232 = vld [vmem:[%s1230 + $0x4] sm:$0x3]
        %v1235 = vunpack.c.l.b16 %v1231
        %v1236 = vunpack.c.l.b16 %v1232
        %v1237 = vpack.c.b16 %v1236, %v1235
        %v1239 = vsel %vm1176, %v1237, 0
        %1241 = vmatprep.subr.bf16.mxu0 0
        %1242 = vmatpush1.bf16.msra.mxu0 0
        %1243 = vmatprep.subr.bf16.mxu0 0
        %1244 = vmatpush1.bf16.msra.mxu0 0
        %1245 = vmatprep.subr.bf16.mxu0 0
        %1246 = vmatpush1.bf16.msra.mxu0 0
        %1247 = vmatprep.subr.bf16.mxu0 0
        %1248 = vmatpush1.bf16.msra.mxu0 0
        %1249 = vmatprep.subr.bf16.mxu0 0
        %1250 = vmatpush1.bf16.msra.mxu0 0
        %1251 = vmatprep.subr.bf16.mxu0 0
        %1252 = vmatpush1.bf16.msra.mxu0 0
        %1253 = vmatprep.subr.bf16.mxu0 %v1185
        %1254 = vmatpush1.bf16.msra.mxu0 %v1182
        %1255 = vmatprep.subr.bf16.mxu0 %v1166
        %1256 = vmatpush1.bf16.msra.mxu0 %v1165
        %1257 = vmatprep.subr.bf16.mxu0 0
        %1258 = vmatpush2.bf16.msra.mxu0 0
        %1259 = vmatprep.subr.bf16.mxu0 0
        %1260 = vmatpush2.bf16.msra.mxu0 0
        %1261 = vmatprep.subr.bf16.mxu0 0
        %1262 = vmatpush2.bf16.msra.mxu0 0
        %1263 = vmatprep.subr.bf16.mxu0 0
        %1264 = vmatpush2.bf16.msra.mxu0 0
        %1265 = vmatprep.subr.bf16.mxu0 0
        %1266 = vmatpush2.bf16.msra.mxu0 0
        %1267 = vmatprep.subr.bf16.mxu0 0
        %1268 = vmatpush2.bf16.msra.mxu0 0
        %1269 = vmatprep.subr.bf16.mxu0 0
        %1270 = vmatpush2.bf16.msra.mxu0 0
        %1271 = vmatprep.subr.bf16.mxu0 0
        %1272 = vmatpush2.bf16.msra.mxu0 0
        %1273 = vmatprep.mubr.bf16.mxu0 0
        %1274 = vmatmul.mubr.bf16.gmra.mxu0 %v1239
        %v1275 = vpop.f32.mrf.mxu0
        %v1276 = vadd.f32 0.0, %v1275
        %v1277 = vpop.f32.mrf.mxu0
        %v1278 = vadd.f32 0.0, %v1277
        %v1279 = vpop.f32.mrf.mxu0
        %v1280 = vadd.f32 0.0, %v1279
        %v1281 = vpop.f32.mrf.mxu0
        %v1282 = vadd.f32 0.0, %v1281
        %1283 = vdwg.mxu0
        %v1284 = vmax.f32 %v1222, %v1276
        %v1285 = vmax.f32 %v1224, %v1278
        %v1286 = vmax.f32 %v1226, %v1280
        %v1287 = vmax.f32 %v1228, %v1282
        %v1288 = vpack.c.bf16 %v1286, %v1284
        %v1289 = vpack.c.bf16 %v1287, %v1285
        %v1290 = vld [vmem:[#allocation5] sm:$0xf]
        %v1291 = vld [vmem:[#allocation5 + $0x4] sm:$0xf]
        %v1292 = vld [vmem:[#allocation5 + $0x8] sm:$0xf]
        %v1293 = vld [vmem:[#allocation5 + $0xc] sm:$0xf]
        %v1294 = vld [vmem:[#allocation5 + $0x10] sm:$0xf]
        %v1295 = vld [vmem:[#allocation5 + $0x14] sm:$0xf]
        %v1296 = vld [vmem:[#allocation5 + $0x18] sm:$0xf]
        %v1297 = vld [vmem:[#allocation5 + $0x1c] sm:$0xf]
        %v1298 = vld [vmem:[#allocation5 + $0x20] sm:$0xf]
        %v1299 = vld [vmem:[#allocation5 + $0x24] sm:$0xf]
        %v1300 = vld [vmem:[#allocation5 + $0x28] sm:$0xf]
        %v1301 = vld [vmem:[#allocation5 + $0x2c] sm:$0xf]
        %v1302 = vld [vmem:[#allocation5 + $0x30] sm:$0xf]
        %v1303 = vld [vmem:[#allocation5 + $0x34] sm:$0xf]
        %v1304 = vld [vmem:[#allocation5 + $0x38] sm:$0xf]
        %v1305 = vld [vmem:[#allocation5 + $0x3c] sm:$0xf]
        %v1306 = vld [vmem:[#allocation5 + $0x40] sm:$0xf]
        %v1307 = vld [vmem:[#allocation5 + $0x44] sm:$0xf]
        %v1326 = vunpack.c.l.b16 %v1290
        %v1327 = vunpack.c.l.b16 %v1291
        %v1328 = vunpack.c.l.b16 %v1292
        %v1329 = vunpack.c.l.b16 %v1293
        %v1330 = vunpack.c.l.b16 %v1294
        %v1331 = vunpack.c.l.b16 %v1295
        %v1332 = vunpack.c.l.b16 %v1296
        %v1333 = vunpack.c.l.b16 %v1297
        %v1334 = vunpack.c.l.b16 %v1298
        %v1335 = vunpack.c.l.b16 %v1299
        %v1336 = vunpack.c.l.b16 %v1300
        %v1337 = vunpack.c.l.b16 %v1301
        %v1338 = vunpack.c.l.b16 %v1302
        %v1339 = vunpack.c.l.b16 %v1303
        %v1340 = vunpack.c.l.b16 %v1304
        %v1341 = vunpack.c.l.b16 %v1305
        %v1342 = vunpack.c.l.b16 %v1306
        %v1343 = vunpack.c.l.b16 %v1307
        %v1344 = vpack.c.b16 %v1327, %v1326
        %v1345 = vpack.c.b16 %v1329, %v1328
        %v1346 = vpack.c.b16 %v1331, %v1330
        %v1347 = vpack.c.b16 %v1333, %v1332
        %v1348 = vpack.c.b16 %v1335, %v1334
        %v1349 = vpack.c.b16 %v1337, %v1336
        %v1350 = vpack.c.b16 %v1339, %v1338
        %v1351 = vpack.c.b16 %v1341, %v1340
        %v1352 = vpack.c.b16 %v1343, %v1342
        %vm1362 = vcmask 130048
        %v1364 = vsel %vm1362, %v1289, 0
        %1366 = vmatprep.subr.bf16.mxu0 0
        %1367 = vmatpush1.bf16.msra.mxu0 %v1351
        %1368 = vmatprep.subr.bf16.mxu0 0
        %1369 = vmatpush1.bf16.msra.mxu0 %v1350
        %1370 = vmatprep.subr.bf16.mxu0 0
        %1371 = vmatpush1.bf16.msra.mxu0 %v1349
        %1372 = vmatprep.subr.bf16.mxu0 0
        %1373 = vmatpush1.bf16.msra.mxu0 %v1348
        %1374 = vmatprep.subr.bf16.mxu0 0
        %1375 = vmatpush1.bf16.msra.mxu0 %v1347
        %1376 = vmatprep.subr.bf16.mxu0 0
        %1377 = vmatpush1.bf16.msra.mxu0 %v1346
        %1378 = vmatprep.subr.bf16.mxu0 0
        %1379 = vmatpush1.bf16.msra.mxu0 %v1345
        %1380 = vmatprep.subr.bf16.mxu0 0
        %1381 = vmatpush1.bf16.msra.mxu0 %v1344
        %1382 = vmatprep.subr.bf16.mxu0 0
        %1383 = vmatpush2.bf16.msra.mxu0 0
        %1384 = vmatprep.subr.bf16.mxu0 0
        %1385 = vmatpush2.bf16.msra.mxu0 0
        %1386 = vmatprep.subr.bf16.mxu0 0
        %1387 = vmatpush2.bf16.msra.mxu0 0
        %1388 = vmatprep.subr.bf16.mxu0 0
        %1389 = vmatpush2.bf16.msra.mxu0 0
        %1390 = vmatprep.subr.bf16.mxu0 0
        %1391 = vmatpush2.bf16.msra.mxu0 0
        %1392 = vmatprep.subr.bf16.mxu0 0
        %1393 = vmatpush2.bf16.msra.mxu0 0
        %1394 = vmatprep.subr.bf16.mxu0 0
        %1395 = vmatpush2.bf16.msra.mxu0 0
        %1396 = vmatprep.subr.bf16.mxu0 0
        %1397 = vmatpush2.bf16.msra.mxu0 %v1352
        %1398 = vmatprep.mubr.bf16.mxu0 %v1364
        %1399 = vmatmul.mubr.bf16.gmra.mxu0 %v1288
        %v1400 = vpop.f32.mrf.mxu0
        %v1401 = vadd.f32 0.0, %v1400
        %v1402 = vpop.f32.mrf.mxu0
        %v1403 = vpop.f32.mrf.mxu0
        %v1404 = vadd.f32 0.0, %v1403
        %v1405 = vpop.f32.mrf.mxu0
        %1406 = vdwg.mxu0
        %s1407 = scalar_lea.vmem [#allocation5], 72
        %v1408 = vld [vmem:[%s1407] sm:$0xf]
        %v1409 = vld [vmem:[%s1407 + $0x4] sm:$0xf]
        %v1410 = vld [vmem:[%s1407 + $0x8] sm:$0xf]
        %v1411 = vld [vmem:[%s1407 + $0xc] sm:$0xf]
        %v1412 = vld [vmem:[%s1407 + $0x10] sm:$0xf]
        %v1413 = vld [vmem:[%s1407 + $0x14] sm:$0xf]
        %v1414 = vld [vmem:[%s1407 + $0x18] sm:$0xf]
        %v1415 = vld [vmem:[%s1407 + $0x1c] sm:$0xf]
        %v1416 = vld [vmem:[%s1407 + $0x20] sm:$0xf]
        %v1417 = vld [vmem:[%s1407 + $0x24] sm:$0xf]
        %v1418 = vld [vmem:[%s1407 + $0x28] sm:$0xf]
        %v1419 = vld [vmem:[%s1407 + $0x2c] sm:$0xf]
        %v1420 = vld [vmem:[%s1407 + $0x30] sm:$0xf]
        %v1421 = vld [vmem:[%s1407 + $0x34] sm:$0xf]
        %v1422 = vld [vmem:[%s1407 + $0x38] sm:$0xf]
        %v1423 = vld [vmem:[%s1407 + $0x3c] sm:$0xf]
        %v1424 = vld [vmem:[%s1407 + $0x40] sm:$0xf]
        %v1425 = vld [vmem:[%s1407 + $0x44] sm:$0xf]
        %v1444 = vunpack.c.l.b16 %v1408
        %v1445 = vunpack.c.l.b16 %v1409
        %v1446 = vunpack.c.l.b16 %v1410
        %v1447 = vunpack.c.l.b16 %v1411
        %v1448 = vunpack.c.l.b16 %v1412
        %v1449 = vunpack.c.l.b16 %v1413
        %v1450 = vunpack.c.l.b16 %v1414
        %v1451 = vunpack.c.l.b16 %v1415
        %v1452 = vunpack.c.l.b16 %v1416
        %v1453 = vunpack.c.l.b16 %v1417
        %v1454 = vunpack.c.l.b16 %v1418
        %v1455 = vunpack.c.l.b16 %v1419
        %v1456 = vunpack.c.l.b16 %v1420
        %v1457 = vunpack.c.l.b16 %v1421
        %v1458 = vunpack.c.l.b16 %v1422
        %v1459 = vunpack.c.l.b16 %v1423
        %v1460 = vunpack.c.l.b16 %v1424
        %v1461 = vunpack.c.l.b16 %v1425
        %v1462 = vpack.c.b16 %v1445, %v1444
        %v1463 = vpack.c.b16 %v1447, %v1446
        %v1464 = vpack.c.b16 %v1449, %v1448
        %v1465 = vpack.c.b16 %v1451, %v1450
        %v1466 = vpack.c.b16 %v1453, %v1452
        %v1467 = vpack.c.b16 %v1455, %v1454
        %v1468 = vpack.c.b16 %v1457, %v1456
        %v1469 = vpack.c.b16 %v1459, %v1458
        %v1470 = vpack.c.b16 %v1461, %v1460
        %1480 = vmatprep.subr.bf16.mxu0 0
        %1481 = vmatpush1.bf16.msra.mxu0 %v1469
        %1482 = vmatprep.subr.bf16.mxu0 0
        %1483 = vmatpush1.bf16.msra.mxu0 %v1468
        %1484 = vmatprep.subr.bf16.mxu0 0
        %1485 = vmatpush1.bf16.msra.mxu0 %v1467
        %1486 = vmatprep.subr.bf16.mxu0 0
        %1487 = vmatpush1.bf16.msra.mxu0 %v1466
        %1488 = vmatprep.subr.bf16.mxu0 0
        %1489 = vmatpush1.bf16.msra.mxu0 %v1465
        %1490 = vmatprep.subr.bf16.mxu0 0
        %1491 = vmatpush1.bf16.msra.mxu0 %v1464
        %1492 = vmatprep.subr.bf16.mxu0 0
        %1493 = vmatpush1.bf16.msra.mxu0 %v1463
        %1494 = vmatprep.subr.bf16.mxu0 0
        %1495 = vmatpush1.bf16.msra.mxu0 %v1462
        %1496 = vmatprep.subr.bf16.mxu0 0
        %1497 = vmatpush2.bf16.msra.mxu0 0
        %1498 = vmatprep.subr.bf16.mxu0 0
        %1499 = vmatpush2.bf16.msra.mxu0 0
        %1500 = vmatprep.subr.bf16.mxu0 0
        %1501 = vmatpush2.bf16.msra.mxu0 0
        %1502 = vmatprep.subr.bf16.mxu0 0
        %1503 = vmatpush2.bf16.msra.mxu0 0
        %1504 = vmatprep.subr.bf16.mxu0 0
        %1505 = vmatpush2.bf16.msra.mxu0 0
        %1506 = vmatprep.subr.bf16.mxu0 0
        %1507 = vmatpush2.bf16.msra.mxu0 0
        %1508 = vmatprep.subr.bf16.mxu0 0
        %1509 = vmatpush2.bf16.msra.mxu0 0
        %1510 = vmatprep.subr.bf16.mxu0 0
        %1511 = vmatpush2.bf16.msra.mxu0 %v1470
        %1512 = vmatprep.mubr.bf16.mxu0 %v1364
        %1513 = vmatmul.mubr.bf16.gmra.mxu0 %v1288
        %v1514 = vpop.f32.mrf.mxu0
        %v1515 = vadd.f32 0.0, %v1514
        %v1516 = vpop.f32.mrf.mxu0
        %v1517 = vpop.f32.mrf.mxu0
        %v1518 = vadd.f32 0.0, %v1517
        %v1519 = vpop.f32.mrf.mxu0
        %1520 = vdwg.mxu0
        %v1521 = vmax.f32 %v1401, %v1515
        %v1522 = vmax.f32 %v1404, %v1518
        %v1523 = vpack.c.bf16 %v1521, %v1521
        %v1524 = vld [vmem:[%s5] sm:$0xf]
        %v1525 = vld [vmem:[%s5 + $0x4] sm:$0xf]
        %v1526 = vld [vmem:[%s5 + $0x8] sm:$0xf]
        %v1527 = vld [vmem:[%s5 + $0xc] sm:$0xf]
        %v1528 = vld [vmem:[%s5 + $0x10] sm:$0xf]
        %v1529 = vld [vmem:[%s5 + $0x14] sm:$0xf]
        %v1530 = vld [vmem:[%s5 + $0x18] sm:$0xf]
        %v1531 = vld [vmem:[%s5 + $0x1c] sm:$0xf]
        %v1532 = vld [vmem:[%s5 + $0x20] sm:$0xf]
        %v1533 = vpack.c.bf16 %v1522, %v1521
        %s1534 = scalar_lea.vmem %s5, 36
        %v1535 = vld [vmem:[%s1534] sm:$0xf]
        %v1536 = vld [vmem:[%s1534 + $0x4] sm:$0xf]
        %v1537 = vld [vmem:[%s1534 + $0x8] sm:$0xf]
        %v1538 = vld [vmem:[%s1534 + $0xc] sm:$0xf]
        %v1539 = vld [vmem:[%s1534 + $0x10] sm:$0xf]
        %v1540 = vld [vmem:[%s1534 + $0x14] sm:$0xf]
        %v1541 = vld [vmem:[%s1534 + $0x18] sm:$0xf]
        %v1542 = vld [vmem:[%s1534 + $0x1c] sm:$0xf]
        %v1543 = vld [vmem:[%s1534 + $0x20] sm:$0xf]
        %v1545 = vshrl.u32 %v1533, 16
        %v1547 = vshll.u32 %v1533, 16
        %v1549 = vrot.slane %v1547, 1
        %v1550 = vor.u32 %v1545, %v1549
        %v1560 = vunpack.c.l.b16 %v1535
        %v1561 = vunpack.c.l.b16 %v1536
        %v1562 = vunpack.c.l.b16 %v1537
        %v1563 = vunpack.c.l.b16 %v1538
        %v1564 = vunpack.c.l.b16 %v1539
        %v1565 = vunpack.c.l.b16 %v1540
        %v1566 = vunpack.c.l.b16 %v1541
        %v1567 = vunpack.c.l.b16 %v1542
        %v1568 = vunpack.c.l.b16 %v1543
        %v1569 = vpack.c.b16 %v1561, %v1560
        %v1570 = vpack.c.b16 %v1563, %v1562
        %v1571 = vpack.c.b16 %v1565, %v1564
        %v1572 = vpack.c.b16 %v1567, %v1566
        %v1573 = vpack.c.b16 %v1568, %v1568
        %vm1578 = vcmask 588800
        %v1580 = vsel %vm1578, %v1550, 0
        %v1583 = vsel %vm1180, %v1573, 0
        %1585 = vmatprep.subr.bf16.mxu0 0
        %1586 = vmatpush1.bf16.msra.mxu0 0
        %1587 = vmatprep.subr.bf16.mxu0 0
        %1588 = vmatpush1.bf16.msra.mxu0 0
        %1589 = vmatprep.subr.bf16.mxu0 0
        %1590 = vmatpush1.bf16.msra.mxu0 0
        %1591 = vmatprep.subr.bf16.mxu0 0
        %1592 = vmatpush1.bf16.msra.mxu0 %v1583
        %1593 = vmatprep.subr.bf16.mxu0 0
        %1594 = vmatpush1.bf16.msra.mxu0 %v1572
        %1595 = vmatprep.subr.bf16.mxu0 0
        %1596 = vmatpush1.bf16.msra.mxu0 %v1571
        %1597 = vmatprep.subr.bf16.mxu0 0
        %1598 = vmatpush1.bf16.msra.mxu0 %v1570
        %1599 = vmatprep.subr.bf16.mxu0 0
        %1600 = vmatpush1.bf16.msra.mxu0 %v1569
        %1601 = vmatprep.subr.bf16.mxu0 0
        %1602 = vmatpush2.bf16.msra.mxu0 0
        %1603 = vmatprep.subr.bf16.mxu0 0
        %1604 = vmatpush2.bf16.msra.mxu0 0
        %1605 = vmatprep.subr.bf16.mxu0 0
        %1606 = vmatpush2.bf16.msra.mxu0 0
        %1607 = vmatprep.subr.bf16.mxu0 0
        %1608 = vmatpush2.bf16.msra.mxu0 0
        %1609 = vmatprep.subr.bf16.mxu0 0
        %1610 = vmatpush2.bf16.msra.mxu0 0
        %1611 = vmatprep.subr.bf16.mxu0 0
        %1612 = vmatpush2.bf16.msra.mxu0 0
        %1613 = vmatprep.subr.bf16.mxu0 0
        %1614 = vmatpush2.bf16.msra.mxu0 0
        %1615 = vmatprep.subr.bf16.mxu0 0
        %1616 = vmatpush2.bf16.msra.mxu0 0
        %1617 = vmatprep.mubr.bf16.mxu0 0
        %1618 = vmatmul.mubr.bf16.gmra.mxu0 %v1580
        %v1619 = vpop.f32.mrf.mxu0
        %v1620 = vadd.f32 0.0, %v1619
        %v1621 = vpop.f32.mrf.mxu0
        %v1622 = vpop.f32.mrf.mxu0
        %v1623 = vpop.f32.mrf.mxu0
        %1624 = vdwg.mxu0
        %v1634 = vunpack.c.l.b16 %v1524
        %v1635 = vunpack.c.l.b16 %v1525
        %v1636 = vunpack.c.l.b16 %v1526
        %v1637 = vunpack.c.l.b16 %v1527
        %v1638 = vunpack.c.l.b16 %v1528
        %v1639 = vunpack.c.l.b16 %v1529
        %v1640 = vunpack.c.l.b16 %v1530
        %v1641 = vunpack.c.l.b16 %v1531
        %v1642 = vunpack.c.l.b16 %v1532
        %v1643 = vpack.c.b16 %v1635, %v1634
        %v1644 = vpack.c.b16 %v1637, %v1636
        %v1645 = vpack.c.b16 %v1639, %v1638
        %v1646 = vpack.c.b16 %v1641, %v1640
        %v1647 = vpack.c.b16 %v1642, %v1642
        %v1653 = vsel %vm1578, %v1523, 0
        %v1656 = vsel %vm1180, %v1647, 0
        %1658 = vmatprep.subr.bf16.mxu0 0
        %1659 = vmatpush1.bf16.msra.mxu0 0
        %1660 = vmatprep.subr.bf16.mxu0 0
        %1661 = vmatpush1.bf16.msra.mxu0 0
        %1662 = vmatprep.subr.bf16.mxu0 0
        %1663 = vmatpush1.bf16.msra.mxu0 0
        %1664 = vmatprep.subr.bf16.mxu0 0
        %1665 = vmatpush1.bf16.msra.mxu0 %v1656
        %1666 = vmatprep.subr.bf16.mxu0 0
        %1667 = vmatpush1.bf16.msra.mxu0 %v1646
        %1668 = vmatprep.subr.bf16.mxu0 0
        %1669 = vmatpush1.bf16.msra.mxu0 %v1645
        %1670 = vmatprep.subr.bf16.mxu0 0
        %1671 = vmatpush1.bf16.msra.mxu0 %v1644
        %1672 = vmatprep.subr.bf16.mxu0 0
        %1673 = vmatpush1.bf16.msra.mxu0 %v1643
        %1674 = vmatprep.subr.bf16.mxu0 0
        %1675 = vmatpush2.bf16.msra.mxu0 0
        %1676 = vmatprep.subr.bf16.mxu0 0
        %1677 = vmatpush2.bf16.msra.mxu0 0
        %1678 = vmatprep.subr.bf16.mxu0 0
        %1679 = vmatpush2.bf16.msra.mxu0 0
        %1680 = vmatprep.subr.bf16.mxu0 0
        %1681 = vmatpush2.bf16.msra.mxu0 0
        %1682 = vmatprep.subr.bf16.mxu0 0
        %1683 = vmatpush2.bf16.msra.mxu0 0
        %1684 = vmatprep.subr.bf16.mxu0 0
        %1685 = vmatpush2.bf16.msra.mxu0 0
        %1686 = vmatprep.subr.bf16.mxu0 0
        %1687 = vmatpush2.bf16.msra.mxu0 0
        %1688 = vmatprep.subr.bf16.mxu0 0
        %1689 = vmatpush2.bf16.msra.mxu0 0
        %1690 = vmatprep.mubr.bf16.mxu0 0
        %1691 = vmatmul.mubr.bf16.gmra.mxu0 %v1653
        %v1692 = vpop.f32.mrf.mxu0
        %v1693 = vadd.f32 %v1620, %v1692
        %v1694 = vpop.f32.mrf.mxu0
        %v1695 = vpop.f32.mrf.mxu0
        %v1696 = vpop.f32.mrf.mxu0
        %1697 = vdwg.mxu0
        %s1698 = scalar_lea.vmem %s5, 72
        %v1699 = vld [vmem:[%s1698] sm:$0xf]
        %v1700 = vld [vmem:[%s1698 + $0x4] sm:$0xf]
        %v1701 = vld [vmem:[%s1698 + $0x8] sm:$0xf]
        %v1702 = vld [vmem:[%s1698 + $0xc] sm:$0xf]
        %v1703 = vld [vmem:[%s1698 + $0x10] sm:$0xf]
        %v1704 = vld [vmem:[%s1698 + $0x14] sm:$0xf]
        %v1705 = vld [vmem:[%s1698 + $0x18] sm:$0xf]
        %v1706 = vld [vmem:[%s1698 + $0x1c] sm:$0xf]
        %v1707 = vld [vmem:[%s1698 + $0x20] sm:$0xf]
        %v1709 = vrot.slane %v1533, 1
        %v1719 = vunpack.c.l.b16 %v1699
        %v1720 = vunpack.c.l.b16 %v1700
        %v1721 = vunpack.c.l.b16 %v1701
        %v1722 = vunpack.c.l.b16 %v1702
        %v1723 = vunpack.c.l.b16 %v1703
        %v1724 = vunpack.c.l.b16 %v1704
        %v1725 = vunpack.c.l.b16 %v1705
        %v1726 = vunpack.c.l.b16 %v1706
        %v1727 = vunpack.c.l.b16 %v1707
        %v1728 = vpack.c.b16 %v1720, %v1719
        %v1729 = vpack.c.b16 %v1722, %v1721
        %v1730 = vpack.c.b16 %v1724, %v1723
        %v1731 = vpack.c.b16 %v1726, %v1725
        %v1732 = vpack.c.b16 %v1727, %v1727
        %v1738 = vsel %vm1578, %v1709, 0
        %v1741 = vsel %vm1180, %v1732, 0
        %1743 = vmatprep.subr.bf16.mxu0 0
        %1744 = vmatpush1.bf16.msra.mxu0 0
        %1745 = vmatprep.subr.bf16.mxu0 0
        %1746 = vmatpush1.bf16.msra.mxu0 0
        %1747 = vmatprep.subr.bf16.mxu0 0
        %1748 = vmatpush1.bf16.msra.mxu0 0
        %1749 = vmatprep.subr.bf16.mxu0 0
        %1750 = vmatpush1.bf16.msra.mxu0 %v1741
        %1751 = vmatprep.subr.bf16.mxu0 0
        %1752 = vmatpush1.bf16.msra.mxu0 %v1731
        %1753 = vmatprep.subr.bf16.mxu0 0
        %1754 = vmatpush1.bf16.msra.mxu0 %v1730
        %1755 = vmatprep.subr.bf16.mxu0 0
        %1756 = vmatpush1.bf16.msra.mxu0 %v1729
        %1757 = vmatprep.subr.bf16.mxu0 0
        %1758 = vmatpush1.bf16.msra.mxu0 %v1728
        %1759 = vmatprep.subr.bf16.mxu0 0
        %1760 = vmatpush2.bf16.msra.mxu0 0
        %1761 = vmatprep.subr.bf16.mxu0 0
        %1762 = vmatpush2.bf16.msra.mxu0 0
        %1763 = vmatprep.subr.bf16.mxu0 0
        %1764 = vmatpush2.bf16.msra.mxu0 0
        %1765 = vmatprep.subr.bf16.mxu0 0
        %1766 = vmatpush2.bf16.msra.mxu0 0
        %1767 = vmatprep.subr.bf16.mxu0 0
        %1768 = vmatpush2.bf16.msra.mxu0 0
        %1769 = vmatprep.subr.bf16.mxu0 0
        %1770 = vmatpush2.bf16.msra.mxu0 0
        %1771 = vmatprep.subr.bf16.mxu0 0
        %1772 = vmatpush2.bf16.msra.mxu0 0
        %1773 = vmatprep.subr.bf16.mxu0 0
        %1774 = vmatpush2.bf16.msra.mxu0 0
        %1775 = vmatprep.mubr.bf16.mxu0 0
        %1776 = vmatmul.mubr.bf16.gmra.mxu0 %v1738
        %v1777 = vpop.f32.mrf.mxu0
        %v1778 = vadd.f32 0.0, %v1777
        %v1779 = vpop.f32.mrf.mxu0
        %v1780 = vpop.f32.mrf.mxu0
        %v1781 = vpop.f32.mrf.mxu0
        %1782 = vdwg.mxu0
        %v1783 = vadd.f32 %v1693, %v1778
        %s1784 = scalar_lea.vmem %s5, 108
        %v1785 = vld [vmem:[%s1784] sm:$0xf]
        %v1786 = vld [vmem:[%s1784 + $0x4] sm:$0xf]
        %v1787 = vld [vmem:[%s1784 + $0x8] sm:$0xf]
        %v1788 = vld [vmem:[%s1784 + $0xc] sm:$0xf]
        %v1789 = vld [vmem:[%s1784 + $0x10] sm:$0xf]
        %v1790 = vld [vmem:[%s1784 + $0x14] sm:$0xf]
        %v1791 = vld [vmem:[%s1784 + $0x18] sm:$0xf]
        %v1792 = vld [vmem:[%s1784 + $0x1c] sm:$0xf]
        %v1793 = vld [vmem:[%s1784 + $0x20] sm:$0xf]
        %v1794 = vrot.slane %v1545, 1
        %v1795 = vrot.slane %v1547, 2
        %v1796 = vor.u32 %v1794, %v1795
        %v1806 = vunpack.c.l.b16 %v1785
        %v1807 = vunpack.c.l.b16 %v1786
        %v1808 = vunpack.c.l.b16 %v1787
        %v1809 = vunpack.c.l.b16 %v1788
        %v1810 = vunpack.c.l.b16 %v1789
        %v1811 = vunpack.c.l.b16 %v1790
        %v1812 = vunpack.c.l.b16 %v1791
        %v1813 = vunpack.c.l.b16 %v1792
        %v1814 = vunpack.c.l.b16 %v1793
        %v1815 = vpack.c.b16 %v1807, %v1806
        %v1816 = vpack.c.b16 %v1809, %v1808
        %v1817 = vpack.c.b16 %v1811, %v1810
        %v1818 = vpack.c.b16 %v1813, %v1812
        %v1819 = vpack.c.b16 %v1814, %v1814
        %v1825 = vsel %vm1578, %v1796, 0
        %v1828 = vsel %vm1180, %v1819, 0
        %1830 = vmatprep.subr.bf16.mxu0 0
        %1831 = vmatpush1.bf16.msra.mxu0 0
        %1832 = vmatprep.subr.bf16.mxu0 0
        %1833 = vmatpush1.bf16.msra.mxu0 0
        %1834 = vmatprep.subr.bf16.mxu0 0
        %1835 = vmatpush1.bf16.msra.mxu0 0
        %1836 = vmatprep.subr.bf16.mxu0 0
        %1837 = vmatpush1.bf16.msra.mxu0 %v1828
        %1838 = vmatprep.subr.bf16.mxu0 0
        %1839 = vmatpush1.bf16.msra.mxu0 %v1818
        %1840 = vmatprep.subr.bf16.mxu0 0
        %1841 = vmatpush1.bf16.msra.mxu0 %v1817
        %1842 = vmatprep.subr.bf16.mxu0 0
        %1843 = vmatpush1.bf16.msra.mxu0 %v1816
        %1844 = vmatprep.subr.bf16.mxu0 0
        %1845 = vmatpush1.bf16.msra.mxu0 %v1815
        %1846 = vmatprep.subr.bf16.mxu0 0
        %1847 = vmatpush2.bf16.msra.mxu0 0
        %1848 = vmatprep.subr.bf16.mxu0 0
        %1849 = vmatpush2.bf16.msra.mxu0 0
        %1850 = vmatprep.subr.bf16.mxu0 0
        %1851 = vmatpush2.bf16.msra.mxu0 0
        %1852 = vmatprep.subr.bf16.mxu0 0
        %1853 = vmatpush2.bf16.msra.mxu0 0
        %1854 = vmatprep.subr.bf16.mxu0 0
        %1855 = vmatpush2.bf16.msra.mxu0 0
        %1856 = vmatprep.subr.bf16.mxu0 0
        %1857 = vmatpush2.bf16.msra.mxu0 0
        %1858 = vmatprep.subr.bf16.mxu0 0
        %1859 = vmatpush2.bf16.msra.mxu0 0
        %1860 = vmatprep.subr.bf16.mxu0 0
        %1861 = vmatpush2.bf16.msra.mxu0 0
        %1862 = vmatprep.mubr.bf16.mxu0 0
        %1863 = vmatmul.mubr.bf16.gmra.mxu0 %v1825
        %v1864 = vpop.f32.mrf.mxu0
        %v1865 = vadd.f32 0.0, %v1864
        %v1866 = vpop.f32.mrf.mxu0
        %v1867 = vpop.f32.mrf.mxu0
        %v1868 = vpop.f32.mrf.mxu0
        %1869 = vdwg.mxu0
        %v1870 = vadd.f32 %v1783, %v1865
        %s1871 = scalar_lea.vmem %s5, 144
        %v1872 = vld [vmem:[%s1871] sm:$0xf]
        %v1873 = vld [vmem:[%s1871 + $0x4] sm:$0xf]
        %v1874 = vld [vmem:[%s1871 + $0x8] sm:$0xf]
        %v1875 = vld [vmem:[%s1871 + $0xc] sm:$0xf]
        %v1876 = vld [vmem:[%s1871 + $0x10] sm:$0xf]
        %v1877 = vld [vmem:[%s1871 + $0x14] sm:$0xf]
        %v1878 = vld [vmem:[%s1871 + $0x18] sm:$0xf]
        %v1879 = vld [vmem:[%s1871 + $0x1c] sm:$0xf]
        %v1880 = vld [vmem:[%s1871 + $0x20] sm:$0xf]
        %v1881 = vrot.slane %v1533, 2
        %v1891 = vunpack.c.l.b16 %v1872
        %v1892 = vunpack.c.l.b16 %v1873
        %v1893 = vunpack.c.l.b16 %v1874
        %v1894 = vunpack.c.l.b16 %v1875
        %v1895 = vunpack.c.l.b16 %v1876
        %v1896 = vunpack.c.l.b16 %v1877
        %v1897 = vunpack.c.l.b16 %v1878
        %v1898 = vunpack.c.l.b16 %v1879
        %v1899 = vunpack.c.l.b16 %v1880
        %v1900 = vpack.c.b16 %v1892, %v1891
        %v1901 = vpack.c.b16 %v1894, %v1893
        %v1902 = vpack.c.b16 %v1896, %v1895
        %v1903 = vpack.c.b16 %v1898, %v1897
        %v1904 = vpack.c.b16 %v1899, %v1899
        %v1910 = vsel %vm1578, %v1881, 0
        %v1913 = vsel %vm1180, %v1904, 0
        %1915 = vmatprep.subr.bf16.mxu0 0
        %1916 = vmatpush1.bf16.msra.mxu0 0
        %1917 = vmatprep.subr.bf16.mxu0 0
        %1918 = vmatpush1.bf16.msra.mxu0 0
        %1919 = vmatprep.subr.bf16.mxu0 0
        %1920 = vmatpush1.bf16.msra.mxu0 0
        %1921 = vmatprep.subr.bf16.mxu0 0
        %1922 = vmatpush1.bf16.msra.mxu0 %v1913
        %1923 = vmatprep.subr.bf16.mxu0 0
        %1924 = vmatpush1.bf16.msra.mxu0 %v1903
        %1925 = vmatprep.subr.bf16.mxu0 0
        %1926 = vmatpush1.bf16.msra.mxu0 %v1902
        %1927 = vmatprep.subr.bf16.mxu0 0
        %1928 = vmatpush1.bf16.msra.mxu0 %v1901
        %1929 = vmatprep.subr.bf16.mxu0 0
        %1930 = vmatpush1.bf16.msra.mxu0 %v1900
        %1931 = vmatprep.subr.bf16.mxu0 0
        %1932 = vmatpush2.bf16.msra.mxu0 0
        %1933 = vmatprep.subr.bf16.mxu0 0
        %1934 = vmatpush2.bf16.msra.mxu0 0
        %1935 = vmatprep.subr.bf16.mxu0 0
        %1936 = vmatpush2.bf16.msra.mxu0 0
        %1937 = vmatprep.subr.bf16.mxu0 0
        %1938 = vmatpush2.bf16.msra.mxu0 0
        %1939 = vmatprep.subr.bf16.mxu0 0
        %1940 = vmatpush2.bf16.msra.mxu0 0
        %1941 = vmatprep.subr.bf16.mxu0 0
        %1942 = vmatpush2.bf16.msra.mxu0 0
        %1943 = vmatprep.subr.bf16.mxu0 0
        %1944 = vmatpush2.bf16.msra.mxu0 0
        %1945 = vmatprep.subr.bf16.mxu0 0
        %1946 = vmatpush2.bf16.msra.mxu0 0
        %1947 = vmatprep.mubr.bf16.mxu0 0
        %1948 = vmatmul.mubr.bf16.gmra.mxu0 %v1910
        %v1949 = vpop.f32.mrf.mxu0
        %v1950 = vadd.f32 0.0, %v1949
        %v1951 = vpop.f32.mrf.mxu0
        %v1952 = vpop.f32.mrf.mxu0
        %v1953 = vpop.f32.mrf.mxu0
        %1954 = vdwg.mxu0
        %v1955 = vadd.f32 %v1870, %v1950
        %v1956 = vld [vmem:[%s6] sm:$0x1]
        %v1958 = vlaneseq
        %v1959 = vshrl.u32 %v1958, 7
        %v1960 = vsub.s32 0, %v1959
        %v1961 = vrot.slane %v1956, %v1960
        %v1963 = vadd.f32 %v1955, %v1961
        %v1964 = vmax.f32 %v1963, 0.0
        %v1965 = vpack.c.bf16 %v1964, %v1964
        %v1966 = vld [vmem:[#allocation7] sm:$0x3]
        %vm1967 = vcmask 64512
        %v1969 = vsel %vm1967, %v1966, 0
        %v1972 = vsel %vm1180, %v1965, 0
        %1974 = vmatprep.subr.bf16.mxu0 0
        %1975 = vmatpush1.bf16.msra.mxu0 0
        %1976 = vmatprep.subr.bf16.mxu0 0
        %1977 = vmatpush1.bf16.msra.mxu0 0
        %1978 = vmatprep.subr.bf16.mxu0 0
        %1979 = vmatpush1.bf16.msra.mxu0 0
        %1980 = vmatprep.subr.bf16.mxu0 0
        %1981 = vmatpush1.bf16.msra.mxu0 0
        %1982 = vmatprep.subr.bf16.mxu0 0
        %1983 = vmatpush1.bf16.msra.mxu0 0
        %1984 = vmatprep.subr.bf16.mxu0 0
        %1985 = vmatpush1.bf16.msra.mxu0 0
        %1986 = vmatprep.subr.bf16.mxu0 0
        %1987 = vmatpush1.bf16.msra.mxu0 0
        %1988 = vmatprep.subr.bf16.mxu0 0
        %1989 = vmatpush1.bf16.msra.mxu0 %v1972
        %1990 = vmatprep.subr.bf16.mxu0 0
        %1991 = vmatpush2.bf16.msra.mxu0 0
        %1992 = vmatprep.subr.bf16.mxu0 0
        %1993 = vmatpush2.bf16.msra.mxu0 0
        %1994 = vmatprep.subr.bf16.mxu0 0
        %1995 = vmatpush2.bf16.msra.mxu0 0
        %1996 = vmatprep.subr.bf16.mxu0 0
        %1997 = vmatpush2.bf16.msra.mxu0 0
        %1998 = vmatprep.subr.bf16.mxu0 0
        %1999 = vmatpush2.bf16.msra.mxu0 0
        %2000 = vmatprep.subr.bf16.mxu0 0
        %2001 = vmatpush2.bf16.msra.mxu0 0
        %2002 = vmatprep.subr.bf16.mxu0 0
        %2003 = vmatpush2.bf16.msra.mxu0 0
        %2004 = vmatprep.subr.bf16.mxu0 0
        %2005 = vmatpush2.bf16.msra.mxu0 0
        %2006 = vmatprep.mubr.bf16.mxu0 0
        %2007 = vmatmul.mubr.bf16.gmra.mxu0 %v1969
        %v2008 = vpop.f32.mrf.mxu0
        %v2009 = vadd.f32 0.0, %v2008
        %v2010 = vpop.f32.mrf.mxu0
        %v2011 = vpop.f32.mrf.mxu0
        %v2012 = vpop.f32.mrf.mxu0
        %2013 = vdwg.mxu0
        %s2014 = scalar_lea.vmem [#allocation7], 2
        %v2015 = vld [vmem:[%s2014] sm:$0x3]
        %v2017 = vsel %vm1967, %v2015, 0
        %2019 = vmatprep.subr.bf16.mxu0 0
        %2020 = vmatpush1.bf16.msra.mxu0 0
        %2021 = vmatprep.subr.bf16.mxu0 0
        %2022 = vmatpush1.bf16.msra.mxu0 0
        %2023 = vmatprep.subr.bf16.mxu0 0
        %2024 = vmatpush1.bf16.msra.mxu0 0
        %2025 = vmatprep.subr.bf16.mxu0 0
        %2026 = vmatpush1.bf16.msra.mxu0 0
        %2027 = vmatprep.subr.bf16.mxu0 0
        %2028 = vmatpush1.bf16.msra.mxu0 0
        %2029 = vmatprep.subr.bf16.mxu0 0
        %2030 = vmatpush1.bf16.msra.mxu0 0
        %2031 = vmatprep.subr.bf16.mxu0 0
        %2032 = vmatpush1.bf16.msra.mxu0 0
        %2033 = vmatprep.subr.bf16.mxu0 0
        %2034 = vmatpush1.bf16.msra.mxu0 %v1972
        %2035 = vmatprep.subr.bf16.mxu0 0
        %2036 = vmatpush2.bf16.msra.mxu0 0
        %2037 = vmatprep.subr.bf16.mxu0 0
        %2038 = vmatpush2.bf16.msra.mxu0 0
        %2039 = vmatprep.subr.bf16.mxu0 0
        %2040 = vmatpush2.bf16.msra.mxu0 0
        %2041 = vmatprep.subr.bf16.mxu0 0
        %2042 = vmatpush2.bf16.msra.mxu0 0
        %2043 = vmatprep.subr.bf16.mxu0 0
        %2044 = vmatpush2.bf16.msra.mxu0 0
        %2045 = vmatprep.subr.bf16.mxu0 0
        %2046 = vmatpush2.bf16.msra.mxu0 0
        %2047 = vmatprep.subr.bf16.mxu0 0
        %2048 = vmatpush2.bf16.msra.mxu0 0
        %2049 = vmatprep.subr.bf16.mxu0 0
        %2050 = vmatpush2.bf16.msra.mxu0 0
        %2051 = vmatprep.mubr.bf16.mxu0 0
        %2052 = vmatmul.mubr.bf16.gmra.mxu0 %v2017
        %v2053 = vpop.f32.mrf.mxu0
        %v2054 = vadd.f32 0.0, %v2053
        %v2055 = vpop.f32.mrf.mxu0
        %v2056 = vpop.f32.mrf.mxu0
        %v2057 = vpop.f32.mrf.mxu0
        %2058 = vdwg.mxu0
        %v2059 = vmax.f32 %v2009, %v2054
        %v2060 = vpack.c.bf16 %v2059, %v2059
        %v2061 = vld [vmem:[%s8] sm:$0xf]
        %v2062 = vld [vmem:[%s8 + $0x4] sm:$0xf]
        %v2063 = vld [vmem:[%s8 + $0x8] sm:$0xf]
        %v2064 = vld [vmem:[%s8 + $0xc] sm:$0xf]
        %v2065 = vld [vmem:[%s8 + $0x10] sm:$0xf]
        %v2066 = vld [vmem:[%s8 + $0x14] sm:$0xf]
        %v2067 = vld [vmem:[%s8 + $0x18] sm:$0xf]
        %v2068 = vld [vmem:[%s8 + $0x1c] sm:$0xf]
        %v2069 = vld [vmem:[%s8 + $0x20] sm:$0xf]
        %v2070 = vld [vmem:[%s8 + $0x24] sm:$0xf]
        %v2071 = vld [vmem:[%s8 + $0x28] sm:$0xf]
        %v2072 = vld [vmem:[%s8 + $0x2c] sm:$0xf]
        %v2073 = vld [vmem:[%s8 + $0x30] sm:$0xf]
        %v2074 = vld [vmem:[%s8 + $0x34] sm:$0xf]
        %v2075 = vld [vmem:[%s8 + $0x38] sm:$0xf]
        %v2076 = vld [vmem:[%s8 + $0x3c] sm:$0xf]
        %v2093 = vunpack.c.l.b16 %v2061
        %v2094 = vunpack.c.l.b16 %v2062
        %v2095 = vunpack.c.l.b16 %v2063
        %v2096 = vunpack.c.l.b16 %v2064
        %v2097 = vunpack.c.l.b16 %v2065
        %v2098 = vunpack.c.l.b16 %v2066
        %v2099 = vunpack.c.l.b16 %v2067
        %v2100 = vunpack.c.l.b16 %v2068
        %v2101 = vunpack.c.l.b16 %v2069
        %v2102 = vunpack.c.l.b16 %v2070
        %v2103 = vunpack.c.l.b16 %v2071
        %v2104 = vunpack.c.l.b16 %v2072
        %v2105 = vunpack.c.l.b16 %v2073
        %v2106 = vunpack.c.l.b16 %v2074
        %v2107 = vunpack.c.l.b16 %v2075
        %v2108 = vunpack.c.l.b16 %v2076
        %v2109 = vpack.c.b16 %v2094, %v2093
        %v2110 = vpack.c.b16 %v2096, %v2095
        %v2111 = vpack.c.b16 %v2098, %v2097
        %v2112 = vpack.c.b16 %v2100, %v2099
        %v2113 = vpack.c.b16 %v2102, %v2101
        %v2114 = vpack.c.b16 %v2104, %v2103
        %v2115 = vpack.c.b16 %v2106, %v2105
        %v2116 = vpack.c.b16 %v2108, %v2107
        %2125 = vmatprep.subr.bf16.mxu0 0
        %2126 = vmatpush1.bf16.msra.mxu0 %v2116
        %2127 = vmatprep.subr.bf16.mxu0 0
        %2128 = vmatpush1.bf16.msra.mxu0 %v2115
        %2129 = vmatprep.subr.bf16.mxu0 0
        %2130 = vmatpush1.bf16.msra.mxu0 %v2114
        %2131 = vmatprep.subr.bf16.mxu0 0
        %2132 = vmatpush1.bf16.msra.mxu0 %v2113
        %2133 = vmatprep.subr.bf16.mxu0 0
        %2134 = vmatpush1.bf16.msra.mxu0 %v2112
        %2135 = vmatprep.subr.bf16.mxu0 0
        %2136 = vmatpush1.bf16.msra.mxu0 %v2111
        %2137 = vmatprep.subr.bf16.mxu0 0
        %2138 = vmatpush1.bf16.msra.mxu0 %v2110
        %2139 = vmatprep.subr.bf16.mxu0 0
        %2140 = vmatpush1.bf16.msra.mxu0 %v2109
        %2141 = vmatprep.subr.bf16.mxu0 0
        %2142 = vmatpush2.bf16.msra.mxu0 0
        %2143 = vmatprep.subr.bf16.mxu0 0
        %2144 = vmatpush2.bf16.msra.mxu0 0
        %2145 = vmatprep.subr.bf16.mxu0 0
        %2146 = vmatpush2.bf16.msra.mxu0 0
        %2147 = vmatprep.subr.bf16.mxu0 0
        %2148 = vmatpush2.bf16.msra.mxu0 0
        %2149 = vmatprep.subr.bf16.mxu0 0
        %2150 = vmatpush2.bf16.msra.mxu0 0
        %2151 = vmatprep.subr.bf16.mxu0 0
        %2152 = vmatpush2.bf16.msra.mxu0 0
        %2153 = vmatprep.subr.bf16.mxu0 0
        %2154 = vmatpush2.bf16.msra.mxu0 0
        %2155 = vmatprep.subr.bf16.mxu0 0
        %2156 = vmatpush2.bf16.msra.mxu0 0
        %2157 = vmatprep.mubr.bf16.mxu0 0
        %2158 = vmatmul.mubr.bf16.gmra.mxu0 %v2060
        %v2159 = vpop.f32.mrf.mxu0
        %v2160 = vadd.f32 0.0, %v2159
        %v2161 = vpop.f32.mrf.mxu0
        %v2162 = vpop.f32.mrf.mxu0
        %v2163 = vpop.f32.mrf.mxu0
        %2164 = vdwg.mxu0
        %s2165 = scalar_lea.vmem %s8, 64
        %v2166 = vld [vmem:[%s2165] sm:$0xf]
        %v2167 = vld [vmem:[%s2165 + $0x4] sm:$0xf]
        %v2168 = vld [vmem:[%s2165 + $0x8] sm:$0xf]
        %v2169 = vld [vmem:[%s2165 + $0xc] sm:$0xf]
        %v2170 = vld [vmem:[%s2165 + $0x10] sm:$0xf]
        %v2171 = vld [vmem:[%s2165 + $0x14] sm:$0xf]
        %v2172 = vld [vmem:[%s2165 + $0x18] sm:$0xf]
        %v2173 = vld [vmem:[%s2165 + $0x1c] sm:$0xf]
        %v2174 = vld [vmem:[%s2165 + $0x20] sm:$0xf]
        %v2175 = vld [vmem:[%s2165 + $0x24] sm:$0xf]
        %v2176 = vld [vmem:[%s2165 + $0x28] sm:$0xf]
        %v2177 = vld [vmem:[%s2165 + $0x2c] sm:$0xf]
        %v2178 = vld [vmem:[%s2165 + $0x30] sm:$0xf]
        %v2179 = vld [vmem:[%s2165 + $0x34] sm:$0xf]
        %v2180 = vld [vmem:[%s2165 + $0x38] sm:$0xf]
        %v2181 = vld [vmem:[%s2165 + $0x3c] sm:$0xf]
        %v2198 = vunpack.c.l.b16 %v2166
        %v2199 = vunpack.c.l.b16 %v2167
        %v2200 = vunpack.c.l.b16 %v2168
        %v2201 = vunpack.c.l.b16 %v2169
        %v2202 = vunpack.c.l.b16 %v2170
        %v2203 = vunpack.c.l.b16 %v2171
        %v2204 = vunpack.c.l.b16 %v2172
        %v2205 = vunpack.c.l.b16 %v2173
        %v2206 = vunpack.c.l.b16 %v2174
        %v2207 = vunpack.c.l.b16 %v2175
        %v2208 = vunpack.c.l.b16 %v2176
        %v2209 = vunpack.c.l.b16 %v2177
        %v2210 = vunpack.c.l.b16 %v2178
        %v2211 = vunpack.c.l.b16 %v2179
        %v2212 = vunpack.c.l.b16 %v2180
        %v2213 = vunpack.c.l.b16 %v2181
        %v2214 = vpack.c.b16 %v2199, %v2198
        %v2215 = vpack.c.b16 %v2201, %v2200
        %v2216 = vpack.c.b16 %v2203, %v2202
        %v2217 = vpack.c.b16 %v2205, %v2204
        %v2218 = vpack.c.b16 %v2207, %v2206
        %v2219 = vpack.c.b16 %v2209, %v2208
        %v2220 = vpack.c.b16 %v2211, %v2210
        %v2221 = vpack.c.b16 %v2213, %v2212
        %2230 = vmatprep.subr.bf16.mxu0 0
        %2231 = vmatpush1.bf16.msra.mxu0 %v2221
        %2232 = vmatprep.subr.bf16.mxu0 0
        %2233 = vmatpush1.bf16.msra.mxu0 %v2220
        %2234 = vmatprep.subr.bf16.mxu0 0
        %2235 = vmatpush1.bf16.msra.mxu0 %v2219
        %2236 = vmatprep.subr.bf16.mxu0 0
        %2237 = vmatpush1.bf16.msra.mxu0 %v2218
        %2238 = vmatprep.subr.bf16.mxu0 0
        %2239 = vmatpush1.bf16.msra.mxu0 %v2217
        %2240 = vmatprep.subr.bf16.mxu0 0
        %2241 = vmatpush1.bf16.msra.mxu0 %v2216
        %2242 = vmatprep.subr.bf16.mxu0 0
        %2243 = vmatpush1.bf16.msra.mxu0 %v2215
        %2244 = vmatprep.subr.bf16.mxu0 0
        %2245 = vmatpush1.bf16.msra.mxu0 %v2214
        %2246 = vmatprep.subr.bf16.mxu0 0
        %2247 = vmatpush2.bf16.msra.mxu0 0
        %2248 = vmatprep.subr.bf16.mxu0 0
        %2249 = vmatpush2.bf16.msra.mxu0 0
        %2250 = vmatprep.subr.bf16.mxu0 0
        %2251 = vmatpush2.bf16.msra.mxu0 0
        %2252 = vmatprep.subr.bf16.mxu0 0
        %2253 = vmatpush2.bf16.msra.mxu0 0
        %2254 = vmatprep.subr.bf16.mxu0 0
        %2255 = vmatpush2.bf16.msra.mxu0 0
        %2256 = vmatprep.subr.bf16.mxu0 0
        %2257 = vmatpush2.bf16.msra.mxu0 0
        %2258 = vmatprep.subr.bf16.mxu0 0
        %2259 = vmatpush2.bf16.msra.mxu0 0
        %2260 = vmatprep.subr.bf16.mxu0 0
        %2261 = vmatpush2.bf16.msra.mxu0 0
        %2262 = vmatprep.mubr.bf16.mxu0 0
        %2263 = vmatmul.mubr.bf16.gmra.mxu0 %v2060
        %v2264 = vpop.f32.mrf.mxu0
        %v2265 = vadd.f32 0.0, %v2264
        %v2266 = vpop.f32.mrf.mxu0
        %v2267 = vpop.f32.mrf.mxu0
        %v2268 = vpop.f32.mrf.mxu0
        %2269 = vdwg.mxu0
        %v2270 = vmax.f32 %v2160, %v2265
        %v2271 = vpack.c.bf16 %v2270, %v2270
        %v2272 = vld [vmem:[%s9] sm:$0xff]
        %v2273 = vld [vmem:[%s9 + $0x8] sm:$0xff]
        %v2274 = vld [vmem:[%s9 + $0x10] sm:$0xff]
        %v2275 = vld [vmem:[%s9 + $0x18] sm:$0xff]
        %v2276 = vld [vmem:[%s9 + $0x20] sm:$0xff]
        %v2277 = vld [vmem:[%s9 + $0x28] sm:$0xff]
        %v2278 = vld [vmem:[%s9 + $0x30] sm:$0xff]
        %v2279 = vld [vmem:[%s9 + $0x38] sm:$0xff]
        %s2280 = scalar_lea.vmem %s9, 64
        %v2281 = vld [vmem:[%s2280] sm:$0xff]
        %v2282 = vld [vmem:[%s2280 + $0x8] sm:$0xff]
        %v2283 = vld [vmem:[%s2280 + $0x10] sm:$0xff]
        %v2284 = vld [vmem:[%s2280 + $0x18] sm:$0xff]
        %v2285 = vld [vmem:[%s2280 + $0x20] sm:$0xff]
        %v2286 = vld [vmem:[%s2280 + $0x28] sm:$0xff]
        %v2287 = vld [vmem:[%s2280 + $0x30] sm:$0xff]
        %v2288 = vld [vmem:[%s2280 + $0x38] sm:$0xff]
        %v2290 = vshrl.u32 %v2271, 16
        %v2300 = vunpack.c.l.b16 %v2281
        %v2301 = vunpack.c.h.b16 %v2281
        %v2302 = vunpack.c.l.b16 %v2282
        %v2303 = vunpack.c.h.b16 %v2282
        %v2304 = vunpack.c.l.b16 %v2283
        %v2305 = vunpack.c.h.b16 %v2283
        %v2306 = vunpack.c.l.b16 %v2284
        %v2307 = vunpack.c.h.b16 %v2284
        %v2308 = vunpack.c.l.b16 %v2285
        %v2309 = vunpack.c.h.b16 %v2285
        %v2310 = vunpack.c.l.b16 %v2286
        %v2311 = vunpack.c.h.b16 %v2286
        %v2312 = vunpack.c.l.b16 %v2287
        %v2313 = vunpack.c.h.b16 %v2287
        %v2314 = vunpack.c.l.b16 %v2288
        %v2315 = vunpack.c.h.b16 %v2288
        %v2316 = vpack.c.b16 %v2302, %v2300
        %v2317 = vpack.c.b16 %v2303, %v2301
        %v2318 = vpack.c.b16 %v2306, %v2304
        %v2319 = vpack.c.b16 %v2307, %v2305
        %v2320 = vpack.c.b16 %v2310, %v2308
        %v2321 = vpack.c.b16 %v2311, %v2309
        %v2322 = vpack.c.b16 %v2314, %v2312
        %v2323 = vpack.c.b16 %v2315, %v2313
        %vm2332 = vcmask 523264
        %v2334 = vsel %vm2332, %v2290, 0
        %2336 = vmatprep.subr.bf16.mxu0 0
        %2337 = vmatpush1.bf16.msra.mxu0 0
        %2338 = vmatprep.subr.bf16.mxu0 0
        %2339 = vmatpush1.bf16.msra.mxu0 0
        %2340 = vmatprep.subr.bf16.mxu0 0
        %2341 = vmatpush1.bf16.msra.mxu0 0
        %2342 = vmatprep.subr.bf16.mxu0 0
        %2343 = vmatpush1.bf16.msra.mxu0 0
        %2344 = vmatprep.subr.bf16.mxu0 %v2323
        %2345 = vmatpush1.bf16.msra.mxu0 %v2322
        %2346 = vmatprep.subr.bf16.mxu0 %v2321
        %2347 = vmatpush1.bf16.msra.mxu0 %v2320
        %2348 = vmatprep.subr.bf16.mxu0 %v2319
        %2349 = vmatpush1.bf16.msra.mxu0 %v2318
        %2350 = vmatprep.subr.bf16.mxu0 %v2317
        %2351 = vmatpush1.bf16.msra.mxu0 %v2316
        %2352 = vmatprep.subr.bf16.mxu0 0
        %2353 = vmatpush2.bf16.msra.mxu0 0
        %2354 = vmatprep.subr.bf16.mxu0 0
        %2355 = vmatpush2.bf16.msra.mxu0 0
        %2356 = vmatprep.subr.bf16.mxu0 0
        %2357 = vmatpush2.bf16.msra.mxu0 0
        %2358 = vmatprep.subr.bf16.mxu0 0
        %2359 = vmatpush2.bf16.msra.mxu0 0
        %2360 = vmatprep.subr.bf16.mxu0 0
        %2361 = vmatpush2.bf16.msra.mxu0 0
        %2362 = vmatprep.subr.bf16.mxu0 0
        %2363 = vmatpush2.bf16.msra.mxu0 0
        %2364 = vmatprep.subr.bf16.mxu0 0
        %2365 = vmatpush2.bf16.msra.mxu0 0
        %2366 = vmatprep.subr.bf16.mxu0 0
        %2367 = vmatpush2.bf16.msra.mxu0 0
        %2368 = vmatprep.mubr.bf16.mxu0 0
        %2369 = vmatmul.mubr.bf16.gmra.mxu0 %v2334
        %v2370 = vpop.f32.mrf.mxu0
        %v2371 = vadd.f32 0.0, %v2370
        %v2372 = vpop.f32.mrf.mxu0
        %v2373 = vadd.f32 0.0, %v2372
        %v2374 = vpop.f32.mrf.mxu0
        %v2375 = vpop.f32.mrf.mxu0
        %2376 = vdwg.mxu0
        %v2385 = vunpack.c.l.b16 %v2272
        %v2386 = vunpack.c.h.b16 %v2272
        %v2387 = vunpack.c.l.b16 %v2273
        %v2388 = vunpack.c.h.b16 %v2273
        %v2389 = vunpack.c.l.b16 %v2274
        %v2390 = vunpack.c.h.b16 %v2274
        %v2391 = vunpack.c.l.b16 %v2275
        %v2392 = vunpack.c.h.b16 %v2275
        %v2393 = vunpack.c.l.b16 %v2276
        %v2394 = vunpack.c.h.b16 %v2276
        %v2395 = vunpack.c.l.b16 %v2277
        %v2396 = vunpack.c.h.b16 %v2277
        %v2397 = vunpack.c.l.b16 %v2278
        %v2398 = vunpack.c.h.b16 %v2278
        %v2399 = vunpack.c.l.b16 %v2279
        %v2400 = vunpack.c.h.b16 %v2279
        %v2401 = vpack.c.b16 %v2387, %v2385
        %v2402 = vpack.c.b16 %v2388, %v2386
        %v2403 = vpack.c.b16 %v2391, %v2389
        %v2404 = vpack.c.b16 %v2392, %v2390
        %v2405 = vpack.c.b16 %v2395, %v2393
        %v2406 = vpack.c.b16 %v2396, %v2394
        %v2407 = vpack.c.b16 %v2399, %v2397
        %v2408 = vpack.c.b16 %v2400, %v2398
        %v2417 = vsel %vm2332, %v2271, 0
        %2419 = vmatprep.subr.bf16.mxu0 0
        %2420 = vmatpush1.bf16.msra.mxu0 0
        %2421 = vmatprep.subr.bf16.mxu0 0
        %2422 = vmatpush1.bf16.msra.mxu0 0
        %2423 = vmatprep.subr.bf16.mxu0 0
        %2424 = vmatpush1.bf16.msra.mxu0 0
        %2425 = vmatprep.subr.bf16.mxu0 0
        %2426 = vmatpush1.bf16.msra.mxu0 0
        %2427 = vmatprep.subr.bf16.mxu0 %v2408
        %2428 = vmatpush1.bf16.msra.mxu0 %v2407
        %2429 = vmatprep.subr.bf16.mxu0 %v2406
        %2430 = vmatpush1.bf16.msra.mxu0 %v2405
        %2431 = vmatprep.subr.bf16.mxu0 %v2404
        %2432 = vmatpush1.bf16.msra.mxu0 %v2403
        %2433 = vmatprep.subr.bf16.mxu0 %v2402
        %2434 = vmatpush1.bf16.msra.mxu0 %v2401
        %2435 = vmatprep.subr.bf16.mxu0 0
        %2436 = vmatpush2.bf16.msra.mxu0 0
        %2437 = vmatprep.subr.bf16.mxu0 0
        %2438 = vmatpush2.bf16.msra.mxu0 0
        %2439 = vmatprep.subr.bf16.mxu0 0
        %2440 = vmatpush2.bf16.msra.mxu0 0
        %2441 = vmatprep.subr.bf16.mxu0 0
        %2442 = vmatpush2.bf16.msra.mxu0 0
        %2443 = vmatprep.subr.bf16.mxu0 0
        %2444 = vmatpush2.bf16.msra.mxu0 0
        %2445 = vmatprep.subr.bf16.mxu0 0
        %2446 = vmatpush2.bf16.msra.mxu0 0
        %2447 = vmatprep.subr.bf16.mxu0 0
        %2448 = vmatpush2.bf16.msra.mxu0 0
        %2449 = vmatprep.subr.bf16.mxu0 0
        %2450 = vmatpush2.bf16.msra.mxu0 0
        %2451 = vmatprep.mubr.bf16.mxu0 0
        %2452 = vmatmul.mubr.bf16.gmra.mxu0 %v2417
        %v2453 = vpop.f32.mrf.mxu0
        %v2454 = vadd.f32 %v2371, %v2453
        %v2455 = vpop.f32.mrf.mxu0
        %v2456 = vadd.f32 %v2373, %v2455
        %v2457 = vpop.f32.mrf.mxu0
        %v2458 = vpop.f32.mrf.mxu0
        %2459 = vdwg.mxu0
        %s2460 = scalar_lea.vmem %s9, 128
        %v2461 = vld [vmem:[%s2460] sm:$0xff]
        %v2462 = vld [vmem:[%s2460 + $0x8] sm:$0xff]
        %v2463 = vld [vmem:[%s2460 + $0x10] sm:$0xff]
        %v2464 = vld [vmem:[%s2460 + $0x18] sm:$0xff]
        %v2465 = vld [vmem:[%s2460 + $0x20] sm:$0xff]
        %v2466 = vld [vmem:[%s2460 + $0x28] sm:$0xff]
        %v2467 = vld [vmem:[%s2460 + $0x30] sm:$0xff]
        %v2468 = vld [vmem:[%s2460 + $0x38] sm:$0xff]
        %v2470 = vrot.slane %v2271, 1
        %v2479 = vunpack.c.l.b16 %v2461
        %v2480 = vunpack.c.h.b16 %v2461
        %v2481 = vunpack.c.l.b16 %v2462
        %v2482 = vunpack.c.h.b16 %v2462
        %v2483 = vunpack.c.l.b16 %v2463
        %v2484 = vunpack.c.h.b16 %v2463
        %v2485 = vunpack.c.l.b16 %v2464
        %v2486 = vunpack.c.h.b16 %v2464
        %v2487 = vunpack.c.l.b16 %v2465
        %v2488 = vunpack.c.h.b16 %v2465
        %v2489 = vunpack.c.l.b16 %v2466
        %v2490 = vunpack.c.h.b16 %v2466
        %v2491 = vunpack.c.l.b16 %v2467
        %v2492 = vunpack.c.h.b16 %v2467
        %v2493 = vunpack.c.l.b16 %v2468
        %v2494 = vunpack.c.h.b16 %v2468
        %v2495 = vpack.c.b16 %v2481, %v2479
        %v2496 = vpack.c.b16 %v2482, %v2480
        %v2497 = vpack.c.b16 %v2485, %v2483
        %v2498 = vpack.c.b16 %v2486, %v2484
        %v2499 = vpack.c.b16 %v2489, %v2487
        %v2500 = vpack.c.b16 %v2490, %v2488
        %v2501 = vpack.c.b16 %v2493, %v2491
        %v2502 = vpack.c.b16 %v2494, %v2492
        %v2512 = vsel %vm2332, %v2470, 0
        %2514 = vmatprep.subr.bf16.mxu0 0
        %2515 = vmatpush1.bf16.msra.mxu0 0
        %2516 = vmatprep.subr.bf16.mxu0 0
        %2517 = vmatpush1.bf16.msra.mxu0 0
        %2518 = vmatprep.subr.bf16.mxu0 0
        %2519 = vmatpush1.bf16.msra.mxu0 0
        %2520 = vmatprep.subr.bf16.mxu0 0
        %2521 = vmatpush1.bf16.msra.mxu0 0
        %2522 = vmatprep.subr.bf16.mxu0 %v2502
        %2523 = vmatpush1.bf16.msra.mxu0 %v2501
        %2524 = vmatprep.subr.bf16.mxu0 %v2500
        %2525 = vmatpush1.bf16.msra.mxu0 %v2499
        %2526 = vmatprep.subr.bf16.mxu0 %v2498
        %2527 = vmatpush1.bf16.msra.mxu0 %v2497
        %2528 = vmatprep.subr.bf16.mxu0 %v2496
        %2529 = vmatpush1.bf16.msra.mxu0 %v2495
        %2530 = vmatprep.subr.bf16.mxu0 0
        %2531 = vmatpush2.bf16.msra.mxu0 0
        %2532 = vmatprep.subr.bf16.mxu0 0
        %2533 = vmatpush2.bf16.msra.mxu0 0
        %2534 = vmatprep.subr.bf16.mxu0 0
        %2535 = vmatpush2.bf16.msra.mxu0 0
        %2536 = vmatprep.subr.bf16.mxu0 0
        %2537 = vmatpush2.bf16.msra.mxu0 0
        %2538 = vmatprep.subr.bf16.mxu0 0
        %2539 = vmatpush2.bf16.msra.mxu0 0
        %2540 = vmatprep.subr.bf16.mxu0 0
        %2541 = vmatpush2.bf16.msra.mxu0 0
        %2542 = vmatprep.subr.bf16.mxu0 0
        %2543 = vmatpush2.bf16.msra.mxu0 0
        %2544 = vmatprep.subr.bf16.mxu0 0
        %2545 = vmatpush2.bf16.msra.mxu0 0
        %2546 = vmatprep.mubr.bf16.mxu0 0
        %2547 = vmatmul.mubr.bf16.gmra.mxu0 %v2512
        %v2548 = vpop.f32.mrf.mxu0
        %v2549 = vadd.f32 0.0, %v2548
        %v2550 = vpop.f32.mrf.mxu0
        %v2551 = vadd.f32 0.0, %v2550
        %v2552 = vpop.f32.mrf.mxu0
        %v2553 = vpop.f32.mrf.mxu0
        %2554 = vdwg.mxu0
        %v2555 = vadd.f32 %v2454, %v2549
        %v2556 = vadd.f32 %v2456, %v2551
        %s2557 = scalar_lea.vmem %s9, 192
        %v2558 = vld [vmem:[%s2557] sm:$0xff]
        %v2559 = vld [vmem:[%s2557 + $0x8] sm:$0xff]
        %v2560 = vld [vmem:[%s2557 + $0x10] sm:$0xff]
        %v2561 = vld [vmem:[%s2557 + $0x18] sm:$0xff]
        %v2562 = vld [vmem:[%s2557 + $0x20] sm:$0xff]
        %v2563 = vld [vmem:[%s2557 + $0x28] sm:$0xff]
        %v2564 = vld [vmem:[%s2557 + $0x30] sm:$0xff]
        %v2565 = vld [vmem:[%s2557 + $0x38] sm:$0xff]
        %v2566 = vrot.slane %v2290, 1
        %v2575 = vunpack.c.l.b16 %v2558
        %v2576 = vunpack.c.h.b16 %v2558
        %v2577 = vunpack.c.l.b16 %v2559
        %v2578 = vunpack.c.h.b16 %v2559
        %v2579 = vunpack.c.l.b16 %v2560
        %v2580 = vunpack.c.h.b16 %v2560
        %v2581 = vunpack.c.l.b16 %v2561
        %v2582 = vunpack.c.h.b16 %v2561
        %v2583 = vunpack.c.l.b16 %v2562
        %v2584 = vunpack.c.h.b16 %v2562
        %v2585 = vunpack.c.l.b16 %v2563
        %v2586 = vunpack.c.h.b16 %v2563
        %v2587 = vunpack.c.l.b16 %v2564
        %v2588 = vunpack.c.h.b16 %v2564
        %v2589 = vunpack.c.l.b16 %v2565
        %v2590 = vunpack.c.h.b16 %v2565
        %v2591 = vpack.c.b16 %v2577, %v2575
        %v2592 = vpack.c.b16 %v2578, %v2576
        %v2593 = vpack.c.b16 %v2581, %v2579
        %v2594 = vpack.c.b16 %v2582, %v2580
        %v2595 = vpack.c.b16 %v2585, %v2583
        %v2596 = vpack.c.b16 %v2586, %v2584
        %v2597 = vpack.c.b16 %v2589, %v2587
        %v2598 = vpack.c.b16 %v2590, %v2588
        %v2608 = vsel %vm2332, %v2566, 0
        %2610 = vmatprep.subr.bf16.mxu0 0
        %2611 = vmatpush1.bf16.msra.mxu0 0
        %2612 = vmatprep.subr.bf16.mxu0 0
        %2613 = vmatpush1.bf16.msra.mxu0 0
        %2614 = vmatprep.subr.bf16.mxu0 0
        %2615 = vmatpush1.bf16.msra.mxu0 0
        %2616 = vmatprep.subr.bf16.mxu0 0
        %2617 = vmatpush1.bf16.msra.mxu0 0
        %2618 = vmatprep.subr.bf16.mxu0 %v2598
        %2619 = vmatpush1.bf16.msra.mxu0 %v2597
        %2620 = vmatprep.subr.bf16.mxu0 %v2596
        %2621 = vmatpush1.bf16.msra.mxu0 %v2595
        %2622 = vmatprep.subr.bf16.mxu0 %v2594
        %2623 = vmatpush1.bf16.msra.mxu0 %v2593
        %2624 = vmatprep.subr.bf16.mxu0 %v2592
        %2625 = vmatpush1.bf16.msra.mxu0 %v2591
        %2626 = vmatprep.subr.bf16.mxu0 0
        %2627 = vmatpush2.bf16.msra.mxu0 0
        %2628 = vmatprep.subr.bf16.mxu0 0
        %2629 = vmatpush2.bf16.msra.mxu0 0
        %2630 = vmatprep.subr.bf16.mxu0 0
        %2631 = vmatpush2.bf16.msra.mxu0 0
        %2632 = vmatprep.subr.bf16.mxu0 0
        %2633 = vmatpush2.bf16.msra.mxu0 0
        %2634 = vmatprep.subr.bf16.mxu0 0
        %2635 = vmatpush2.bf16.msra.mxu0 0
        %2636 = vmatprep.subr.bf16.mxu0 0
        %2637 = vmatpush2.bf16.msra.mxu0 0
        %2638 = vmatprep.subr.bf16.mxu0 0
        %2639 = vmatpush2.bf16.msra.mxu0 0
        %2640 = vmatprep.subr.bf16.mxu0 0
        %2641 = vmatpush2.bf16.msra.mxu0 0
        %2642 = vmatprep.mubr.bf16.mxu0 0
        %2643 = vmatmul.mubr.bf16.gmra.mxu0 %v2608
        %v2644 = vpop.f32.mrf.mxu0
        %v2645 = vadd.f32 0.0, %v2644
        %v2646 = vpop.f32.mrf.mxu0
        %v2647 = vadd.f32 0.0, %v2646
        %v2648 = vpop.f32.mrf.mxu0
        %v2649 = vpop.f32.mrf.mxu0
        %2650 = vdwg.mxu0
        %v2651 = vadd.f32 %v2555, %v2645
        %v2652 = vadd.f32 %v2556, %v2647
        %v2655 = vcombine.low %v2651, %v2652
        %v2657 = vunpack.c.l.s4 1966171168
        %v2658 = vunpack.c.0.s8 %v2657
        %v2659 = vlaneseq
        %v2660 = vshrl.u32 %v2659, 7
        %v2661 = vsub.s32 %v2658, %v2660
        %v2662 = vrot.slane %v2655, %v2661
        %v2664 = vunpack.c.l.s4 1966171168
        %v2665 = vunpack.c.0.s8 %v2664
        %v2666 = vlaneseq
        %v2667 = vshrl.u32 %v2666, 7
        %v2668 = vsub.s32 %v2665, %v2667
        %v2669 = vrot.slane %v2662, %v2668
        %v2671 = vlaneseq
        %vm2672 = vcmp.ge.s32.totalorder %v2671, 0
        %vm2673 = vcmp.lt.s32.totalorder %v2671, 256
        %vm2674 = vmand %vm2672, %vm2673
        %2675 = vst.msk [vmem:[%s650] sm:$0x3] %vm2674, %v2669
        %v2676 = vpack.c.bf16 %v2651, %v2651
        %v2677 = vpack.c.bf16 %v2652, %v2652
        %v2678 = vld [vmem:[%s10] sm:$0xf]
        %v2679 = vld [vmem:[%s10 + $0x4] sm:$0xf]
        %v2680 = vld [vmem:[%s10 + $0x8] sm:$0xf]
        %v2681 = vld [vmem:[%s10 + $0xc] sm:$0xf]
        %v2682 = vld [vmem:[%s10 + $0x10] sm:$0xf]
        %v2683 = vld [vmem:[%s10 + $0x14] sm:$0xf]
        %v2684 = vld [vmem:[%s10 + $0x18] sm:$0xf]
        %v2685 = vld [vmem:[%s10 + $0x1c] sm:$0xf]
        %v2686 = vld [vmem:[%s10 + $0x20] sm:$0xf]
        %v2687 = vld [vmem:[%s10 + $0x24] sm:$0xf]
        %v2688 = vld [vmem:[%s10 + $0x28] sm:$0xf]
        %v2689 = vld [vmem:[%s10 + $0x2c] sm:$0xf]
        %v2690 = vld [vmem:[%s10 + $0x30] sm:$0xf]
        %v2691 = vld [vmem:[%s10 + $0x34] sm:$0xf]
        %v2692 = vld [vmem:[%s10 + $0x38] sm:$0xf]
        %v2693 = vld [vmem:[%s10 + $0x3c] sm:$0xf]
        %v2694 = vld [vmem:[%s10 + $0x40] sm:$0xf]
        %v2695 = vld [vmem:[%s10 + $0x44] sm:$0xf]
        %v2696 = vld [vmem:[%s10 + $0x48] sm:$0xf]
        %v2697 = vld [vmem:[%s10 + $0x4c] sm:$0xf]
        %v2698 = vld [vmem:[%s10 + $0x50] sm:$0xf]
        %v2699 = vld [vmem:[%s10 + $0x54] sm:$0xf]
        %v2700 = vld [vmem:[%s10 + $0x58] sm:$0xf]
        %v2701 = vld [vmem:[%s10 + $0x5c] sm:$0xf]
        %v2702 = vld [vmem:[%s10 + $0x60] sm:$0xf]
        %v2703 = vld [vmem:[%s10 + $0x64] sm:$0xf]
        %v2704 = vld [vmem:[%s10 + $0x68] sm:$0xf]
        %v2705 = vld [vmem:[%s10 + $0x6c] sm:$0xf]
        %v2706 = vld [vmem:[%s10 + $0x70] sm:$0xf]
        %v2707 = vld [vmem:[%s10 + $0x74] sm:$0xf]
        %v2708 = vld [vmem:[%s10 + $0x78] sm:$0xf]
        %v2709 = vld [vmem:[%s10 + $0x7c] sm:$0xf]
        %v2710 = vld [vmem:[#allocation8] sm:$0x1]
        %v2743 = vunpack.c.l.b16 %v2678
        %v2744 = vunpack.c.l.b16 %v2679
        %v2745 = vunpack.c.l.b16 %v2680
        %v2746 = vunpack.c.l.b16 %v2681
        %v2747 = vunpack.c.l.b16 %v2682
        %v2748 = vunpack.c.l.b16 %v2683
        %v2749 = vunpack.c.l.b16 %v2684
        %v2750 = vunpack.c.l.b16 %v2685
        %v2751 = vunpack.c.l.b16 %v2686
        %v2752 = vunpack.c.l.b16 %v2687
        %v2753 = vunpack.c.l.b16 %v2688
        %v2754 = vunpack.c.l.b16 %v2689
        %v2755 = vunpack.c.l.b16 %v2690
        %v2756 = vunpack.c.l.b16 %v2691
        %v2757 = vunpack.c.l.b16 %v2692
        %v2758 = vunpack.c.l.b16 %v2693
        %v2759 = vunpack.c.l.b16 %v2694
        %v2760 = vunpack.c.l.b16 %v2695
        %v2761 = vunpack.c.l.b16 %v2696
        %v2762 = vunpack.c.l.b16 %v2697
        %v2763 = vunpack.c.l.b16 %v2698
        %v2764 = vunpack.c.l.b16 %v2699
        %v2765 = vunpack.c.l.b16 %v2700
        %v2766 = vunpack.c.l.b16 %v2701
        %v2767 = vunpack.c.l.b16 %v2702
        %v2768 = vunpack.c.l.b16 %v2703
        %v2769 = vunpack.c.l.b16 %v2704
        %v2770 = vunpack.c.l.b16 %v2705
        %v2771 = vunpack.c.l.b16 %v2706
        %v2772 = vunpack.c.l.b16 %v2707
        %v2773 = vunpack.c.l.b16 %v2708
        %v2774 = vunpack.c.l.b16 %v2709
        %v2775 = vpack.c.b16 %v2744, %v2743
        %v2776 = vpack.c.b16 %v2746, %v2745
        %v2777 = vpack.c.b16 %v2748, %v2747
        %v2778 = vpack.c.b16 %v2750, %v2749
        %v2779 = vpack.c.b16 %v2752, %v2751
        %v2780 = vpack.c.b16 %v2754, %v2753
        %v2781 = vpack.c.b16 %v2756, %v2755
        %v2782 = vpack.c.b16 %v2758, %v2757
        %v2783 = vpack.c.b16 %v2760, %v2759
        %v2784 = vpack.c.b16 %v2762, %v2761
        %v2785 = vpack.c.b16 %v2764, %v2763
        %v2786 = vpack.c.b16 %v2766, %v2765
        %v2787 = vpack.c.b16 %v2768, %v2767
        %v2788 = vpack.c.b16 %v2770, %v2769
        %v2789 = vpack.c.b16 %v2772, %v2771
        %v2790 = vpack.c.b16 %v2774, %v2773
        %2807 = vmatprep.subr.bf16.mxu0 0
        %2808 = vmatpush1.bf16.msra.mxu0 %v2782
        %2809 = vmatprep.subr.bf16.mxu0 0
        %2810 = vmatpush1.bf16.msra.mxu0 %v2781
        %2811 = vmatprep.subr.bf16.mxu0 0
        %2812 = vmatpush1.bf16.msra.mxu0 %v2780
        %2813 = vmatprep.subr.bf16.mxu0 0
        %2814 = vmatpush1.bf16.msra.mxu0 %v2779
        %2815 = vmatprep.subr.bf16.mxu0 0
        %2816 = vmatpush1.bf16.msra.mxu0 %v2778
        %2817 = vmatprep.subr.bf16.mxu0 0
        %2818 = vmatpush1.bf16.msra.mxu0 %v2777
        %2819 = vmatprep.subr.bf16.mxu0 0
        %2820 = vmatpush1.bf16.msra.mxu0 %v2776
        %2821 = vmatprep.subr.bf16.mxu0 0
        %2822 = vmatpush1.bf16.msra.mxu0 %v2775
        %2823 = vmatprep.subr.bf16.mxu0 0
        %2824 = vmatpush2.bf16.msra.mxu0 %v2790
        %2825 = vmatprep.subr.bf16.mxu0 0
        %2826 = vmatpush2.bf16.msra.mxu0 %v2789
        %2827 = vmatprep.subr.bf16.mxu0 0
        %2828 = vmatpush2.bf16.msra.mxu0 %v2788
        %2829 = vmatprep.subr.bf16.mxu0 0
        %2830 = vmatpush2.bf16.msra.mxu0 %v2787
        %2831 = vmatprep.subr.bf16.mxu0 0
        %2832 = vmatpush2.bf16.msra.mxu0 %v2786
        %2833 = vmatprep.subr.bf16.mxu0 0
        %2834 = vmatpush2.bf16.msra.mxu0 %v2785
        %2835 = vmatprep.subr.bf16.mxu0 0
        %2836 = vmatpush2.bf16.msra.mxu0 %v2784
        %2837 = vmatprep.subr.bf16.mxu0 0
        %2838 = vmatpush2.bf16.msra.mxu0 %v2783
        %2839 = vmatprep.mubr.bf16.mxu0 %v2677
        %2840 = vmatmul.mubr.bf16.gmra.mxu0 %v2676
        %v2841 = vpop.f32.mrf.mxu0
        %v2842 = vadd.f32 %v2710, %v2841
        %v2843 = vpop.f32.mrf.mxu0
        %v2844 = vpop.f32.mrf.mxu0
        %v2845 = vpop.f32.mrf.mxu0
        %2846 = vdwg.mxu0
        %v2847 = vmax.f32 %v2842, 0.0
        %v2848 = vpack.c.bf16 %v2847, %v2847
        %v2849 = vld [vmem:[%s12] sm:$0xf]
        %v2850 = vld [vmem:[%s12 + $0x4] sm:$0xf]
        %v2851 = vld [vmem:[%s12 + $0x8] sm:$0xf]
        %v2852 = vld [vmem:[%s12 + $0xc] sm:$0xf]
        %v2853 = vld [vmem:[%s12 + $0x10] sm:$0xf]
        %v2854 = vld [vmem:[%s12 + $0x14] sm:$0xf]
        %v2855 = vld [vmem:[%s12 + $0x18] sm:$0xf]
        %v2856 = vld [vmem:[%s12 + $0x1c] sm:$0xf]
        %v2857 = vld [vmem:[%s12 + $0x20] sm:$0xf]
        %v2858 = vld [vmem:[%s12 + $0x24] sm:$0xf]
        %v2859 = vld [vmem:[%s12 + $0x28] sm:$0xf]
        %v2860 = vld [vmem:[%s12 + $0x2c] sm:$0xf]
        %v2861 = vld [vmem:[%s12 + $0x30] sm:$0xf]
        %v2862 = vld [vmem:[%s12 + $0x34] sm:$0xf]
        %v2863 = vld [vmem:[%s12 + $0x38] sm:$0xf]
        %v2864 = vld [vmem:[#allocation10] sm:$0x1]
        %v2880 = vunpack.c.l.b16 %v2849
        %v2881 = vunpack.c.l.b16 %v2850
        %v2882 = vunpack.c.l.b16 %v2851
        %v2883 = vunpack.c.l.b16 %v2852
        %v2884 = vunpack.c.l.b16 %v2853
        %v2885 = vunpack.c.l.b16 %v2854
        %v2886 = vunpack.c.l.b16 %v2855
        %v2887 = vunpack.c.l.b16 %v2856
        %v2888 = vunpack.c.l.b16 %v2857
        %v2889 = vunpack.c.l.b16 %v2858
        %v2890 = vunpack.c.l.b16 %v2859
        %v2891 = vunpack.c.l.b16 %v2860
        %v2892 = vunpack.c.l.b16 %v2861
        %v2893 = vunpack.c.l.b16 %v2862
        %v2894 = vunpack.c.l.b16 %v2863
        %v2895 = vpack.c.b16 %v2881, %v2880
        %v2896 = vpack.c.b16 %v2883, %v2882
        %v2897 = vpack.c.b16 %v2885, %v2884
        %v2898 = vpack.c.b16 %v2887, %v2886
        %v2899 = vpack.c.b16 %v2889, %v2888
        %v2900 = vpack.c.b16 %v2891, %v2890
        %v2901 = vpack.c.b16 %v2893, %v2892
        %v2902 = vpack.c.b16 %v2894, %v2894
        %vm2910 = vcmask 982016
        %v2912 = vsel %vm2910, %v2848, 0
        %v2915 = vsel %vm1180, %v2902, 0
        %2917 = vmatprep.subr.bf16.mxu0 0
        %2918 = vmatpush1.bf16.msra.mxu0 %v2915
        %2919 = vmatprep.subr.bf16.mxu0 0
        %2920 = vmatpush1.bf16.msra.mxu0 %v2901
        %2921 = vmatprep.subr.bf16.mxu0 0
        %2922 = vmatpush1.bf16.msra.mxu0 %v2900
        %2923 = vmatprep.subr.bf16.mxu0 0
        %2924 = vmatpush1.bf16.msra.mxu0 %v2899
        %2925 = vmatprep.subr.bf16.mxu0 0
        %2926 = vmatpush1.bf16.msra.mxu0 %v2898
        %2927 = vmatprep.subr.bf16.mxu0 0
        %2928 = vmatpush1.bf16.msra.mxu0 %v2897
        %2929 = vmatprep.subr.bf16.mxu0 0
        %2930 = vmatpush1.bf16.msra.mxu0 %v2896
        %2931 = vmatprep.subr.bf16.mxu0 0
        %2932 = vmatpush1.bf16.msra.mxu0 %v2895
        %2933 = vmatprep.subr.bf16.mxu0 0
        %2934 = vmatpush2.bf16.msra.mxu0 0
        %2935 = vmatprep.subr.bf16.mxu0 0
        %2936 = vmatpush2.bf16.msra.mxu0 0
        %2937 = vmatprep.subr.bf16.mxu0 0
        %2938 = vmatpush2.bf16.msra.mxu0 0
        %2939 = vmatprep.subr.bf16.mxu0 0
        %2940 = vmatpush2.bf16.msra.mxu0 0
        %2941 = vmatprep.subr.bf16.mxu0 0
        %2942 = vmatpush2.bf16.msra.mxu0 0
        %2943 = vmatprep.subr.bf16.mxu0 0
        %2944 = vmatpush2.bf16.msra.mxu0 0
        %2945 = vmatprep.subr.bf16.mxu0 0
        %2946 = vmatpush2.bf16.msra.mxu0 0
        %2947 = vmatprep.subr.bf16.mxu0 0
        %2948 = vmatpush2.bf16.msra.mxu0 0
        %2949 = vmatprep.mubr.bf16.mxu0 0
        %2950 = vmatmul.mubr.bf16.gmra.mxu0 %v2912
        %v2951 = vpop.f32.mrf.mxu0
        %v2952 = vadd.f32 %v2864, %v2951
        %v2953 = vpop.f32.mrf.mxu0
        %v2954 = vpop.f32.mrf.mxu0
        %v2955 = vpop.f32.mrf.mxu0
        %2956 = vdwg.mxu0
        %v2957 = vmax.f32 %v2952, 0.0
        %v2958 = vpack.c.bf16 %v2957, %v2957
        %v2959 = vld [vmem:[#allocation11] sm:$0xf]
        %v2960 = vld [vmem:[#allocation11 + $0x4] sm:$0xf]
        %v2961 = vld [vmem:[#allocation11 + $0x8] sm:$0xf]
        %v2962 = vld [vmem:[#allocation11 + $0xc] sm:$0xf]
        %v2963 = vld [vmem:[#allocation11 + $0x10] sm:$0xf]
        %v2964 = vld [vmem:[#allocation11 + $0x14] sm:$0xf]
        %v2965 = vld [vmem:[#allocation11 + $0x18] sm:$0xf]
        %v2966 = vld [vmem:[#allocation11 + $0x1c] sm:$0xf]
        %v2967 = vld [vmem:[#allocation11 + $0x20] sm:$0xf]
        %v2968 = vld [vmem:[#allocation11 + $0x24] sm:$0xf]
        %v2969 = vld [vmem:[#allocation11 + $0x28] sm:$0x3]
        %v2970 = vld [vmem:[#allocation13] sm:$0x1]
        %v2982 = vunpack.c.l.b16 %v2959
        %v2983 = vunpack.c.l.b16 %v2960
        %v2984 = vunpack.c.l.b16 %v2961
        %v2985 = vunpack.c.l.b16 %v2962
        %v2986 = vunpack.c.l.b16 %v2963
        %v2987 = vunpack.c.l.b16 %v2964
        %v2988 = vunpack.c.l.b16 %v2965
        %v2989 = vunpack.c.l.b16 %v2966
        %v2990 = vunpack.c.l.b16 %v2967
        %v2991 = vunpack.c.l.b16 %v2968
        %v2992 = vunpack.c.l.b16 %v2969
        %v2993 = vpack.c.b16 %v2983, %v2982
        %v2994 = vpack.c.b16 %v2985, %v2984
        %v2995 = vpack.c.b16 %v2987, %v2986
        %v2996 = vpack.c.b16 %v2989, %v2988
        %v2997 = vpack.c.b16 %v2991, %v2990
        %v2998 = vpack.c.b16 %v2992, %v2992
        %vm3004 = vcmask 687104
        %v3006 = vsel %vm3004, %v2958, 0
        %vm3008 = vcmask 1041408
        %v3010 = vsel %vm3008, %v2998, 0
        %3012 = vmatprep.subr.bf16.mxu0 0
        %3013 = vmatpush1.bf16.msra.mxu0 0
        %3014 = vmatprep.subr.bf16.mxu0 0
        %3015 = vmatpush1.bf16.msra.mxu0 0
        %3016 = vmatprep.subr.bf16.mxu0 0
        %3017 = vmatpush1.bf16.msra.mxu0 %v3010
        %3018 = vmatprep.subr.bf16.mxu0 0
        %3019 = vmatpush1.bf16.msra.mxu0 %v2997
        %3020 = vmatprep.subr.bf16.mxu0 0
        %3021 = vmatpush1.bf16.msra.mxu0 %v2996
        %3022 = vmatprep.subr.bf16.mxu0 0
        %3023 = vmatpush1.bf16.msra.mxu0 %v2995
        %3024 = vmatprep.subr.bf16.mxu0 0
        %3025 = vmatpush1.bf16.msra.mxu0 %v2994
        %3026 = vmatprep.subr.bf16.mxu0 0
        %3027 = vmatpush1.bf16.msra.mxu0 %v2993
        %3028 = vmatprep.subr.bf16.mxu0 0
        %3029 = vmatpush2.bf16.msra.mxu0 0
        %3030 = vmatprep.subr.bf16.mxu0 0
        %3031 = vmatpush2.bf16.msra.mxu0 0
        %3032 = vmatprep.subr.bf16.mxu0 0
        %3033 = vmatpush2.bf16.msra.mxu0 0
        %3034 = vmatprep.subr.bf16.mxu0 0
        %3035 = vmatpush2.bf16.msra.mxu0 0
        %3036 = vmatprep.subr.bf16.mxu0 0
        %3037 = vmatpush2.bf16.msra.mxu0 0
        %3038 = vmatprep.subr.bf16.mxu0 0
        %3039 = vmatpush2.bf16.msra.mxu0 0
        %3040 = vmatprep.subr.bf16.mxu0 0
        %3041 = vmatpush2.bf16.msra.mxu0 0
        %3042 = vmatprep.subr.bf16.mxu0 0
        %3043 = vmatpush2.bf16.msra.mxu0 0
        %3044 = vmatprep.mubr.bf16.mxu0 0
        %3045 = vmatmul.mubr.bf16.gmra.mxu0 %v3006
        %v3046 = vpop.f32.mrf.mxu0
        %v3047 = vadd.f32 %v2970, %v3046
        %v3048 = vpop.f32.mrf.mxu0
        %v3049 = vpop.f32.mrf.mxu0
        %v3050 = vpop.f32.mrf.mxu0
        %3051 = vdwg.mxu0
        %v3052 = vmax.f32 %v3047, 0.0
        %3053 = vst [vmem:[%s641] sm:$0x1] %v3052
        %p3054 = scmp.lt.s32.totalorder %s36, 1
        %s3055 = scalar_select %p3054, %s36, 1
        %s3056 = smul.addr %s3055, 2
        %s3057 = scalar_lea.vmem %s16, %s3056
        %s3058 = sand.u32 %s411, 1
        %s3059 = scalar_lea.sflag [#allocation4], %s3058
        %s3060 = sand.u32 %s411, 1
        %s3061 = scalar_lea.vmem [#allocation14], %s3060
        // Predicated region
        $region113: #{lenet_forward.1} parent=83 // pred_check
          %p3062 = pneg %p395
        $region114: #{lenet_forward.1} parent=83 // pred_check_branch
          %3064 = sbr.rel (%p3062) target = $region116
        $region115: #{lenet_forward.1} parent=83 // pred_region
          _
        $region116: #{lenet_forward.1} parent=83 // pred_fallthru
          _
        // Predicated region
        $region117: #{lenet_forward.1} parent=83 // pred_check
          %p3065 = pneg %p421
        $region118: #{lenet_forward.1} parent=83 // pred_check_branch
          %3067 = sbr.rel (%p3065) target = $region120
        $region119: #{lenet_forward.1} parent=83 // pred_region
          %s3069 = ssub.s32 16, 16
          %3070 = vsyncadd %s3059, %s3069
          %s3071 = smul.addr %s36, 16
          %s3072 = scalar_lea.hbm %s17, %s3071
          %s3074 = sshll.u32 %s3061, 4
          %s3075 = int_to_ptr.vmem [resolvable:$true] %s3074
          %3077 = dma.vmem_to_hbm [thread:$0]  %s3075, 16, %s3072, %s3059
        $region120: #{lenet_forward.1} parent=83 // pred_fallthru
          _
      $region84: #{lenet_forward.1} parent=5 // pred_fallthru
        _
      %p3078 = scmp.le.s32.totalorder 2, %s31
      // Predicated region
      $region121: #{lenet_forward.1} parent=5 // pred_check
        %p3079 = pneg %p3078
      $region122: #{lenet_forward.1} parent=5 // pred_check_branch
        %3081 = sbr.rel (%p3079) target = $region124
      $region123: #{lenet_forward.1} parent=5 // pred_region
        %s3082 = ssub.s32 %s31, 2
        // Predicated region
        $region125: #{lenet_forward.1} parent=123 // pred_check
          %p3083 = pneg %p401
        $region126: #{lenet_forward.1} parent=123 // pred_check_branch
          %3085 = sbr.rel (%p3083) target = $region128
        $region127: #{lenet_forward.1} parent=123 // pred_region
          %p3086 = scmp.lt.s32.totalorder %s37, 1
          %s3087 = scalar_select %p3086, %s37, 1
          %s3088 = smul.addr %s3087, 2
          %s3089 = scalar_lea.vmem %s16, %s3088
        $region128: #{lenet_forward.1} parent=123 // pred_fallthru
          _
        // Predicated region
        $region129: #{lenet_forward.1} parent=123 // pred_check
          %p3090 = pneg %p427
        $region130: #{lenet_forward.1} parent=123 // pred_check_branch
          %3092 = sbr.rel (%p3090) target = $region132
        $region131: #{lenet_forward.1} parent=123 // pred_region
          %s3093 = sand.u32 %s412, 1
          %s3094 = scalar_lea.sflag [#allocation4], %s3093
          %s3095 = sand.u32 %s412, 1
          %s3096 = scalar_lea.vmem [#allocation14], %s3095
          %3097 = dma.done %s3094, 16
        $region132: #{lenet_forward.1} parent=123 // pred_fallthru
          _
      $region124: #{lenet_forward.1} parent=5 // pred_fallthru
        _
    $region6: #{lenet_forward.1} parent=1 // loop_footer
      %s35 = sadd.s32 1, %s31
    $region7: #{lenet_forward.1} parent=1 // loop_footer_branch
      %30 = sbr.rel target = $region3
    $region8: #{lenet_forward.1} parent=1 // loop_exit
      _
    %3098 = vsyncpa [#allocation3], 1
    %s3099 = scalar_lea.sflag [#allocation3], 1
    %3100 = vsyncpa %s3099, 1
    %3101 = vsyncpa [#allocation6], 1
    %3102 = vsyncpa [#allocation9], 1
    %3103 = vsyncpa [#allocation12], 1
    %3104 = vsyncpa [#allocation4], 1
    %s3105 = scalar_lea.sflag [#allocation4], 1
    %3106 = vsyncpa %s3105, 1

</llo_original>
